<compile_context>
chip_gen: v7x
topology: tpu7x:2x2x1
jax: 0.10.0
libtpu: 0.0.40
codegen_flags: <defaults>
</compile_context>

<pallas_src>
import functools

import jax
import jax.numpy as jnp
from jax.experimental import pallas as pl
from jax.experimental.pallas import tpu as pltpu

LANE = 128


def _round_up(v, m):
    return ((v + m - 1) // m) * m


# ------------------------------- Pallas kernel -------------------------------

def dagnn_kernel(x_ref, a_ref, w1_ref, b1_ref, w2_ref, b2_ref, wp_ref, bp_ref,
                 o_ref, state_ref, *, tm: int):
    """Grid = (hop k [outer, sequential], row-tile i).

    k == 0 : h = relu(x W1 + b1) W2 + b2 ; state[0, rows] = h ;
             o[rows]  = sigmoid(<h, wp> + bp) * h
    k >= 1 : nxt = A_hat[rows, :] @ state[(k-1) % 2] (bf16 x bf16 -> f32 acc);
             state[k % 2, rows] = nxt ; o[rows] += sigmoid(<nxt, wp> + bp) * nxt

    o_ref is the full (n_pad, c_pad) block with a constant block index, so it stays
    VMEM-resident across the whole grid and is written back to HBM exactly once.
    """
    k = pl.program_id(0)
    i = pl.program_id(1)
    row0 = pl.multiple_of(i * tm, tm)

    wp = wp_ref[...]          # (1, c_pad) f32, zero-padded beyond n_out
    bp = bp_ref[0, 0]         # scalar f32

    def gated(v):             # v: (tm, c_pad) f32
        # VPU multiply + cross-lane reduce (XLU) instead of a 1-wide MXU matmul.
        s = jnp.sum(v * wp, axis=-1, keepdims=True) + bp
        return jax.nn.sigmoid(s) * v

    @pl.when(k == 0)
    def _():
        # Fused MLP producing the k=0 state (feature dim already padded to 128 lanes).
        h = jnp.dot(x_ref[...], w1_ref[...], preferred_element_type=jnp.float32)
        h = jnp.maximum(h + b1_ref[...], 0.0)
        h = jnp.dot(h, w2_ref[...], preferred_element_type=jnp.float32) + b2_ref[...]
        state_ref[0, pl.ds(row0, tm), :] = h.astype(state_ref.dtype)
        o_ref[pl.ds(row0, tm), :] = gated(h)

    @pl.when(k > 0)
    def _():
        prev = state_ref[(k - 1) % 2]            # (n_pad, c_pad) bf16, VMEM-resident
        nxt = jnp.dot(a_ref[...], prev, preferred_element_type=jnp.float32)
        state_ref[k % 2, pl.ds(row0, tm), :] = nxt.astype(state_ref.dtype)
        o_ref[pl.ds(row0, tm), :] = o_ref[pl.ds(row0, tm), :] + gated(nxt)


# ------------------------------- host wrapper --------------------------------

def gcn_norm_dense(edge_index, num_nodes, dtype=jnp.float32):
    """Dense equivalent of PyG gcn_norm: add_remaining_self_loops + D^-1/2 A D^-1/2.

    Existing self-loops are dropped and replaced by a single weight-1 self loop per
    node (matches add_remaining_self_loops with all-ones weights). A_hat[dst, src],
    so one propagation step is A_hat @ x.
    """
    src, dst = edge_index[0], edge_index[1]
    w = jnp.where(src != dst, 1.0, 0.0).astype(jnp.float32)
    a = jnp.zeros((num_nodes, num_nodes), jnp.float32).at[dst, src].add(w)
    a = a + jnp.eye(num_nodes, dtype=jnp.float32)
    deg = a.sum(axis=1)
    dinv = jnp.where(deg > 0, 1.0 / jnp.sqrt(deg), 0.0)
    a_hat = dinv[:, None] * a * dinv[None, :]
    return a_hat.astype(dtype)


def _vmem_estimate_bytes(tm, n_pad, n_in, n_hid, c_pad):
    a_tiles = 2 * tm * n_pad * 2              # bf16 A row-stripe, double buffered
    x_tiles = 2 * tm * n_in * 4
    out_res = n_pad * c_pad * 4               # resident full-output accumulator
    weights = 2 * 4 * (n_in * n_hid + n_hid + n_hid * c_pad + 3 * c_pad + 1)
    state = 2 * n_pad * c_pad * 2             # bf16 double-buffered hop state
    return a_tiles + x_tiles + out_res + weights + state


def _choose_tiling(n, tm_max=512, a_budget_bytes=24 << 20):
    """Largest row tile (multiple of 8, <= tm_max) whose double-buffered bf16 A
    stripe fits the budget; n_pad is a multiple of tm."""
    tm = min(tm_max, _round_up(n, LANE))
    while tm > LANE and 2 * tm * _round_up(n, tm) * 2 > a_budget_bytes:
        tm = max(LANE, (tm // 2 // 8) * 8)
    n_pad = _round_up(n, tm)
    return tm, n_pad


def dagnn_forward(x, edge_index, params, *, hop, tm_max=512):
    n, n_in = x.shape
    n_hid = params["w1"].shape[1]
    n_out = params["w2"].shape[1]

    c_pad = max(LANE, _round_up(n_out, LANE))          # lane-dense feature dim
    tm, n_pad = _choose_tiling(n, tm_max=tm_max)

    # Normalized dense adjacency, zero-padded, bf16 (dominant HBM operand).
    a_hat = gcn_norm_dense(edge_index, n)
    a_hat = jnp.pad(a_hat, ((0, n_pad - n), (0, n_pad - n))).astype(jnp.bfloat16)
    x_p = jnp.pad(x.astype(jnp.float32), ((0, n_pad - n), (0, 0)))

    w1 = params["w1"].astype(jnp.float32)
    b1 = params["b1"].reshape(1, n_hid).astype(jnp.float32)
    w2 = jnp.pad(params["w2"].astype(jnp.float32), ((0, 0), (0, c_pad - n_out)))
    b2 = jnp.pad(params["b2"].reshape(1, n_out).astype(jnp.float32),
                 ((0, 0), (0, c_pad - n_out)))
    wp = jnp.pad(params["wp"].reshape(1, n_out).astype(jnp.float32),
                 ((0, 0), (0, c_pad - n_out)))
    bp = params["bp"].reshape(1, 1).astype(jnp.float32)

    grid = (hop + 1, n_pad // tm)

    est = _vmem_estimate_bytes(tm, n_pad, n_in, n_hid, c_pad)
    try:
        phys_vmem = int(pltpu.get_tpu_info().vmem_capacity_bytes)
    except Exception:                                    # conservative fallback (v7x)
        phys_vmem = 64 << 20
    cap = (phys_vmem * 3) // 4                           # headroom for compiler scratch
    vmem_limit = min(max(2 * est + (4 << 20), 32 << 20), cap)

    # A_hat stripe only advances with i during propagation hops (k > 0); the x row
    # tile only advances during the MLP pass (k == 0). Avoids refetching unused data.
    a_idx = lambda k, i: (jnp.minimum(k, 1) * i, 0)
    x_idx = lambda k, i: ((1 - jnp.minimum(k, 1)) * i, 0)

    out = pl.pallas_call(
        functools.partial(dagnn_kernel, tm=tm),
        out_shape=jax.ShapeDtypeStruct((n_pad, c_pad), jnp.float32),
        grid_spec=pltpu.PrefetchScalarGridSpec(
            num_scalar_prefetch=0,
            grid=grid,
            in_specs=[
                pl.BlockSpec((tm, n_in), x_idx),                    # x rows (k==0 only)
                pl.BlockSpec((tm, n_pad), a_idx),                   # A_hat row stripe
                pl.BlockSpec((n_in, n_hid), lambda k, i: (0, 0)),   # W1
                pl.BlockSpec((1, n_hid), lambda k, i: (0, 0)),      # b1
                pl.BlockSpec((n_hid, c_pad), lambda k, i: (0, 0)),  # W2 (padded)
                pl.BlockSpec((1, c_pad), lambda k, i: (0, 0)),      # b2 (padded)
                pl.BlockSpec((1, c_pad), lambda k, i: (0, 0)),      # w_proj (padded)
                pl.BlockSpec((1, 1), lambda k, i: (0, 0)),          # b_proj
            ],
            # Constant block index -> output stays VMEM-resident, single HBM writeback.
            out_specs=pl.BlockSpec((n_pad, c_pad), lambda k, i: (0, 0)),
            scratch_shapes=[
                pltpu.VMEM((2, n_pad, c_pad), jnp.bfloat16),        # hop state (dbl buf)
            ],
        ),
        compiler_params=pltpu.CompilerParams(
            dimension_semantics=("arbitrary", "arbitrary"),
            vmem_limit_bytes=vmem_limit,
        ),
    )(x_p, a_hat, w1, b1, w2, b2, wp, bp)

    return out[:n, :n_out]


# ------------------------------ reference / init ------------------------------

def dagnn_reference(x, a_hat, params, hop):
    h = jnp.maximum(x @ params["w1"] + params["b1"], 0.0)
    h = h @ params["w2"] + params["b2"]
    gate = lambda v: jax.nn.sigmoid(v @ params["wp"] + params["bp"]) * v
    cur = h
    out = gate(cur)
    for _ in range(hop):
        cur = a_hat @ cur
        out = out + gate(cur)
    return out


def init_params(key, n_in, n_hid, n_out):
    """Deterministic init; weight layout is [in, out] (transposed vs torch.nn.Linear)."""
    ks = jax.random.split(key, 6)

    def lin(kw, kb, fan_in, fan_out):
        bound = 1.0 / jnp.sqrt(jnp.float32(fan_in))
        w = jax.random.uniform(kw, (fan_in, fan_out), jnp.float32, -bound, bound)
        b = jax.random.uniform(kb, (1, fan_out), jnp.float32, -bound, bound)
        return w, b

    w1, b1 = lin(ks[0], ks[1], n_in, n_hid)
    w2, b2 = lin(ks[2], ks[3], n_hid, n_out)
    wp, bp = lin(ks[4], ks[5], n_out, 1)          # Prop.proj: Linear(n_out, 1)
    return {"w1": w1, "b1": b1, "w2": w2, "b2": b2, "wp": wp, "bp": bp}


if __name__ == "__main__":
    N, N_IN, N_HID, N_OUT, HOP = 512, 32, 64, 16, 4
    N_EDGES = 2048

    key = jax.random.PRNGKey(0)
    kx, ke, kp = jax.random.split(key, 3)

    x = jax.random.normal(kx, (N, N_IN), dtype=jnp.float32)
    edge_index = jax.random.randint(ke, (2, N_EDGES), 0, N, dtype=jnp.int32)
    params = init_params(kp, N_IN, N_HID, N_OUT)

    out = dagnn_forward(x, edge_index, params, hop=HOP)
    out = jax.block_until_ready(out)
    assert out.shape == (N, N_OUT)
    assert bool(jnp.all(jnp.isfinite(out)))

    # f32 reference (same dense gcn_norm); bf16 A_hat/state gives small drift.
    ref = dagnn_reference(x, gcn_norm_dense(edge_index, N), params, HOP)
    err = float(jnp.max(jnp.abs(out - ref)))
    scale = float(jnp.max(jnp.abs(ref))) + 1.0
    assert err < 7.5e-2 * scale, f"max abs err {err} (scale {scale})"

    print("KERNEL_OK")
</pallas_src>

<mosaic_0001>
module attributes {stable_mosaic.version = 11 : i64} {
  func.func @dagnn_kernel(%arg0: i32, %arg1: i32, %arg2: memref<512x32xf32, #tpu.memory_space<vmem>>, %arg3: memref<512x512xbf16, #tpu.memory_space<vmem>>, %arg4: memref<32x64xf32, #tpu.memory_space<vmem>>, %arg5: memref<1x64xf32, #tpu.memory_space<vmem>>, %arg6: memref<64x128xf32, #tpu.memory_space<vmem>>, %arg7: memref<1x128xf32, #tpu.memory_space<vmem>>, %arg8: memref<1x128xf32, #tpu.memory_space<vmem>>, %arg9: memref<1x1xf32, #tpu.memory_space<vmem>>, %arg10: memref<512x128xf32, #tpu.memory_space<vmem>>, %arg11: memref<2x512x128xbf16, #tpu.memory_space<vmem>>) attributes {dimension_semantics = [#tpu.dimension_semantics<arbitrary>, #tpu.dimension_semantics<arbitrary>], iteration_bounds = array<i64: 5, 1>, scalar_prefetch = 0 : i64, scratch_operands = 1 : i64, tpu.core_type = #tpu.core_type<tc>, window_params = [{transform_indices = @transform_0, window_bounds = array<i64: 512, 32>}, {transform_indices = @transform_1, window_bounds = array<i64: 512, 512>}, {pipeline_mode = #tpu.pipeline_mode<synchronous>, transform_indices = @transform_2, window_bounds = array<i64: 32, 64>}, {pipeline_mode = #tpu.pipeline_mode<synchronous>, transform_indices = @transform_3, window_bounds = array<i64: 1, 64>}, {pipeline_mode = #tpu.pipeline_mode<synchronous>, transform_indices = @transform_4, window_bounds = array<i64: 64, 128>}, {pipeline_mode = #tpu.pipeline_mode<synchronous>, transform_indices = @transform_5, window_bounds = array<i64: 1, 128>}, {pipeline_mode = #tpu.pipeline_mode<synchronous>, transform_indices = @transform_6, window_bounds = array<i64: 1, 128>}, {pipeline_mode = #tpu.pipeline_mode<synchronous>, transform_indices = @transform_7, window_bounds = array<i64: 1, 1>}, {pipeline_mode = #tpu.pipeline_mode<synchronous>, transform_indices = @transform_8, window_bounds = array<i64: 512, 128>}]} {
    %c512_i32 = arith.constant 512 : i32
    %0 = arith.muli %arg1, %c512_i32 : i32
    %1 = tpu.assume_multiple %0, 512 : i32
    %c0 = arith.constant 0 : index
    %c0_0 = arith.constant 0 : index
    %2 = vector.load %arg8[%c0, %c0_0] : memref<1x128xf32, #tpu.memory_space<vmem>>, vector<1x128xf32>
    %c0_1 = arith.constant 0 : index
    %c0_2 = arith.constant 0 : index
    %3 = vector.load %arg9[%c0_1, %c0_2] : memref<1x1xf32, #tpu.memory_space<vmem>>, vector<1x1xf32>
    %4 = vector.extract %3[0, 0] : f32 from vector<1x1xf32>
    %c0_i32 = arith.constant 0 : i32
    %5 = arith.cmpi eq, %arg0, %c0_i32 : i32
    %6 = arith.extui %5 : i1 to i32
    %c0_i32_3 = arith.constant 0 : i32
    %7 = arith.cmpi ne, %6, %c0_i32_3 : i32
    scf.if %7 {
      %c0_6 = arith.constant 0 : index
      %c0_7 = arith.constant 0 : index
      %11 = vector.load %arg2[%c0_6, %c0_7] : memref<512x32xf32, #tpu.memory_space<vmem>>, vector<512x32xf32>
      %c0_8 = arith.constant 0 : index
      %c0_9 = arith.constant 0 : index
      %12 = vector.load %arg4[%c0_8, %c0_9] : memref<32x64xf32, #tpu.memory_space<vmem>>, vector<32x64xf32>
      %cst = arith.constant dense<0.000000e+00> : vector<512x64xf32>
      %13 = tpu.matmul %11, %12, %cst {dimension_numbers = #tpu.dot_dimension_numbers<[1], [0], [0], [1], [0, 0, 1, 1], [], []>} : vector<512x32xf32>, vector<32x64xf32>, vector<512x64xf32> -> vector<512x64xf32>
      %c0_10 = arith.constant 0 : index
      %c0_11 = arith.constant 0 : index
      %14 = vector.load %arg5[%c0_10, %c0_11] : memref<1x64xf32, #tpu.memory_space<vmem>>, vector<1x64xf32>
      %15 = vector.broadcast %14 : vector<1x64xf32> to vector<512x64xf32>
      %16 = arith.addf %13, %15 : vector<512x64xf32>
      %cst_12 = arith.constant 0.000000e+00 : f32
      %17 = vector.broadcast %cst_12 : f32 to vector<512x64xf32>
      %18 = arith.maximumf %16, %17 : vector<512x64xf32>
      %c0_13 = arith.constant 0 : index
      %c0_14 = arith.constant 0 : index
      %19 = vector.load %arg6[%c0_13, %c0_14] : memref<64x128xf32, #tpu.memory_space<vmem>>, vector<64x128xf32>
      %cst_15 = arith.constant dense<0.000000e+00> : vector<512x128xf32>
      %20 = tpu.matmul %18, %19, %cst_15 {dimension_numbers = #tpu.dot_dimension_numbers<[1], [0], [0], [1], [0, 0, 1, 1], [], []>} : vector<512x64xf32>, vector<64x128xf32>, vector<512x128xf32> -> vector<512x128xf32>
      %c0_16 = arith.constant 0 : index
      %c0_17 = arith.constant 0 : index
      %21 = vector.load %arg7[%c0_16, %c0_17] : memref<1x128xf32, #tpu.memory_space<vmem>>, vector<1x128xf32>
      %22 = vector.broadcast %21 : vector<1x128xf32> to vector<512x128xf32>
      %23 = arith.addf %20, %22 : vector<512x128xf32>
      %24 = arith.truncf %23 : vector<512x128xf32> to vector<512x128xbf16>
      %c0_18 = arith.constant 0 : index
      %25 = arith.index_cast %1 : i32 to index
      %c0_19 = arith.constant 0 : index
      %26 = vector.load %arg11[%c0_18, %25, %c0_19] : memref<2x512x128xbf16, #tpu.memory_space<vmem>>, vector<1x512x128xbf16>
      %27 = vector.shape_cast %26 : vector<1x512x128xbf16> to vector<512x128xbf16>
      %28 = vector.shape_cast %24 : vector<512x128xbf16> to vector<1x512x128xbf16>
      tpu.vector_store %arg11[%c0_18, %25, %c0_19], %28 {strides = array<i32>} : memref<2x512x128xbf16, #tpu.memory_space<vmem>>, vector<1x512x128xbf16>,
      %29 = vector.broadcast %2 : vector<1x128xf32> to vector<512x128xf32>
      %30 = arith.mulf %23, %29 : vector<512x128xf32>
      %cst_20 = arith.constant dense<0.000000e+00> : vector<512xf32>
      %31 = vector.multi_reduction <add>, %30, %cst_20 [1] : vector<512x128xf32> to vector<512xf32>
      %32 = vector.shape_cast %31 : vector<512xf32> to vector<512x1xf32>
      %33 = vector.broadcast %4 : f32 to vector<512x1xf32>
      %34 = arith.addf %32, %33 : vector<512x1xf32>
      %35 = arith.negf %34 : vector<512x1xf32>
      %36 = math.exp %35 : vector<512x1xf32>
      %cst_21 = arith.constant 1.000000e+00 : f32
      %37 = vector.broadcast %cst_21 : f32 to vector<512x1xf32>
      %38 = arith.addf %37, %36 : vector<512x1xf32>
      %39 = arith.divf %37, %38 : vector<512x1xf32>
      %40 = vector.broadcast %39 : vector<512x1xf32> to vector<512x128xf32>
      %41 = arith.mulf %40, %23 : vector<512x128xf32>
      %42 = arith.index_cast %1 : i32 to index
      %c0_22 = arith.constant 0 : index
      %43 = vector.load %arg10[%42, %c0_22] : memref<512x128xf32, #tpu.memory_space<vmem>>, vector<512x128xf32>
      tpu.vector_store %arg10[%42, %c0_22], %41 {strides = array<i32>} : memref<512x128xf32, #tpu.memory_space<vmem>>, vector<512x128xf32>,
    } else {
    }
    %c0_i32_4 = arith.constant 0 : i32
    %8 = arith.cmpi sgt, %arg0, %c0_i32_4 : i32
    %9 = arith.extui %8 : i1 to i32
    %c0_i32_5 = arith.constant 0 : i32
    %10 = arith.cmpi ne, %9, %c0_i32_5 : i32
    scf.if %10 {
      %c1_i32 = arith.constant 1 : i32
      %11 = arith.subi %arg0, %c1_i32 : i32
      %c2_i32 = arith.constant 2 : i32
      %c0_i32_6 = arith.constant 0 : i32
      %12 = arith.cmpi eq, %c2_i32, %c0_i32_6 : i32
      %c1_i32_7 = arith.constant 1 : i32
      %13 = arith.select %12, %c1_i32_7, %c2_i32 : i32
      %14 = arith.remsi %11, %13 : i32
      %c0_i32_8 = arith.constant 0 : i32
      %15 = arith.cmpi ne, %14, %c0_i32_8 : i32
      %c0_i32_9 = arith.constant 0 : i32
      %16 = arith.cmpi slt, %14, %c0_i32_9 : i32
      %c0_i32_10 = arith.constant 0 : i32
      %17 = arith.cmpi slt, %13, %c0_i32_10 : i32
      %18 = arith.xori %16, %17 : i1
      %19 = arith.andi %18, %15 : i1
      %20 = arith.addi %14, %13 : i32
      %21 = arith.select %19, %20, %14 : i32
      %22 = arith.index_cast %21 : i32 to index
      %c0_11 = arith.constant 0 : index
      %c0_12 = arith.constant 0 : index
      %23 = vector.load %arg11[%22, %c0_11, %c0_12] : memref<2x512x128xbf16, #tpu.memory_space<vmem>>, vector<1x512x128xbf16>
      %24 = vector.shape_cast %23 : vector<1x512x128xbf16> to vector<512x128xbf16>
      %c0_13 = arith.constant 0 : index
      %c0_14 = arith.constant 0 : index
      %25 = vector.load %arg3[%c0_13, %c0_14] : memref<512x512xbf16, #tpu.memory_space<vmem>>, vector<512x512xbf16>
      %cst = arith.constant dense<0.000000e+00> : vector<512x128xf32>
      %26 = tpu.matmul %25, %24, %cst {dimension_numbers = #tpu.dot_dimension_numbers<[1], [0], [0], [1], [0, 0, 1, 1], [], []>} : vector<512x512xbf16>, vector<512x128xbf16>, vector<512x128xf32> -> vector<512x128xf32>
      %27 = arith.truncf %26 : vector<512x128xf32> to vector<512x128xbf16>
      %c2_i32_15 = arith.constant 2 : i32
      %c0_i32_16 = arith.constant 0 : i32
      %28 = arith.cmpi eq, %c2_i32_15, %c0_i32_16 : i32
      %c1_i32_17 = arith.constant 1 : i32
      %29 = arith.select %28, %c1_i32_17, %c2_i32_15 : i32
      %30 = arith.remsi %arg0, %29 : i32
      %c0_i32_18 = arith.constant 0 : i32
      %31 = arith.cmpi ne, %30, %c0_i32_18 : i32
      %c0_i32_19 = arith.constant 0 : i32
      %32 = arith.cmpi slt, %30, %c0_i32_19 : i32
      %c0_i32_20 = arith.constant 0 : i32
      %33 = arith.cmpi slt, %29, %c0_i32_20 : i32
      %34 = arith.xori %32, %33 : i1
      %35 = arith.andi %34, %31 : i1
      %36 = arith.addi %30, %29 : i32
      %37 = arith.select %35, %36, %30 : i32
      %38 = arith.index_cast %37 : i32 to index
      %39 = arith.index_cast %1 : i32 to index
      %c0_21 = arith.constant 0 : index
      %40 = vector.load %arg11[%38, %39, %c0_21] : memref<2x512x128xbf16, #tpu.memory_space<vmem>>, vector<1x512x128xbf16>
      %41 = vector.shape_cast %40 : vector<1x512x128xbf16> to vector<512x128xbf16>
      %42 = vector.shape_cast %27 : vector<512x128xbf16> to vector<1x512x128xbf16>
      tpu.vector_store %arg11[%38, %39, %c0_21], %42 {strides = array<i32>} : memref<2x512x128xbf16, #tpu.memory_space<vmem>>, vector<1x512x128xbf16>,
      %43 = arith.index_cast %1 : i32 to index
      %c0_22 = arith.constant 0 : index
      %44 = vector.load %arg10[%43, %c0_22] : memref<512x128xf32, #tpu.memory_space<vmem>>, vector<512x128xf32>
      %45 = vector.broadcast %2 : vector<1x128xf32> to vector<512x128xf32>
      %46 = arith.mulf %26, %45 : vector<512x128xf32>
      %cst_23 = arith.constant dense<0.000000e+00> : vector<512xf32>
      %47 = vector.multi_reduction <add>, %46, %cst_23 [1] : vector<512x128xf32> to vector<512xf32>
      %48 = vector.shape_cast %47 : vector<512xf32> to vector<512x1xf32>
      %49 = vector.broadcast %4 : f32 to vector<512x1xf32>
      %50 = arith.addf %48, %49 : vector<512x1xf32>
      %51 = arith.negf %50 : vector<512x1xf32>
      %52 = math.exp %51 : vector<512x1xf32>
      %cst_24 = arith.constant 1.000000e+00 : f32
      %53 = vector.broadcast %cst_24 : f32 to vector<512x1xf32>
      %54 = arith.addf %53, %52 : vector<512x1xf32>
      %55 = arith.divf %53, %54 : vector<512x1xf32>
      %56 = vector.broadcast %55 : vector<512x1xf32> to vector<512x128xf32>
      %57 = arith.mulf %56, %26 : vector<512x128xf32>
      %58 = arith.addf %44, %57 : vector<512x128xf32>
      %59 = arith.index_cast %1 : i32 to index
      %c0_25 = arith.constant 0 : index
      %60 = vector.load %arg10[%59, %c0_25] : memref<512x128xf32, #tpu.memory_space<vmem>>, vector<512x128xf32>
      tpu.vector_store %arg10[%59, %c0_25], %58 {strides = array<i32>} : memref<512x128xf32, #tpu.memory_space<vmem>>, vector<512x128xf32>,
    } else {
    }
    return
  }
  func.func @transform_0(%arg0: i32, %arg1: i32) -> (i32, i32) {
    %c1_i32 = arith.constant 1 : i32
    %0 = arith.minsi %arg0, %c1_i32 : i32
    %c1_i32_0 = arith.constant 1 : i32
    %1 = arith.subi %c1_i32_0, %0 : i32
    %2 = arith.muli %1, %arg1 : i32
    %c0_i32 = arith.constant 0 : i32
    %c0_i32_1 = arith.constant 0 : i32
    return %2, %c0_i32 : i32, i32
  }
  func.func @transform_1(%arg0: i32, %arg1: i32) -> (i32, i32) {
    %c1_i32 = arith.constant 1 : i32
    %0 = arith.minsi %arg0, %c1_i32 : i32
    %1 = arith.muli %0, %arg1 : i32
    %c0_i32 = arith.constant 0 : i32
    %c0_i32_0 = arith.constant 0 : i32
    return %1, %c0_i32 : i32, i32
  }
  func.func @transform_2(%arg0: i32, %arg1: i32) -> (i32, i32) {
    %c0_i32 = arith.constant 0 : i32
    %c0_i32_0 = arith.constant 0 : i32
    %c0_i32_1 = arith.constant 0 : i32
    return %c0_i32, %c0_i32_0 : i32, i32
  }
  func.func @transform_3(%arg0: i32, %arg1: i32) -> (i32, i32) {
    %c0_i32 = arith.constant 0 : i32
    %c0_i32_0 = arith.constant 0 : i32
    %c0_i32_1 = arith.constant 0 : i32
    return %c0_i32, %c0_i32_0 : i32, i32
  }
  func.func @transform_4(%arg0: i32, %arg1: i32) -> (i32, i32) {
    %c0_i32 = arith.constant 0 : i32
    %c0_i32_0 = arith.constant 0 : i32
    %c0_i32_1 = arith.constant 0 : i32
    return %c0_i32, %c0_i32_0 : i32, i32
  }
  func.func @transform_5(%arg0: i32, %arg1: i32) -> (i32, i32) {
    %c0_i32 = arith.constant 0 : i32
    %c0_i32_0 = arith.constant 0 : i32
    %c0_i32_1 = arith.constant 0 : i32
    return %c0_i32, %c0_i32_0 : i32, i32
  }
  func.func @transform_6(%arg0: i32, %arg1: i32) -> (i32, i32) {
    %c0_i32 = arith.constant 0 : i32
    %c0_i32_0 = arith.constant 0 : i32
    %c0_i32_1 = arith.constant 0 : i32
    return %c0_i32, %c0_i32_0 : i32, i32
  }
  func.func @transform_7(%arg0: i32, %arg1: i32) -> (i32, i32) {
    %c0_i32 = arith.constant 0 : i32
    %c0_i32_0 = arith.constant 0 : i32
    %c0_i32_1 = arith.constant 0 : i32
    return %c0_i32, %c0_i32_0 : i32, i32
  }
  func.func @transform_8(%arg0: i32, %arg1: i32) -> (i32, i32) {
    %c0_i32 = arith.constant 0 : i32
    %c0_i32_0 = arith.constant 0 : i32
    %c0_i32_1 = arith.constant 0 : i32
    return %c0_i32, %c0_i32_0 : i32, i32
  }
}

</mosaic_0001>

<llo_original>
// kernel: tpu_custom_call.1
$region0: #{tpu_custom_call.1}
  #allocation0 [shape = 'u32[]', space=smem, size = 0x4, offset = 0x4, fixed_abs, tag = 'smem constant byte address 0x4 - core index']
  #allocation1 [shape = 'u32[144,128]{1,0:T(1,128)}', space=vmem, size = 0x12000, scoped, tag = 'internal scratch']
  #allocation2 [shape = 'bf16[2,512,128]{2,1,0:T(16,128)(2,1)}', space=vmem, size = 0x40000, scoped, tag = 'scratch operand']
  #allocation3 [shape = 'f32[1,1]{1,0:T(1,128)S(1)}', space=vmem, size = 0x200, scoped, tag = 'scoped memory for tpu_custom_call.1']
  %s0 = inlined_call_operand.vmem [shape: f32[512,32], index: 0, kind: input, shape index: {}]
  %s1 = inlined_call_operand.hbm [shape: bf16[512,512], index: 1, kind: input, shape index: {}]
  %s2 = inlined_call_operand.vmem [shape: f32[32,64], index: 2, kind: input, shape index: {}]
  %s3 = inlined_call_operand.vmem [shape: f32[1,64], index: 3, kind: input, shape index: {}]
  %s4 = inlined_call_operand.vmem [shape: f32[64,128], index: 4, kind: input, shape index: {}]
  %s5 = inlined_call_operand.vmem [shape: f32[1,128], index: 5, kind: input, shape index: {}]
  %s6 = inlined_call_operand.vmem [shape: f32[1,128], index: 6, kind: input, shape index: {}]
  %s7 = inlined_call_operand.<no memory space> [shape: f32[1,1], index: 7, kind: input, shape index: {}]
  %s8 = inlined_call_operand.hbm [shape: f32[512,128], index: 8, kind: output, shape index: {}]
  %s9 = sld [smem:[#allocation0]]
  $region77: #{tpu_custom_call.1} parent=0
    _
  %s11 = ssub.s32 1, %s9
  %s12 = scalar_select 0, %s11, %s9
  %v13 = vstv %s7
  %14 = vst [vmem:[#allocation3] sm:$0x1] %v13
  $region1: #{tpu_custom_call.1} parent=0
    #allocation4 [shape = 'u8[1048576]{0}', space=vmem, size = 0x100000, scoped, tag = 'input window, operand 1']
    #allocation5 [shape = 's32[2]{0}', space=sflag, size = 0x8, scoped, tag = 'scoped memory for tpu_custom_call.1']
    #allocation6 [shape = 's32[2]{0}', space=sflag, size = 0x8, scoped, tag = 'scoped memory for tpu_custom_call.1']
    #allocation7 [shape = 'u8[262144]{0}', space=vmem, size = 0x40000, scoped, tag = 'output window, operand 0, single buffered']
    %15 = vsyncpa [#allocation5], 0
    %s16 = scalar_lea.sflag [#allocation5], 1
    %17 = vsyncpa %s16, 0
    %18 = vsyncpa [#allocation6], 0
    loop: start=0, step=1, limit=7
    $region2: #{tpu_custom_call.1} parent=1 // loop_pre_header
      _
    $region3: #{tpu_custom_call.1} parent=1 // loop_header
      %s20 = sphi 0, %s24
      %p21 = scmp.ge.s32.totalorder %s20, 7
      %s27 = sphi 0, %s39
      %s28 = sphi 0, %s35
      %s29 = sphi 0, %s27
      %s30 = sphi 0, %s28
      %s31 = sphi 0, %s29
      %s32 = sphi 0, %s30
      %s50 = sphi 0, %s52
      %s53 = sphi 0, %s50
      %s54 = sphi 0, %s53
      %s70 = sphi 0, %s54
      %s82 = sphi 0, %s84
      %s85 = sphi 0, %s82
      %s86 = sphi 0, %s85
      %s102 = sphi 0, %s86
      %s106 = sphi 0, %s106
      %s108 = sphi 0, %s106
      %s109 = sphi 0, %s108
      %s123 = sphi 0, %s109
      %s127 = sphi 0, %s127
      %s129 = sphi 0, %s127
      %s130 = sphi 0, %s129
      %s144 = sphi 0, %s130
      %s148 = sphi 0, %s148
      %s150 = sphi 0, %s148
      %s151 = sphi 0, %s150
      %s165 = sphi 0, %s151
      %s169 = sphi 0, %s169
      %s171 = sphi 0, %s169
      %s172 = sphi 0, %s171
      %s186 = sphi 0, %s172
      %s190 = sphi 0, %s190
      %s192 = sphi 0, %s190
      %s193 = sphi 0, %s192
      %s207 = sphi 0, %s193
      %s211 = sphi 0, %s211
      %s213 = sphi 0, %s211
      %s214 = sphi 0, %s213
      %s228 = sphi 0, %s214
      %s232 = sphi 0, %s232
      %s234 = sphi 0, %s232
      %s235 = sphi 0, %s234
      %s249 = sphi 0, %s235
    $region4: #{tpu_custom_call.1} parent=1 // loop_header_branch
      %23 = sbr.rel (%p21) target = $region8
    $region5: #{tpu_custom_call.1} parent=1 // loop_body
      %s25 = ssub.s32 %s20, 1
      %s26 = ssub.s32 %s20, 2
      %s33 = sadd.s32 1, %s28
      %p34 = scmp.ge.s32.totalorder %s33, 1
      %s35 = scalar_select %p34, 0, %s33
      %s36 = sadd.s32 1, %s27
      %s37 = scalar_select %p34, %s36, %s27
      %p38 = scmp.ge.s32.totalorder %s37, 5
      %s39 = scalar_select %p38, 0, %s37
      %p40 = scmp.lt.s32.totalorder %s27, 1
      %s41 = scalar_select %p40, %s27, 1
      %s42 = ssub.s32 1, %s41
      %s43 = smul.u32 %s42, %s28
      %p44 = scmp.lt.s32.totalorder %s39, 1
      %s45 = scalar_select %p44, %s39, 1
      %s46 = ssub.s32 1, %s45
      %s47 = smul.u32 %s46, %s35
      %s48 = ssub.s32 %s43, %s47
      %p49 = scmp.eq.s32.totalorder %s48, 0
      %s51 = sadd.s32 %s50, 1
      %s52 = scalar_select %p49, %s50, %s51
      %p55 = pneg %p49
      %p56 = scmp.eq.s32.totalorder %s20, 4
      %p57 = por %p55, %p56
      %p58 = scmp.ne.s32.totalorder %s50, %s53
      %p59 = scmp.eq.s32.totalorder %s20, 0
      %p60 = por %p58, %p59
      %p61 = scmp.ne.s32.totalorder %s50, %s53
      %p62 = scmp.eq.s32.totalorder %s25, 4
      %p63 = por %p61, %p62
      %p64 = scmp.ne.s32.totalorder %s53, %s54
      %p65 = scmp.eq.s32.totalorder %s25, 0
      %p66 = por %p64, %p65
      %p67 = scmp.ne.s32.totalorder %s53, %s54
      %p68 = scmp.eq.s32.totalorder %s26, 4
      %p69 = por %p67, %p68
      %p71 = scmp.ne.s32.totalorder %s54, %s70
      %p72 = scmp.eq.s32.totalorder %s26, 0
      %p73 = por %p71, %p72
      %p74 = scmp.lt.s32.totalorder %s27, 1
      %s75 = scalar_select %p74, %s27, 1
      %s76 = smul.u32 %s75, %s28
      %p77 = scmp.lt.s32.totalorder %s39, 1
      %s78 = scalar_select %p77, %s39, 1
      %s79 = smul.u32 %s78, %s35
      %s80 = ssub.s32 %s76, %s79
      %p81 = scmp.eq.s32.totalorder %s80, 0
      %s83 = sadd.s32 %s82, 1
      %s84 = scalar_select %p81, %s82, %s83
      %p87 = pneg %p81
      %p88 = scmp.eq.s32.totalorder %s20, 4
      %p89 = por %p87, %p88
      %p90 = scmp.ne.s32.totalorder %s82, %s85
      %p91 = scmp.eq.s32.totalorder %s20, 0
      %p92 = por %p90, %p91
      %p93 = scmp.ne.s32.totalorder %s82, %s85
      %p94 = scmp.eq.s32.totalorder %s25, 4
      %p95 = por %p93, %p94
      %p96 = scmp.ne.s32.totalorder %s85, %s86
      %p97 = scmp.eq.s32.totalorder %s25, 0
      %p98 = por %p96, %p97
      %p99 = scmp.ne.s32.totalorder %s85, %s86
      %p100 = scmp.eq.s32.totalorder %s26, 4
      %p101 = por %p99, %p100
      %p103 = scmp.ne.s32.totalorder %s86, %s102
      %p104 = scmp.eq.s32.totalorder %s26, 0
      %p105 = por %p103, %p104
      %s107 = sadd.s32 %s106, 1
      %p110 = scmp.eq.s32.totalorder %s20, 4
      %p111 = scmp.ne.s32.totalorder %s106, %s108
      %p112 = scmp.eq.s32.totalorder %s20, 0
      %p113 = por %p111, %p112
      %p114 = scmp.ne.s32.totalorder %s106, %s108
      %p115 = scmp.eq.s32.totalorder %s25, 4
      %p116 = por %p114, %p115
      %p117 = scmp.ne.s32.totalorder %s108, %s109
      %p118 = scmp.eq.s32.totalorder %s25, 0
      %p119 = por %p117, %p118
      %p120 = scmp.ne.s32.totalorder %s108, %s109
      %p121 = scmp.eq.s32.totalorder %s26, 4
      %p122 = por %p120, %p121
      %p124 = scmp.ne.s32.totalorder %s109, %s123
      %p125 = scmp.eq.s32.totalorder %s26, 0
      %p126 = por %p124, %p125
      %s128 = sadd.s32 %s127, 1
      %p131 = scmp.eq.s32.totalorder %s20, 4
      %p132 = scmp.ne.s32.totalorder %s127, %s129
      %p133 = scmp.eq.s32.totalorder %s20, 0
      %p134 = por %p132, %p133
      %p135 = scmp.ne.s32.totalorder %s127, %s129
      %p136 = scmp.eq.s32.totalorder %s25, 4
      %p137 = por %p135, %p136
      %p138 = scmp.ne.s32.totalorder %s129, %s130
      %p139 = scmp.eq.s32.totalorder %s25, 0
      %p140 = por %p138, %p139
      %p141 = scmp.ne.s32.totalorder %s129, %s130
      %p142 = scmp.eq.s32.totalorder %s26, 4
      %p143 = por %p141, %p142
      %p145 = scmp.ne.s32.totalorder %s130, %s144
      %p146 = scmp.eq.s32.totalorder %s26, 0
      %p147 = por %p145, %p146
      %s149 = sadd.s32 %s148, 1
      %p152 = scmp.eq.s32.totalorder %s20, 4
      %p153 = scmp.ne.s32.totalorder %s148, %s150
      %p154 = scmp.eq.s32.totalorder %s20, 0
      %p155 = por %p153, %p154
      %p156 = scmp.ne.s32.totalorder %s148, %s150
      %p157 = scmp.eq.s32.totalorder %s25, 4
      %p158 = por %p156, %p157
      %p159 = scmp.ne.s32.totalorder %s150, %s151
      %p160 = scmp.eq.s32.totalorder %s25, 0
      %p161 = por %p159, %p160
      %p162 = scmp.ne.s32.totalorder %s150, %s151
      %p163 = scmp.eq.s32.totalorder %s26, 4
      %p164 = por %p162, %p163
      %p166 = scmp.ne.s32.totalorder %s151, %s165
      %p167 = scmp.eq.s32.totalorder %s26, 0
      %p168 = por %p166, %p167
      %s170 = sadd.s32 %s169, 1
      %p173 = scmp.eq.s32.totalorder %s20, 4
      %p174 = scmp.ne.s32.totalorder %s169, %s171
      %p175 = scmp.eq.s32.totalorder %s20, 0
      %p176 = por %p174, %p175
      %p177 = scmp.ne.s32.totalorder %s169, %s171
      %p178 = scmp.eq.s32.totalorder %s25, 4
      %p179 = por %p177, %p178
      %p180 = scmp.ne.s32.totalorder %s171, %s172
      %p181 = scmp.eq.s32.totalorder %s25, 0
      %p182 = por %p180, %p181
      %p183 = scmp.ne.s32.totalorder %s171, %s172
      %p184 = scmp.eq.s32.totalorder %s26, 4
      %p185 = por %p183, %p184
      %p187 = scmp.ne.s32.totalorder %s172, %s186
      %p188 = scmp.eq.s32.totalorder %s26, 0
      %p189 = por %p187, %p188
      %s191 = sadd.s32 %s190, 1
      %p194 = scmp.eq.s32.totalorder %s20, 4
      %p195 = scmp.ne.s32.totalorder %s190, %s192
      %p196 = scmp.eq.s32.totalorder %s20, 0
      %p197 = por %p195, %p196
      %p198 = scmp.ne.s32.totalorder %s190, %s192
      %p199 = scmp.eq.s32.totalorder %s25, 4
      %p200 = por %p198, %p199
      %p201 = scmp.ne.s32.totalorder %s192, %s193
      %p202 = scmp.eq.s32.totalorder %s25, 0
      %p203 = por %p201, %p202
      %p204 = scmp.ne.s32.totalorder %s192, %s193
      %p205 = scmp.eq.s32.totalorder %s26, 4
      %p206 = por %p204, %p205
      %p208 = scmp.ne.s32.totalorder %s193, %s207
      %p209 = scmp.eq.s32.totalorder %s26, 0
      %p210 = por %p208, %p209
      %s212 = sadd.s32 %s211, 1
      %p215 = scmp.eq.s32.totalorder %s20, 4
      %p216 = scmp.ne.s32.totalorder %s211, %s213
      %p217 = scmp.eq.s32.totalorder %s20, 0
      %p218 = por %p216, %p217
      %p219 = scmp.ne.s32.totalorder %s211, %s213
      %p220 = scmp.eq.s32.totalorder %s25, 4
      %p221 = por %p219, %p220
      %p222 = scmp.ne.s32.totalorder %s213, %s214
      %p223 = scmp.eq.s32.totalorder %s25, 0
      %p224 = por %p222, %p223
      %p225 = scmp.ne.s32.totalorder %s213, %s214
      %p226 = scmp.eq.s32.totalorder %s26, 4
      %p227 = por %p225, %p226
      %p229 = scmp.ne.s32.totalorder %s214, %s228
      %p230 = scmp.eq.s32.totalorder %s26, 0
      %p231 = por %p229, %p230
      %s233 = sadd.s32 %s232, 1
      %p236 = scmp.eq.s32.totalorder %s20, 4
      %p237 = scmp.ne.s32.totalorder %s232, %s234
      %p238 = scmp.eq.s32.totalorder %s20, 0
      %p239 = por %p237, %p238
      %p240 = scmp.ne.s32.totalorder %s232, %s234
      %p241 = scmp.eq.s32.totalorder %s25, 4
      %p242 = por %p240, %p241
      %p243 = scmp.ne.s32.totalorder %s234, %s235
      %p244 = scmp.eq.s32.totalorder %s25, 0
      %p245 = por %p243, %p244
      %p246 = scmp.ne.s32.totalorder %s234, %s235
      %p247 = scmp.eq.s32.totalorder %s26, 4
      %p248 = por %p246, %p247
      %p250 = scmp.ne.s32.totalorder %s235, %s249
      %p251 = scmp.eq.s32.totalorder %s26, 0
      %p252 = por %p250, %p251
      %p253 = scmp.le.s32.totalorder 1, %s20
      %p254 = scmp.lt.s32.totalorder %s20, 6
      %p255 = pnand %p253, %p254
      %p256 = pneg %p255
      // Predicated region
      $region9: #{tpu_custom_call.1} parent=5 // pred_check
        _
      $region10: #{tpu_custom_call.1} parent=5 // pred_check_branch
        %258 = sbr.rel (%p255) target = $region12
      $region11: #{tpu_custom_call.1} parent=5 // pred_region
        %s259 = ssub.s32 %s20, 1
        // Predicated region
        $region13: #{tpu_custom_call.1} parent=11 // pred_check
          %p260 = pneg %p119
        $region14: #{tpu_custom_call.1} parent=11 // pred_check_branch
          %262 = sbr.rel (%p260) target = $region16
        $region15: #{tpu_custom_call.1} parent=11 // pred_region
          _
        $region16: #{tpu_custom_call.1} parent=11 // pred_fallthru
          _
        // Predicated region
        $region17: #{tpu_custom_call.1} parent=11 // pred_check
          %p263 = pneg %p140
        $region18: #{tpu_custom_call.1} parent=11 // pred_check_branch
          %265 = sbr.rel (%p263) target = $region20
        $region19: #{tpu_custom_call.1} parent=11 // pred_region
          _
        $region20: #{tpu_custom_call.1} parent=11 // pred_fallthru
          _
        // Predicated region
        $region21: #{tpu_custom_call.1} parent=11 // pred_check
          %p266 = pneg %p161
        $region22: #{tpu_custom_call.1} parent=11 // pred_check_branch
          %268 = sbr.rel (%p266) target = $region24
        $region23: #{tpu_custom_call.1} parent=11 // pred_region
          _
        $region24: #{tpu_custom_call.1} parent=11 // pred_fallthru
          _
        // Predicated region
        $region25: #{tpu_custom_call.1} parent=11 // pred_check
          %p269 = pneg %p182
        $region26: #{tpu_custom_call.1} parent=11 // pred_check_branch
          %271 = sbr.rel (%p269) target = $region28
        $region27: #{tpu_custom_call.1} parent=11 // pred_region
          _
        $region28: #{tpu_custom_call.1} parent=11 // pred_fallthru
          _
        // Predicated region
        $region29: #{tpu_custom_call.1} parent=11 // pred_check
          %p272 = pneg %p203
        $region30: #{tpu_custom_call.1} parent=11 // pred_check_branch
          %274 = sbr.rel (%p272) target = $region32
        $region31: #{tpu_custom_call.1} parent=11 // pred_region
          _
        $region32: #{tpu_custom_call.1} parent=11 // pred_fallthru
          _
        // Predicated region
        $region33: #{tpu_custom_call.1} parent=11 // pred_check
          %p275 = pneg %p224
        $region34: #{tpu_custom_call.1} parent=11 // pred_check_branch
          %277 = sbr.rel (%p275) target = $region36
        $region35: #{tpu_custom_call.1} parent=11 // pred_region
          _
        $region36: #{tpu_custom_call.1} parent=11 // pred_fallthru
          _
      $region12: #{tpu_custom_call.1} parent=5 // pred_fallthru
        _
      %p278 = scmp.lt.s32.totalorder %s20, 5
      // Predicated region
      $region37: #{tpu_custom_call.1} parent=5 // pred_check
        %p279 = pneg %p278
      $region38: #{tpu_custom_call.1} parent=5 // pred_check_branch
        %281 = sbr.rel (%p279) target = $region40
      $region39: #{tpu_custom_call.1} parent=5 // pred_region
        // Predicated region
        $region41: #{tpu_custom_call.1} parent=39 // pred_check
          %p282 = pneg %p60
        $region42: #{tpu_custom_call.1} parent=39 // pred_check_branch
          %284 = sbr.rel (%p282) target = $region44
        $region43: #{tpu_custom_call.1} parent=39 // pred_region
          %p285 = scmp.lt.s32.totalorder %s27, 1
          %s286 = scalar_select %p285, %s27, 1
          %s287 = ssub.s32 1, %s286
          %s288 = smul.u32 %s287, %s28
          %s289 = smul.u32 64, %s288
          %p290 = scmp.lt.s32.totalorder %s289, 63
          %s291 = scalar_select %p290, %s289, 63
          %s292 = smul.addr %s291, 8
          %s293 = scalar_lea.vmem %s0, %s292
          %p294 = scmp.lt.s32.totalorder %s27, 1
          %s295 = scalar_select %p294, %s27, 1
          %s296 = ssub.s32 1, %s295
          %s297 = smul.u32 %s296, %s28
          %s298 = smul.u32 64, %s297
        $region44: #{tpu_custom_call.1} parent=39 // pred_fallthru
          _
        // Predicated region
        $region45: #{tpu_custom_call.1} parent=39 // pred_check
          %p299 = pneg %p92
        $region46: #{tpu_custom_call.1} parent=39 // pred_check_branch
          %301 = sbr.rel (%p299) target = $region48
        $region47: #{tpu_custom_call.1} parent=39 // pred_region
          %s302 = sand.u32 %s82, 1
          %s303 = scalar_lea.sflag [#allocation5], %s302
          %s304 = sand.u32 %s82, 1
          %s305 = smul.addr %s304, 1024
          %s306 = scalar_lea.vmem [#allocation4], %s305
          %p307 = scmp.lt.s32.totalorder %s27, 1
          %s308 = scalar_select %p307, %s27, 1
          %s309 = smul.u32 %s308, %s28
          %s310 = smul.u32 64, %s309
          %s312 = ssub.s32 16384, 16384
          %313 = vsyncadd %s303, %s312
          %s314 = smul.addr %s310, 4
          %s315 = smul.addr %s314, 64
          %s316 = scalar_lea.hbm %s1, %s315
          %s317 = sshll.u32 %s306, 4
          %s318 = int_to_ptr.vmem [resolvable:$true] %s317
          %323 = dma.hbm_to_vmem [thread:$0]  %s316, 16384, %s318, %s303, 256, 256, 16
        $region48: #{tpu_custom_call.1} parent=39 // pred_fallthru
          _
      $region40: #{tpu_custom_call.1} parent=5 // pred_fallthru
        _
      %p324 = scmp.le.s32.totalorder 1, %s20
      %p325 = scmp.lt.s32.totalorder %s20, 6
      %p326 = pnand %p324, %p325
      %p327 = pneg %p326
      // Predicated region
      $region49: #{tpu_custom_call.1} parent=5 // pred_check
        _
      $region50: #{tpu_custom_call.1} parent=5 // pred_check_branch
        %329 = sbr.rel (%p326) target = $region52
      $region51: #{tpu_custom_call.1} parent=5 // pred_region
        %s330 = ssub.s32 %s20, 1
        %s331 = sand.u32 %s85, 1
        %s332 = scalar_lea.sflag [#allocation5], %s331
        %s333 = sand.u32 %s85, 1
        %s334 = smul.addr %s333, 1024
        %s335 = scalar_lea.vmem [#allocation4], %s334
        // Predicated region
        $region53: #{tpu_custom_call.1} parent=51 // pred_check
          %p336 = pneg %p98
        $region54: #{tpu_custom_call.1} parent=51 // pred_check_branch
          %338 = sbr.rel (%p336) target = $region56
        $region55: #{tpu_custom_call.1} parent=51 // pred_region
          %339 = dma.done %s332, 16384
        $region56: #{tpu_custom_call.1} parent=51 // pred_fallthru
          _
        %p340 = scmp.lt.s32.totalorder %s29, 1
        %s341 = scalar_select %p340, %s29, 1
        %s342 = ssub.s32 1, %s341
        %s343 = smul.u32 %s342, %s30
        %s344 = smul.u32 64, %s343
        %p345 = scmp.lt.s32.totalorder %s344, 63
        %s346 = scalar_select %p345, %s344, 63
        %s347 = smul.addr %s346, 8
        %s348 = scalar_lea.vmem %s0, %s347
        %p349 = pneg %p66
        %p350 = pneg %p63
        %s351 = sand.u32 %s85, 1
        %s352 = scalar_lea.sflag [#allocation5], %s351
        %s353 = sand.u32 %s85, 1
        %s354 = smul.addr %s353, 1024
        %s355 = scalar_lea.vmem [#allocation4], %s354
        %p356 = pneg %p98
        %p357 = pneg %p95
        %p358 = pneg %p119
        %p359 = pneg %p116
        %p360 = pneg %p140
        %p361 = pneg %p137
        %p362 = pneg %p161
        %p363 = pneg %p158
        %p364 = pneg %p182
        %p365 = pneg %p179
        %p366 = pneg %p203
        %p367 = pneg %p200
        %p368 = pneg %p224
        %p369 = pneg %p221
        %p370 = pneg %p245
        %p371 = pneg %p242
        %p372 = scmp.lt.s32.totalorder %s29, 1
        %s373 = scalar_select %p372, %s29, 1
        %s374 = ssub.s32 1, %s373
        %s375 = smul.u32 %s374, %s30
        %s376 = smul.u32 64, %s375
        %p377 = scmp.lt.s32.totalorder %s376, 63
        %s378 = scalar_select %p377, %s376, 63
        %s379 = smul.addr %s378, 8
        %s380 = scalar_lea.vmem %s0, %s379
        %p381 = scmp.lt.s32.totalorder %s29, 1
        %s382 = scalar_select %p381, %s29, 1
        %s383 = ssub.s32 1, %s382
        %s384 = smul.u32 %s383, %s30
        %s385 = smul.u32 64, %s384
        %p386 = scmp.lt.s32.totalorder %s29, 1
        %s387 = scalar_select %p386, %s29, 1
        %s388 = smul.u32 %s387, %s30
        %s389 = smul.u32 64, %s388
        %s391 = smul.u32 %s30, 512
        %v392 = vld [vmem:[%s6] sm:$0x1]
        %v393 = vld [vmem:[#allocation3] sm:$0x1]
        %s394 = vtos %v393
        %p395 = scmp.eq.s32.totalorder %s29, 0
        // Predicated region
        $region57: #{tpu_custom_call.1} parent=51 // pred_check
          %p396 = pneg %p395
        $region58: #{tpu_custom_call.1} parent=51 // pred_check_branch
          %398 = sbr.rel (%p396) target = $region60
        $region59: #{tpu_custom_call.1} parent=51 // pred_region
          %v399 = vld [vmem:[%s380] sm:$0xff]
          %v400 = vld [vmem:[%s380 + $0x8] sm:$0xff]
          %v401 = vld [vmem:[%s380 + $0x10] sm:$0xff]
          %v402 = vld [vmem:[%s380 + $0x18] sm:$0xff]
          %v403 = vld [vmem:[%s380 + $0x20] sm:$0xff]
          %v404 = vld [vmem:[%s380 + $0x28] sm:$0xff]
          %v405 = vld [vmem:[%s380 + $0x30] sm:$0xff]
          %v406 = vld [vmem:[%s380 + $0x38] sm:$0xff]
          %v407 = vld [vmem:[%s380 + $0x40] sm:$0xff]
          %v408 = vld [vmem:[%s380 + $0x48] sm:$0xff]
          %v409 = vld [vmem:[%s380 + $0x50] sm:$0xff]
          %v410 = vld [vmem:[%s380 + $0x58] sm:$0xff]
          %v411 = vld [vmem:[%s380 + $0x60] sm:$0xff]
          %v412 = vld [vmem:[%s380 + $0x68] sm:$0xff]
          %v413 = vld [vmem:[%s380 + $0x70] sm:$0xff]
          %v414 = vld [vmem:[%s380 + $0x78] sm:$0xff]
          %v415 = vld [vmem:[%s380 + $0x80] sm:$0xff]
          %v416 = vld [vmem:[%s380 + $0x88] sm:$0xff]
          %v417 = vld [vmem:[%s380 + $0x90] sm:$0xff]
          %v418 = vld [vmem:[%s380 + $0x98] sm:$0xff]
          %v419 = vld [vmem:[%s380 + $0xa0] sm:$0xff]
          %v420 = vld [vmem:[%s380 + $0xa8] sm:$0xff]
          %v421 = vld [vmem:[%s380 + $0xb0] sm:$0xff]
          %v422 = vld [vmem:[%s380 + $0xb8] sm:$0xff]
          %v423 = vld [vmem:[%s380 + $0xc0] sm:$0xff]
          %v424 = vld [vmem:[%s380 + $0xc8] sm:$0xff]
          %v425 = vld [vmem:[%s380 + $0xd0] sm:$0xff]
          %v426 = vld [vmem:[%s380 + $0xd8] sm:$0xff]
          %v427 = vld [vmem:[%s380 + $0xe0] sm:$0xff]
          %v428 = vld [vmem:[%s380 + $0xe8] sm:$0xff]
          %v429 = vld [vmem:[%s380 + $0xf0] sm:$0xff]
          %v430 = vld [vmem:[%s380 + $0xf8] sm:$0xff]
          %v431 = vld [vmem:[%s380 + $0x100] sm:$0xff]
          %v432 = vld [vmem:[%s380 + $0x108] sm:$0xff]
          %v433 = vld [vmem:[%s380 + $0x110] sm:$0xff]
          %v434 = vld [vmem:[%s380 + $0x118] sm:$0xff]
          %v435 = vld [vmem:[%s380 + $0x120] sm:$0xff]
          %v436 = vld [vmem:[%s380 + $0x128] sm:$0xff]
          %v437 = vld [vmem:[%s380 + $0x130] sm:$0xff]
          %v438 = vld [vmem:[%s380 + $0x138] sm:$0xff]
          %v439 = vld [vmem:[%s380 + $0x140] sm:$0xff]
          %v440 = vld [vmem:[%s380 + $0x148] sm:$0xff]
          %v441 = vld [vmem:[%s380 + $0x150] sm:$0xff]
          %v442 = vld [vmem:[%s380 + $0x158] sm:$0xff]
          %v443 = vld [vmem:[%s380 + $0x160] sm:$0xff]
          %v444 = vld [vmem:[%s380 + $0x168] sm:$0xff]
          %v445 = vld [vmem:[%s380 + $0x170] sm:$0xff]
          %v446 = vld [vmem:[%s380 + $0x178] sm:$0xff]
          %v447 = vld [vmem:[%s380 + $0x180] sm:$0xff]
          %v448 = vld [vmem:[%s380 + $0x188] sm:$0xff]
          %v449 = vld [vmem:[%s380 + $0x190] sm:$0xff]
          %v450 = vld [vmem:[%s380 + $0x198] sm:$0xff]
          %v451 = vld [vmem:[%s380 + $0x1a0] sm:$0xff]
          %v452 = vld [vmem:[%s380 + $0x1a8] sm:$0xff]
          %v453 = vld [vmem:[%s380 + $0x1b0] sm:$0xff]
          %v454 = vld [vmem:[%s380 + $0x1b8] sm:$0xff]
          %v455 = vld [vmem:[%s380 + $0x1c0] sm:$0xff]
          %v456 = vld [vmem:[%s380 + $0x1c8] sm:$0xff]
          %v457 = vld [vmem:[%s380 + $0x1d0] sm:$0xff]
          %v458 = vld [vmem:[%s380 + $0x1d8] sm:$0xff]
          %v459 = vld [vmem:[%s380 + $0x1e0] sm:$0xff]
          %v460 = vld [vmem:[%s380 + $0x1e8] sm:$0xff]
          %v461 = vld [vmem:[%s380 + $0x1f0] sm:$0xff]
          %v462 = vld [vmem:[%s380 + $0x1f8] sm:$0xff]
          %v463 = vld [vmem:[%s2] sm:$0xff]
          %v464 = vld [vmem:[%s2 + $0x8] sm:$0xff]
          %v465 = vld [vmem:[%s2 + $0x10] sm:$0xff]
          %v466 = vld [vmem:[%s2 + $0x18] sm:$0xff]
          %v467 = vld [vmem:[%s3] sm:$0x1]
          %v469 = vlaneseq
          %v470 = vshrl.u32 %v469, 7
          %v471 = vsub.s32 0, %v470
          %v472 = vrot.slane %v467, %v471
          %vm474 = vcmask 261120
          %v476 = vsel %vm474, %v399, 0
          %v479 = vsel %vm474, %v400, 0
          %v482 = vsel %vm474, %v401, 0
          %v485 = vsel %vm474, %v402, 0
          %v488 = vsel %vm474, %v403, 0
          %v491 = vsel %vm474, %v404, 0
          %v494 = vsel %vm474, %v405, 0
          %v497 = vsel %vm474, %v406, 0
          %v500 = vsel %vm474, %v407, 0
          %v503 = vsel %vm474, %v408, 0
          %v506 = vsel %vm474, %v409, 0
          %v509 = vsel %vm474, %v410, 0
          %v512 = vsel %vm474, %v411, 0
          %v515 = vsel %vm474, %v412, 0
          %v518 = vsel %vm474, %v413, 0
          %v521 = vsel %vm474, %v414, 0
          %v524 = vsel %vm474, %v415, 0
          %v527 = vsel %vm474, %v416, 0
          %v530 = vsel %vm474, %v417, 0
          %v533 = vsel %vm474, %v418, 0
          %v536 = vsel %vm474, %v419, 0
          %v539 = vsel %vm474, %v420, 0
          %v542 = vsel %vm474, %v421, 0
          %v545 = vsel %vm474, %v422, 0
          %v548 = vsel %vm474, %v423, 0
          %v551 = vsel %vm474, %v424, 0
          %v554 = vsel %vm474, %v425, 0
          %v557 = vsel %vm474, %v426, 0
          %v560 = vsel %vm474, %v427, 0
          %v563 = vsel %vm474, %v428, 0
          %v566 = vsel %vm474, %v429, 0
          %v569 = vsel %vm474, %v430, 0
          %v572 = vsel %vm474, %v431, 0
          %v575 = vsel %vm474, %v432, 0
          %v578 = vsel %vm474, %v433, 0
          %v581 = vsel %vm474, %v434, 0
          %v584 = vsel %vm474, %v435, 0
          %v587 = vsel %vm474, %v436, 0
          %v590 = vsel %vm474, %v437, 0
          %v593 = vsel %vm474, %v438, 0
          %v596 = vsel %vm474, %v439, 0
          %v599 = vsel %vm474, %v440, 0
          %v602 = vsel %vm474, %v441, 0
          %v605 = vsel %vm474, %v442, 0
          %v608 = vsel %vm474, %v443, 0
          %v611 = vsel %vm474, %v444, 0
          %v614 = vsel %vm474, %v445, 0
          %v617 = vsel %vm474, %v446, 0
          %v620 = vsel %vm474, %v447, 0
          %v623 = vsel %vm474, %v448, 0
          %v626 = vsel %vm474, %v449, 0
          %v629 = vsel %vm474, %v450, 0
          %v632 = vsel %vm474, %v451, 0
          %v635 = vsel %vm474, %v452, 0
          %v638 = vsel %vm474, %v453, 0
          %v641 = vsel %vm474, %v454, 0
          %v644 = vsel %vm474, %v455, 0
          %v647 = vsel %vm474, %v456, 0
          %v650 = vsel %vm474, %v457, 0
          %v653 = vsel %vm474, %v458, 0
          %v656 = vsel %vm474, %v459, 0
          %v659 = vsel %vm474, %v460, 0
          %v662 = vsel %vm474, %v461, 0
          %v665 = vsel %vm474, %v462, 0
          %667 = vmatprep.subr.mxu0 0.0
          %668 = vmatpush1.msra.mxu0 %v463
          %669 = vmatprep.subr.mxu0 0.0
          %670 = vmatpush1.msra.mxu0 %v464
          %671 = vmatprep.subr.mxu0 0.0
          %672 = vmatpush1.msra.mxu0 %v465
          %673 = vmatprep.subr.mxu0 0.0
          %674 = vmatpush1.msra.mxu0 %v466
          %675 = vmatprep.subr.mxu0 0.0
          %676 = vmatpush1.msra.mxu0 0.0
          %677 = vmatprep.subr.mxu0 0.0
          %678 = vmatpush1.msra.mxu0 0.0
          %679 = vmatprep.subr.mxu0 0.0
          %680 = vmatpush1.msra.mxu0 0.0
          %681 = vmatprep.subr.mxu0 0.0
          %682 = vmatpush1.msra.mxu0 0.0
          %683 = vmatprep.subr.mxu0 0.0
          %684 = vmatpush1.msra.mxu0 0.0
          %685 = vmatprep.subr.mxu0 0.0
          %686 = vmatpush1.msra.mxu0 0.0
          %687 = vmatprep.subr.mxu0 0.0
          %688 = vmatpush1.msra.mxu0 0.0
          %689 = vmatprep.subr.mxu0 0.0
          %690 = vmatpush1.msra.mxu0 0.0
          %691 = vmatprep.subr.mxu0 0.0
          %692 = vmatpush1.msra.mxu0 0.0
          %693 = vmatprep.subr.mxu0 0.0
          %694 = vmatpush1.msra.mxu0 0.0
          %695 = vmatprep.subr.mxu0 0.0
          %696 = vmatpush1.msra.mxu0 0.0
          %697 = vmatprep.subr.mxu0 0.0
          %698 = vmatpush1.msra.mxu0 0.0
          %699 = vmatprep.subr.mxu0 0.0
          %700 = vmatpush1.msra.mxu0 0.0
          %701 = vmatprep.subr.mxu0 0.0
          %702 = vmatpush1.msra.mxu0 0.0
          %703 = vmatprep.subr.mxu0 0.0
          %704 = vmatpush1.msra.mxu0 0.0
          %705 = vmatprep.subr.mxu0 0.0
          %706 = vmatpush1.msra.mxu0 0.0
          %707 = vmatprep.subr.mxu0 0.0
          %708 = vmatpush1.msra.mxu0 0.0
          %709 = vmatprep.subr.mxu0 0.0
          %710 = vmatpush1.msra.mxu0 0.0
          %711 = vmatprep.subr.mxu0 0.0
          %712 = vmatpush1.msra.mxu0 0.0
          %713 = vmatprep.subr.mxu0 0.0
          %714 = vmatpush1.msra.mxu0 0.0
          %715 = vmatprep.subr.mxu0 0.0
          %716 = vmatpush1.msra.mxu0 0.0
          %717 = vmatprep.subr.mxu0 0.0
          %718 = vmatpush1.msra.mxu0 0.0
          %719 = vmatprep.subr.mxu0 0.0
          %720 = vmatpush1.msra.mxu0 0.0
          %721 = vmatprep.subr.mxu0 0.0
          %722 = vmatpush1.msra.mxu0 0.0
          %723 = vmatprep.subr.mxu0 0.0
          %724 = vmatpush1.msra.mxu0 0.0
          %725 = vmatprep.subr.mxu0 0.0
          %726 = vmatpush1.msra.mxu0 0.0
          %727 = vmatprep.subr.mxu0 0.0
          %728 = vmatpush1.msra.mxu0 0.0
          %729 = vmatprep.subr.mxu0 0.0
          %730 = vmatpush1.msra.mxu0 0.0
          %731 = vmatprep.mubr.f32.mxu0 0.0
          %732 = vmatmul.mubr.f32.gmra.mrb[0].mxu0 %v476
          %v733 = vpop.f32.mrb[0].mxu0
          %v734 = vadd.f32 %v472, %v733
          %v735 = vpop.f32.mrb[0].mxu0
          %736 = vmatprep.mubr.f32.mxu0 0.0
          %737 = vmatmul.mubr.f32.gmra.mrb[0].mxu0 %v479
          %v738 = vpop.f32.mrb[0].mxu0
          %v739 = vadd.f32 %v472, %v738
          %v740 = vpop.f32.mrb[0].mxu0
          %741 = vmatprep.mubr.f32.mxu0 0.0
          %742 = vmatmul.mubr.f32.gmra.mrb[0].mxu0 %v482
          %v743 = vpop.f32.mrb[0].mxu0
          %v744 = vadd.f32 %v472, %v743
          %v745 = vpop.f32.mrb[0].mxu0
          %746 = vmatprep.mubr.f32.mxu0 0.0
          %747 = vmatmul.mubr.f32.gmra.mrb[0].mxu0 %v485
          %v748 = vpop.f32.mrb[0].mxu0
          %v749 = vadd.f32 %v472, %v748
          %v750 = vpop.f32.mrb[0].mxu0
          %751 = vmatprep.mubr.f32.mxu0 0.0
          %752 = vmatmul.mubr.f32.gmra.mrb[0].mxu0 %v488
          %v753 = vpop.f32.mrb[0].mxu0
          %v754 = vadd.f32 %v472, %v753
          %v755 = vpop.f32.mrb[0].mxu0
          %756 = vmatprep.mubr.f32.mxu0 0.0
          %757 = vmatmul.mubr.f32.gmra.mrb[0].mxu0 %v491
          %v758 = vpop.f32.mrb[0].mxu0
          %v759 = vadd.f32 %v472, %v758
          %v760 = vpop.f32.mrb[0].mxu0
          %761 = vmatprep.mubr.f32.mxu0 0.0
          %762 = vmatmul.mubr.f32.gmra.mrb[0].mxu0 %v494
          %v763 = vpop.f32.mrb[0].mxu0
          %v764 = vadd.f32 %v472, %v763
          %v765 = vpop.f32.mrb[0].mxu0
          %766 = vmatprep.mubr.f32.mxu0 0.0
          %767 = vmatmul.mubr.f32.gmra.mrb[0].mxu0 %v497
          %v768 = vpop.f32.mrb[0].mxu0
          %v769 = vadd.f32 %v472, %v768
          %v770 = vpop.f32.mrb[0].mxu0
          %771 = vmatprep.mubr.f32.mxu0 0.0
          %772 = vmatmul.mubr.f32.gmra.mrb[0].mxu0 %v500
          %v773 = vpop.f32.mrb[0].mxu0
          %v774 = vadd.f32 %v472, %v773
          %v775 = vpop.f32.mrb[0].mxu0
          %776 = vmatprep.mubr.f32.mxu0 0.0
          %777 = vmatmul.mubr.f32.gmra.mrb[0].mxu0 %v503
          %v778 = vpop.f32.mrb[0].mxu0
          %v779 = vadd.f32 %v472, %v778
          %v780 = vpop.f32.mrb[0].mxu0
          %781 = vmatprep.mubr.f32.mxu0 0.0
          %782 = vmatmul.mubr.f32.gmra.mrb[0].mxu0 %v506
          %v783 = vpop.f32.mrb[0].mxu0
          %v784 = vadd.f32 %v472, %v783
          %v785 = vpop.f32.mrb[0].mxu0
          %786 = vmatprep.mubr.f32.mxu0 0.0
          %787 = vmatmul.mubr.f32.gmra.mrb[0].mxu0 %v509
          %v788 = vpop.f32.mrb[0].mxu0
          %v789 = vadd.f32 %v472, %v788
          %v790 = vpop.f32.mrb[0].mxu0
          %791 = vmatprep.mubr.f32.mxu0 0.0
          %792 = vmatmul.mubr.f32.gmra.mrb[0].mxu0 %v512
          %v793 = vpop.f32.mrb[0].mxu0
          %v794 = vadd.f32 %v472, %v793
          %v795 = vpop.f32.mrb[0].mxu0
          %796 = vmatprep.mubr.f32.mxu0 0.0
          %797 = vmatmul.mubr.f32.gmra.mrb[0].mxu0 %v515
          %v798 = vpop.f32.mrb[0].mxu0
          %v799 = vadd.f32 %v472, %v798
          %v800 = vpop.f32.mrb[0].mxu0
          %801 = vmatprep.mubr.f32.mxu0 0.0
          %802 = vmatmul.mubr.f32.gmra.mrb[0].mxu0 %v518
          %v803 = vpop.f32.mrb[0].mxu0
          %v804 = vadd.f32 %v472, %v803
          %v805 = vpop.f32.mrb[0].mxu0
          %806 = vmatprep.mubr.f32.mxu0 0.0
          %807 = vmatmul.mubr.f32.gmra.mrb[0].mxu0 %v521
          %v808 = vpop.f32.mrb[0].mxu0
          %v809 = vadd.f32 %v472, %v808
          %v810 = vpop.f32.mrb[0].mxu0
          %811 = vmatprep.mubr.f32.mxu0 0.0
          %812 = vmatmul.mubr.f32.gmra.mrb[0].mxu0 %v524
          %v813 = vpop.f32.mrb[0].mxu0
          %v814 = vadd.f32 %v472, %v813
          %v815 = vpop.f32.mrb[0].mxu0
          %816 = vmatprep.mubr.f32.mxu0 0.0
          %817 = vmatmul.mubr.f32.gmra.mrb[0].mxu0 %v527
          %v818 = vpop.f32.mrb[0].mxu0
          %v819 = vadd.f32 %v472, %v818
          %v820 = vpop.f32.mrb[0].mxu0
          %821 = vmatprep.mubr.f32.mxu0 0.0
          %822 = vmatmul.mubr.f32.gmra.mrb[0].mxu0 %v530
          %v823 = vpop.f32.mrb[0].mxu0
          %v824 = vadd.f32 %v472, %v823
          %v825 = vpop.f32.mrb[0].mxu0
          %826 = vmatprep.mubr.f32.mxu0 0.0
          %827 = vmatmul.mubr.f32.gmra.mrb[0].mxu0 %v533
          %v828 = vpop.f32.mrb[0].mxu0
          %v829 = vadd.f32 %v472, %v828
          %v830 = vpop.f32.mrb[0].mxu0
          %831 = vmatprep.mubr.f32.mxu0 0.0
          %832 = vmatmul.mubr.f32.gmra.mrb[0].mxu0 %v536
          %v833 = vpop.f32.mrb[0].mxu0
          %v834 = vadd.f32 %v472, %v833
          %v835 = vpop.f32.mrb[0].mxu0
          %836 = vmatprep.mubr.f32.mxu0 0.0
          %837 = vmatmul.mubr.f32.gmra.mrb[0].mxu0 %v539
          %v838 = vpop.f32.mrb[0].mxu0
          %v839 = vadd.f32 %v472, %v838
          %v840 = vpop.f32.mrb[0].mxu0
          %841 = vmatprep.mubr.f32.mxu0 0.0
          %842 = vmatmul.mubr.f32.gmra.mrb[0].mxu0 %v542
          %v843 = vpop.f32.mrb[0].mxu0
          %v844 = vadd.f32 %v472, %v843
          %v845 = vpop.f32.mrb[0].mxu0
          %846 = vmatprep.mubr.f32.mxu0 0.0
          %847 = vmatmul.mubr.f32.gmra.mrb[0].mxu0 %v545
          %v848 = vpop.f32.mrb[0].mxu0
          %v849 = vadd.f32 %v472, %v848
          %v850 = vpop.f32.mrb[0].mxu0
          %851 = vmatprep.mubr.f32.mxu0 0.0
          %852 = vmatmul.mubr.f32.gmra.mrb[0].mxu0 %v548
          %v853 = vpop.f32.mrb[0].mxu0
          %v854 = vadd.f32 %v472, %v853
          %v855 = vpop.f32.mrb[0].mxu0
          %856 = vmatprep.mubr.f32.mxu0 0.0
          %857 = vmatmul.mubr.f32.gmra.mrb[0].mxu0 %v551
          %v858 = vpop.f32.mrb[0].mxu0
          %v859 = vadd.f32 %v472, %v858
          %v860 = vpop.f32.mrb[0].mxu0
          %861 = vmatprep.mubr.f32.mxu0 0.0
          %862 = vmatmul.mubr.f32.gmra.mrb[0].mxu0 %v554
          %v863 = vpop.f32.mrb[0].mxu0
          %v864 = vadd.f32 %v472, %v863
          %v865 = vpop.f32.mrb[0].mxu0
          %866 = vmatprep.mubr.f32.mxu0 0.0
          %867 = vmatmul.mubr.f32.gmra.mrb[0].mxu0 %v557
          %v868 = vpop.f32.mrb[0].mxu0
          %v869 = vadd.f32 %v472, %v868
          %v870 = vpop.f32.mrb[0].mxu0
          %871 = vmatprep.mubr.f32.mxu0 0.0
          %872 = vmatmul.mubr.f32.gmra.mrb[0].mxu0 %v560
          %v873 = vpop.f32.mrb[0].mxu0
          %v874 = vadd.f32 %v472, %v873
          %v875 = vpop.f32.mrb[0].mxu0
          %876 = vmatprep.mubr.f32.mxu0 0.0
          %877 = vmatmul.mubr.f32.gmra.mrb[0].mxu0 %v563
          %v878 = vpop.f32.mrb[0].mxu0
          %v879 = vadd.f32 %v472, %v878
          %v880 = vpop.f32.mrb[0].mxu0
          %881 = vmatprep.mubr.f32.mxu0 0.0
          %882 = vmatmul.mubr.f32.gmra.mrb[0].mxu0 %v566
          %v883 = vpop.f32.mrb[0].mxu0
          %v884 = vadd.f32 %v472, %v883
          %v885 = vpop.f32.mrb[0].mxu0
          %886 = vmatprep.mubr.f32.mxu0 0.0
          %887 = vmatmul.mubr.f32.gmra.mrb[0].mxu0 %v569
          %v888 = vpop.f32.mrb[0].mxu0
          %v889 = vadd.f32 %v472, %v888
          %v890 = vpop.f32.mrb[0].mxu0
          %891 = vmatprep.mubr.f32.mxu0 0.0
          %892 = vmatmul.mubr.f32.gmra.mrb[0].mxu0 %v572
          %v893 = vpop.f32.mrb[0].mxu0
          %v894 = vadd.f32 %v472, %v893
          %v895 = vpop.f32.mrb[0].mxu0
          %896 = vmatprep.mubr.f32.mxu0 0.0
          %897 = vmatmul.mubr.f32.gmra.mrb[0].mxu0 %v575
          %v898 = vpop.f32.mrb[0].mxu0
          %v899 = vadd.f32 %v472, %v898
          %v900 = vpop.f32.mrb[0].mxu0
          %901 = vmatprep.mubr.f32.mxu0 0.0
          %902 = vmatmul.mubr.f32.gmra.mrb[0].mxu0 %v578
          %v903 = vpop.f32.mrb[0].mxu0
          %v904 = vadd.f32 %v472, %v903
          %v905 = vpop.f32.mrb[0].mxu0
          %906 = vmatprep.mubr.f32.mxu0 0.0
          %907 = vmatmul.mubr.f32.gmra.mrb[0].mxu0 %v581
          %v908 = vpop.f32.mrb[0].mxu0
          %v909 = vadd.f32 %v472, %v908
          %v910 = vpop.f32.mrb[0].mxu0
          %911 = vmatprep.mubr.f32.mxu0 0.0
          %912 = vmatmul.mubr.f32.gmra.mrb[0].mxu0 %v584
          %v913 = vpop.f32.mrb[0].mxu0
          %v914 = vadd.f32 %v472, %v913
          %v915 = vpop.f32.mrb[0].mxu0
          %916 = vmatprep.mubr.f32.mxu0 0.0
          %917 = vmatmul.mubr.f32.gmra.mrb[0].mxu0 %v587
          %v918 = vpop.f32.mrb[0].mxu0
          %v919 = vadd.f32 %v472, %v918
          %v920 = vpop.f32.mrb[0].mxu0
          %921 = vmatprep.mubr.f32.mxu0 0.0
          %922 = vmatmul.mubr.f32.gmra.mrb[0].mxu0 %v590
          %v923 = vpop.f32.mrb[0].mxu0
          %v924 = vadd.f32 %v472, %v923
          %v925 = vpop.f32.mrb[0].mxu0
          %926 = vmatprep.mubr.f32.mxu0 0.0
          %927 = vmatmul.mubr.f32.gmra.mrb[0].mxu0 %v593
          %v928 = vpop.f32.mrb[0].mxu0
          %v929 = vadd.f32 %v472, %v928
          %v930 = vpop.f32.mrb[0].mxu0
          %931 = vmatprep.mubr.f32.mxu0 0.0
          %932 = vmatmul.mubr.f32.gmra.mrb[0].mxu0 %v596
          %v933 = vpop.f32.mrb[0].mxu0
          %v934 = vadd.f32 %v472, %v933
          %v935 = vpop.f32.mrb[0].mxu0
          %936 = vmatprep.mubr.f32.mxu0 0.0
          %937 = vmatmul.mubr.f32.gmra.mrb[0].mxu0 %v599
          %v938 = vpop.f32.mrb[0].mxu0
          %v939 = vadd.f32 %v472, %v938
          %v940 = vpop.f32.mrb[0].mxu0
          %941 = vmatprep.mubr.f32.mxu0 0.0
          %942 = vmatmul.mubr.f32.gmra.mrb[0].mxu0 %v602
          %v943 = vpop.f32.mrb[0].mxu0
          %v944 = vadd.f32 %v472, %v943
          %v945 = vpop.f32.mrb[0].mxu0
          %946 = vmatprep.mubr.f32.mxu0 0.0
          %947 = vmatmul.mubr.f32.gmra.mrb[0].mxu0 %v605
          %v948 = vpop.f32.mrb[0].mxu0
          %v949 = vadd.f32 %v472, %v948
          %v950 = vpop.f32.mrb[0].mxu0
          %951 = vmatprep.mubr.f32.mxu0 0.0
          %952 = vmatmul.mubr.f32.gmra.mrb[0].mxu0 %v608
          %v953 = vpop.f32.mrb[0].mxu0
          %v954 = vadd.f32 %v472, %v953
          %v955 = vpop.f32.mrb[0].mxu0
          %956 = vmatprep.mubr.f32.mxu0 0.0
          %957 = vmatmul.mubr.f32.gmra.mrb[0].mxu0 %v611
          %v958 = vpop.f32.mrb[0].mxu0
          %v959 = vadd.f32 %v472, %v958
          %v960 = vpop.f32.mrb[0].mxu0
          %961 = vmatprep.mubr.f32.mxu0 0.0
          %962 = vmatmul.mubr.f32.gmra.mrb[0].mxu0 %v614
          %v963 = vpop.f32.mrb[0].mxu0
          %v964 = vadd.f32 %v472, %v963
          %v965 = vpop.f32.mrb[0].mxu0
          %966 = vmatprep.mubr.f32.mxu0 0.0
          %967 = vmatmul.mubr.f32.gmra.mrb[0].mxu0 %v617
          %v968 = vpop.f32.mrb[0].mxu0
          %v969 = vadd.f32 %v472, %v968
          %v970 = vpop.f32.mrb[0].mxu0
          %971 = vmatprep.mubr.f32.mxu0 0.0
          %972 = vmatmul.mubr.f32.gmra.mrb[0].mxu0 %v620
          %v973 = vpop.f32.mrb[0].mxu0
          %v974 = vadd.f32 %v472, %v973
          %v975 = vpop.f32.mrb[0].mxu0
          %976 = vmatprep.mubr.f32.mxu0 0.0
          %977 = vmatmul.mubr.f32.gmra.mrb[0].mxu0 %v623
          %v978 = vpop.f32.mrb[0].mxu0
          %v979 = vadd.f32 %v472, %v978
          %v980 = vpop.f32.mrb[0].mxu0
          %981 = vmatprep.mubr.f32.mxu0 0.0
          %982 = vmatmul.mubr.f32.gmra.mrb[0].mxu0 %v626
          %v983 = vpop.f32.mrb[0].mxu0
          %v984 = vadd.f32 %v472, %v983
          %v985 = vpop.f32.mrb[0].mxu0
          %986 = vmatprep.mubr.f32.mxu0 0.0
          %987 = vmatmul.mubr.f32.gmra.mrb[0].mxu0 %v629
          %v988 = vpop.f32.mrb[0].mxu0
          %v989 = vadd.f32 %v472, %v988
          %v990 = vpop.f32.mrb[0].mxu0
          %991 = vmatprep.mubr.f32.mxu0 0.0
          %992 = vmatmul.mubr.f32.gmra.mrb[0].mxu0 %v632
          %v993 = vpop.f32.mrb[0].mxu0
          %v994 = vadd.f32 %v472, %v993
          %v995 = vpop.f32.mrb[0].mxu0
          %996 = vmatprep.mubr.f32.mxu0 0.0
          %997 = vmatmul.mubr.f32.gmra.mrb[0].mxu0 %v635
          %v998 = vpop.f32.mrb[0].mxu0
          %v999 = vadd.f32 %v472, %v998
          %v1000 = vpop.f32.mrb[0].mxu0
          %1001 = vmatprep.mubr.f32.mxu0 0.0
          %1002 = vmatmul.mubr.f32.gmra.mrb[0].mxu0 %v638
          %v1003 = vpop.f32.mrb[0].mxu0
          %v1004 = vadd.f32 %v472, %v1003
          %v1005 = vpop.f32.mrb[0].mxu0
          %1006 = vmatprep.mubr.f32.mxu0 0.0
          %1007 = vmatmul.mubr.f32.gmra.mrb[0].mxu0 %v641
          %v1008 = vpop.f32.mrb[0].mxu0
          %v1009 = vadd.f32 %v472, %v1008
          %v1010 = vpop.f32.mrb[0].mxu0
          %1011 = vmatprep.mubr.f32.mxu0 0.0
          %1012 = vmatmul.mubr.f32.gmra.mrb[0].mxu0 %v644
          %v1013 = vpop.f32.mrb[0].mxu0
          %v1014 = vadd.f32 %v472, %v1013
          %v1015 = vpop.f32.mrb[0].mxu0
          %1016 = vmatprep.mubr.f32.mxu0 0.0
          %1017 = vmatmul.mubr.f32.gmra.mrb[0].mxu0 %v647
          %v1018 = vpop.f32.mrb[0].mxu0
          %v1019 = vadd.f32 %v472, %v1018
          %v1020 = vpop.f32.mrb[0].mxu0
          %1021 = vmatprep.mubr.f32.mxu0 0.0
          %1022 = vmatmul.mubr.f32.gmra.mrb[0].mxu0 %v650
          %v1023 = vpop.f32.mrb[0].mxu0
          %v1024 = vadd.f32 %v472, %v1023
          %v1025 = vpop.f32.mrb[0].mxu0
          %1026 = vmatprep.mubr.f32.mxu0 0.0
          %1027 = vmatmul.mubr.f32.gmra.mrb[0].mxu0 %v653
          %v1028 = vpop.f32.mrb[0].mxu0
          %v1029 = vadd.f32 %v472, %v1028
          %v1030 = vpop.f32.mrb[0].mxu0
          %1031 = vmatprep.mubr.f32.mxu0 0.0
          %1032 = vmatmul.mubr.f32.gmra.mrb[0].mxu0 %v656
          %v1033 = vpop.f32.mrb[0].mxu0
          %v1034 = vadd.f32 %v472, %v1033
          %v1035 = vpop.f32.mrb[0].mxu0
          %1036 = vmatprep.mubr.f32.mxu0 0.0
          %1037 = vmatmul.mubr.f32.gmra.mrb[0].mxu0 %v659
          %v1038 = vpop.f32.mrb[0].mxu0
          %v1039 = vadd.f32 %v472, %v1038
          %v1040 = vpop.f32.mrb[0].mxu0
          %1041 = vmatprep.mubr.f32.mxu0 0.0
          %1042 = vmatmul.mubr.f32.gmra.mrb[0].mxu0 %v662
          %v1043 = vpop.f32.mrb[0].mxu0
          %v1044 = vadd.f32 %v472, %v1043
          %v1045 = vpop.f32.mrb[0].mxu0
          %1046 = vmatprep.mubr.f32.mxu0 0.0
          %1047 = vmatmul.mubr.f32.gmra.mrb[0].mxu0 %v665
          %v1048 = vpop.f32.mrb[0].mxu0
          %v1049 = vadd.f32 %v472, %v1048
          %v1050 = vpop.f32.mrb[0].mxu0
          %1051 = vdwg.mxu0
          %v1052 = vmax.f32 %v734, 0.0
          %v1053 = vmax.f32 %v739, 0.0
          %v1054 = vmax.f32 %v744, 0.0
          %v1055 = vmax.f32 %v749, 0.0
          %v1056 = vmax.f32 %v754, 0.0
          %v1057 = vmax.f32 %v759, 0.0
          %v1058 = vmax.f32 %v764, 0.0
          %v1059 = vmax.f32 %v769, 0.0
          %v1060 = vmax.f32 %v774, 0.0
          %v1061 = vmax.f32 %v779, 0.0
          %v1062 = vmax.f32 %v784, 0.0
          %v1063 = vmax.f32 %v789, 0.0
          %v1064 = vmax.f32 %v794, 0.0
          %v1065 = vmax.f32 %v799, 0.0
          %v1066 = vmax.f32 %v804, 0.0
          %v1067 = vmax.f32 %v809, 0.0
          %v1068 = vmax.f32 %v814, 0.0
          %v1069 = vmax.f32 %v819, 0.0
          %v1070 = vmax.f32 %v824, 0.0
          %v1071 = vmax.f32 %v829, 0.0
          %v1072 = vmax.f32 %v834, 0.0
          %v1073 = vmax.f32 %v839, 0.0
          %v1074 = vmax.f32 %v844, 0.0
          %v1075 = vmax.f32 %v849, 0.0
          %v1076 = vmax.f32 %v854, 0.0
          %v1077 = vmax.f32 %v859, 0.0
          %v1078 = vmax.f32 %v864, 0.0
          %v1079 = vmax.f32 %v869, 0.0
          %v1080 = vmax.f32 %v874, 0.0
          %v1081 = vmax.f32 %v879, 0.0
          %v1082 = vmax.f32 %v884, 0.0
          %v1083 = vmax.f32 %v889, 0.0
          %v1084 = vmax.f32 %v894, 0.0
          %v1085 = vmax.f32 %v899, 0.0
          %v1086 = vmax.f32 %v904, 0.0
          %v1087 = vmax.f32 %v909, 0.0
          %v1088 = vmax.f32 %v914, 0.0
          %v1089 = vmax.f32 %v919, 0.0
          %v1090 = vmax.f32 %v924, 0.0
          %v1091 = vmax.f32 %v929, 0.0
          %v1092 = vmax.f32 %v934, 0.0
          %v1093 = vmax.f32 %v939, 0.0
          %v1094 = vmax.f32 %v944, 0.0
          %v1095 = vmax.f32 %v949, 0.0
          %v1096 = vmax.f32 %v954, 0.0
          %v1097 = vmax.f32 %v959, 0.0
          %v1098 = vmax.f32 %v964, 0.0
          %v1099 = vmax.f32 %v969, 0.0
          %v1100 = vmax.f32 %v974, 0.0
          %v1101 = vmax.f32 %v979, 0.0
          %v1102 = vmax.f32 %v984, 0.0
          %v1103 = vmax.f32 %v989, 0.0
          %v1104 = vmax.f32 %v994, 0.0
          %v1105 = vmax.f32 %v999, 0.0
          %v1106 = vmax.f32 %v1004, 0.0
          %v1107 = vmax.f32 %v1009, 0.0
          %v1108 = vmax.f32 %v1014, 0.0
          %v1109 = vmax.f32 %v1019, 0.0
          %v1110 = vmax.f32 %v1024, 0.0
          %v1111 = vmax.f32 %v1029, 0.0
          %v1112 = vmax.f32 %v1034, 0.0
          %v1113 = vmax.f32 %v1039, 0.0
          %v1114 = vmax.f32 %v1044, 0.0
          %v1115 = vmax.f32 %v1049, 0.0
          %v1116 = vld [vmem:[%s4] sm:$0xff]
          %v1117 = vld [vmem:[%s4 + $0x8] sm:$0xff]
          %v1118 = vld [vmem:[%s4 + $0x10] sm:$0xff]
          %v1119 = vld [vmem:[%s4 + $0x18] sm:$0xff]
          %v1120 = vld [vmem:[%s4 + $0x20] sm:$0xff]
          %v1121 = vld [vmem:[%s4 + $0x28] sm:$0xff]
          %v1122 = vld [vmem:[%s4 + $0x30] sm:$0xff]
          %v1123 = vld [vmem:[%s4 + $0x38] sm:$0xff]
          %v1124 = vld [vmem:[%s5] sm:$0x1]
          %v1126 = vlaneseq
          %v1127 = vshrl.u32 %v1126, 7
          %v1128 = vsub.s32 0, %v1127
          %v1129 = vrot.slane %v1124, %v1128
          %vm1131 = vcmask 523264
          %v1133 = vsel %vm1131, %v1052, 0
          %v1136 = vsel %vm1131, %v1053, 0
          %v1139 = vsel %vm1131, %v1054, 0
          %v1142 = vsel %vm1131, %v1055, 0
          %v1145 = vsel %vm1131, %v1056, 0
          %v1148 = vsel %vm1131, %v1057, 0
          %v1151 = vsel %vm1131, %v1058, 0
          %v1154 = vsel %vm1131, %v1059, 0
          %v1157 = vsel %vm1131, %v1060, 0
          %v1160 = vsel %vm1131, %v1061, 0
          %v1163 = vsel %vm1131, %v1062, 0
          %v1166 = vsel %vm1131, %v1063, 0
          %v1169 = vsel %vm1131, %v1064, 0
          %v1172 = vsel %vm1131, %v1065, 0
          %v1175 = vsel %vm1131, %v1066, 0
          %v1178 = vsel %vm1131, %v1067, 0
          %v1181 = vsel %vm1131, %v1068, 0
          %v1184 = vsel %vm1131, %v1069, 0
          %v1187 = vsel %vm1131, %v1070, 0
          %v1190 = vsel %vm1131, %v1071, 0
          %v1193 = vsel %vm1131, %v1072, 0
          %v1196 = vsel %vm1131, %v1073, 0
          %v1199 = vsel %vm1131, %v1074, 0
          %v1202 = vsel %vm1131, %v1075, 0
          %v1205 = vsel %vm1131, %v1076, 0
          %v1208 = vsel %vm1131, %v1077, 0
          %v1211 = vsel %vm1131, %v1078, 0
          %v1214 = vsel %vm1131, %v1079, 0
          %v1217 = vsel %vm1131, %v1080, 0
          %v1220 = vsel %vm1131, %v1081, 0
          %v1223 = vsel %vm1131, %v1082, 0
          %v1226 = vsel %vm1131, %v1083, 0
          %v1229 = vsel %vm1131, %v1084, 0
          %v1232 = vsel %vm1131, %v1085, 0
          %v1235 = vsel %vm1131, %v1086, 0
          %v1238 = vsel %vm1131, %v1087, 0
          %v1241 = vsel %vm1131, %v1088, 0
          %v1244 = vsel %vm1131, %v1089, 0
          %v1247 = vsel %vm1131, %v1090, 0
          %v1250 = vsel %vm1131, %v1091, 0
          %v1253 = vsel %vm1131, %v1092, 0
          %v1256 = vsel %vm1131, %v1093, 0
          %v1259 = vsel %vm1131, %v1094, 0
          %v1262 = vsel %vm1131, %v1095, 0
          %v1265 = vsel %vm1131, %v1096, 0
          %v1268 = vsel %vm1131, %v1097, 0
          %v1271 = vsel %vm1131, %v1098, 0
          %v1274 = vsel %vm1131, %v1099, 0
          %v1277 = vsel %vm1131, %v1100, 0
          %v1280 = vsel %vm1131, %v1101, 0
          %v1283 = vsel %vm1131, %v1102, 0
          %v1286 = vsel %vm1131, %v1103, 0
          %v1289 = vsel %vm1131, %v1104, 0
          %v1292 = vsel %vm1131, %v1105, 0
          %v1295 = vsel %vm1131, %v1106, 0
          %v1298 = vsel %vm1131, %v1107, 0
          %v1301 = vsel %vm1131, %v1108, 0
          %v1304 = vsel %vm1131, %v1109, 0
          %v1307 = vsel %vm1131, %v1110, 0
          %v1310 = vsel %vm1131, %v1111, 0
          %v1313 = vsel %vm1131, %v1112, 0
          %v1316 = vsel %vm1131, %v1113, 0
          %v1319 = vsel %vm1131, %v1114, 0
          %v1322 = vsel %vm1131, %v1115, 0
          %1324 = vmatprep.subr.mxu0 0.0
          %1325 = vmatpush1.msra.mxu0 %v1116
          %1326 = vmatprep.subr.mxu0 0.0
          %1327 = vmatpush1.msra.mxu0 %v1117
          %1328 = vmatprep.subr.mxu0 0.0
          %1329 = vmatpush1.msra.mxu0 %v1118
          %1330 = vmatprep.subr.mxu0 0.0
          %1331 = vmatpush1.msra.mxu0 %v1119
          %1332 = vmatprep.subr.mxu0 0.0
          %1333 = vmatpush1.msra.mxu0 %v1120
          %1334 = vmatprep.subr.mxu0 0.0
          %1335 = vmatpush1.msra.mxu0 %v1121
          %1336 = vmatprep.subr.mxu0 0.0
          %1337 = vmatpush1.msra.mxu0 %v1122
          %1338 = vmatprep.subr.mxu0 0.0
          %1339 = vmatpush1.msra.mxu0 %v1123
          %1340 = vmatprep.subr.mxu0 0.0
          %1341 = vmatpush1.msra.mxu0 0.0
          %1342 = vmatprep.subr.mxu0 0.0
          %1343 = vmatpush1.msra.mxu0 0.0
          %1344 = vmatprep.subr.mxu0 0.0
          %1345 = vmatpush1.msra.mxu0 0.0
          %1346 = vmatprep.subr.mxu0 0.0
          %1347 = vmatpush1.msra.mxu0 0.0
          %1348 = vmatprep.subr.mxu0 0.0
          %1349 = vmatpush1.msra.mxu0 0.0
          %1350 = vmatprep.subr.mxu0 0.0
          %1351 = vmatpush1.msra.mxu0 0.0
          %1352 = vmatprep.subr.mxu0 0.0
          %1353 = vmatpush1.msra.mxu0 0.0
          %1354 = vmatprep.subr.mxu0 0.0
          %1355 = vmatpush1.msra.mxu0 0.0
          %1356 = vmatprep.subr.mxu0 0.0
          %1357 = vmatpush1.msra.mxu0 0.0
          %1358 = vmatprep.subr.mxu0 0.0
          %1359 = vmatpush1.msra.mxu0 0.0
          %1360 = vmatprep.subr.mxu0 0.0
          %1361 = vmatpush1.msra.mxu0 0.0
          %1362 = vmatprep.subr.mxu0 0.0
          %1363 = vmatpush1.msra.mxu0 0.0
          %1364 = vmatprep.subr.mxu0 0.0
          %1365 = vmatpush1.msra.mxu0 0.0
          %1366 = vmatprep.subr.mxu0 0.0
          %1367 = vmatpush1.msra.mxu0 0.0
          %1368 = vmatprep.subr.mxu0 0.0
          %1369 = vmatpush1.msra.mxu0 0.0
          %1370 = vmatprep.subr.mxu0 0.0
          %1371 = vmatpush1.msra.mxu0 0.0
          %1372 = vmatprep.subr.mxu0 0.0
          %1373 = vmatpush1.msra.mxu0 0.0
          %1374 = vmatprep.subr.mxu0 0.0
          %1375 = vmatpush1.msra.mxu0 0.0
          %1376 = vmatprep.subr.mxu0 0.0
          %1377 = vmatpush1.msra.mxu0 0.0
          %1378 = vmatprep.subr.mxu0 0.0
          %1379 = vmatpush1.msra.mxu0 0.0
          %1380 = vmatprep.subr.mxu0 0.0
          %1381 = vmatpush1.msra.mxu0 0.0
          %1382 = vmatprep.subr.mxu0 0.0
          %1383 = vmatpush1.msra.mxu0 0.0
          %1384 = vmatprep.subr.mxu0 0.0
          %1385 = vmatpush1.msra.mxu0 0.0
          %1386 = vmatprep.subr.mxu0 0.0
          %1387 = vmatpush1.msra.mxu0 0.0
          %1388 = vmatprep.mubr.f32.mxu0 0.0
          %1389 = vmatmul.mubr.f32.gmra.mrb[0].mxu0 %v1133
          %v1390 = vpop.f32.mrb[0].mxu0
          %v1391 = vadd.f32 %v1129, %v1390
          %v1392 = vpop.f32.mrb[0].mxu0
          %1393 = vmatprep.mubr.f32.mxu0 0.0
          %1394 = vmatmul.mubr.f32.gmra.mrb[0].mxu0 %v1136
          %v1395 = vpop.f32.mrb[0].mxu0
          %v1396 = vadd.f32 %v1129, %v1395
          %v1397 = vpop.f32.mrb[0].mxu0
          %1398 = vmatprep.mubr.f32.mxu0 0.0
          %1399 = vmatmul.mubr.f32.gmra.mrb[0].mxu0 %v1139
          %v1400 = vpop.f32.mrb[0].mxu0
          %v1401 = vadd.f32 %v1129, %v1400
          %v1402 = vpop.f32.mrb[0].mxu0
          %1403 = vmatprep.mubr.f32.mxu0 0.0
          %1404 = vmatmul.mubr.f32.gmra.mrb[0].mxu0 %v1142
          %v1405 = vpop.f32.mrb[0].mxu0
          %v1406 = vadd.f32 %v1129, %v1405
          %v1407 = vpop.f32.mrb[0].mxu0
          %1408 = vmatprep.mubr.f32.mxu0 0.0
          %1409 = vmatmul.mubr.f32.gmra.mrb[0].mxu0 %v1145
          %v1410 = vpop.f32.mrb[0].mxu0
          %v1411 = vadd.f32 %v1129, %v1410
          %v1412 = vpop.f32.mrb[0].mxu0
          %1413 = vmatprep.mubr.f32.mxu0 0.0
          %1414 = vmatmul.mubr.f32.gmra.mrb[0].mxu0 %v1148
          %v1415 = vpop.f32.mrb[0].mxu0
          %v1416 = vadd.f32 %v1129, %v1415
          %v1417 = vpop.f32.mrb[0].mxu0
          %1418 = vmatprep.mubr.f32.mxu0 0.0
          %1419 = vmatmul.mubr.f32.gmra.mrb[0].mxu0 %v1151
          %v1420 = vpop.f32.mrb[0].mxu0
          %v1421 = vadd.f32 %v1129, %v1420
          %v1422 = vpop.f32.mrb[0].mxu0
          %1423 = vmatprep.mubr.f32.mxu0 0.0
          %1424 = vmatmul.mubr.f32.gmra.mrb[0].mxu0 %v1154
          %v1425 = vpop.f32.mrb[0].mxu0
          %v1426 = vadd.f32 %v1129, %v1425
          %v1427 = vpop.f32.mrb[0].mxu0
          %1428 = vmatprep.mubr.f32.mxu0 0.0
          %1429 = vmatmul.mubr.f32.gmra.mrb[0].mxu0 %v1157
          %v1430 = vpop.f32.mrb[0].mxu0
          %v1431 = vadd.f32 %v1129, %v1430
          %v1432 = vpop.f32.mrb[0].mxu0
          %1433 = vmatprep.mubr.f32.mxu0 0.0
          %1434 = vmatmul.mubr.f32.gmra.mrb[0].mxu0 %v1160
          %v1435 = vpop.f32.mrb[0].mxu0
          %v1436 = vadd.f32 %v1129, %v1435
          %v1437 = vpop.f32.mrb[0].mxu0
          %1438 = vmatprep.mubr.f32.mxu0 0.0
          %1439 = vmatmul.mubr.f32.gmra.mrb[0].mxu0 %v1163
          %v1440 = vpop.f32.mrb[0].mxu0
          %v1441 = vadd.f32 %v1129, %v1440
          %v1442 = vpop.f32.mrb[0].mxu0
          %1443 = vmatprep.mubr.f32.mxu0 0.0
          %1444 = vmatmul.mubr.f32.gmra.mrb[0].mxu0 %v1166
          %v1445 = vpop.f32.mrb[0].mxu0
          %v1446 = vadd.f32 %v1129, %v1445
          %v1447 = vpop.f32.mrb[0].mxu0
          %1448 = vmatprep.mubr.f32.mxu0 0.0
          %1449 = vmatmul.mubr.f32.gmra.mrb[0].mxu0 %v1169
          %v1450 = vpop.f32.mrb[0].mxu0
          %v1451 = vadd.f32 %v1129, %v1450
          %v1452 = vpop.f32.mrb[0].mxu0
          %1453 = vmatprep.mubr.f32.mxu0 0.0
          %1454 = vmatmul.mubr.f32.gmra.mrb[0].mxu0 %v1172
          %v1455 = vpop.f32.mrb[0].mxu0
          %v1456 = vadd.f32 %v1129, %v1455
          %v1457 = vpop.f32.mrb[0].mxu0
          %1458 = vmatprep.mubr.f32.mxu0 0.0
          %1459 = vmatmul.mubr.f32.gmra.mrb[0].mxu0 %v1175
          %v1460 = vpop.f32.mrb[0].mxu0
          %v1461 = vadd.f32 %v1129, %v1460
          %v1462 = vpop.f32.mrb[0].mxu0
          %1463 = vmatprep.mubr.f32.mxu0 0.0
          %1464 = vmatmul.mubr.f32.gmra.mrb[0].mxu0 %v1178
          %v1465 = vpop.f32.mrb[0].mxu0
          %v1466 = vadd.f32 %v1129, %v1465
          %v1467 = vpop.f32.mrb[0].mxu0
          %1468 = vmatprep.mubr.f32.mxu0 0.0
          %1469 = vmatmul.mubr.f32.gmra.mrb[0].mxu0 %v1181
          %v1470 = vpop.f32.mrb[0].mxu0
          %v1471 = vadd.f32 %v1129, %v1470
          %v1472 = vpop.f32.mrb[0].mxu0
          %1473 = vmatprep.mubr.f32.mxu0 0.0
          %1474 = vmatmul.mubr.f32.gmra.mrb[0].mxu0 %v1184
          %v1475 = vpop.f32.mrb[0].mxu0
          %v1476 = vadd.f32 %v1129, %v1475
          %v1477 = vpop.f32.mrb[0].mxu0
          %1478 = vmatprep.mubr.f32.mxu0 0.0
          %1479 = vmatmul.mubr.f32.gmra.mrb[0].mxu0 %v1187
          %v1480 = vpop.f32.mrb[0].mxu0
          %v1481 = vadd.f32 %v1129, %v1480
          %v1482 = vpop.f32.mrb[0].mxu0
          %1483 = vmatprep.mubr.f32.mxu0 0.0
          %1484 = vmatmul.mubr.f32.gmra.mrb[0].mxu0 %v1190
          %v1485 = vpop.f32.mrb[0].mxu0
          %v1486 = vadd.f32 %v1129, %v1485
          %v1487 = vpop.f32.mrb[0].mxu0
          %1488 = vmatprep.mubr.f32.mxu0 0.0
          %1489 = vmatmul.mubr.f32.gmra.mrb[0].mxu0 %v1193
          %v1490 = vpop.f32.mrb[0].mxu0
          %v1491 = vadd.f32 %v1129, %v1490
          %v1492 = vpop.f32.mrb[0].mxu0
          %1493 = vmatprep.mubr.f32.mxu0 0.0
          %1494 = vmatmul.mubr.f32.gmra.mrb[0].mxu0 %v1196
          %v1495 = vpop.f32.mrb[0].mxu0
          %v1496 = vadd.f32 %v1129, %v1495
          %v1497 = vpop.f32.mrb[0].mxu0
          %1498 = vmatprep.mubr.f32.mxu0 0.0
          %1499 = vmatmul.mubr.f32.gmra.mrb[0].mxu0 %v1199
          %v1500 = vpop.f32.mrb[0].mxu0
          %v1501 = vadd.f32 %v1129, %v1500
          %v1502 = vpop.f32.mrb[0].mxu0
          %1503 = vmatprep.mubr.f32.mxu0 0.0
          %1504 = vmatmul.mubr.f32.gmra.mrb[0].mxu0 %v1202
          %v1505 = vpop.f32.mrb[0].mxu0
          %v1506 = vadd.f32 %v1129, %v1505
          %v1507 = vpop.f32.mrb[0].mxu0
          %1508 = vmatprep.mubr.f32.mxu0 0.0
          %1509 = vmatmul.mubr.f32.gmra.mrb[0].mxu0 %v1205
          %v1510 = vpop.f32.mrb[0].mxu0
          %v1511 = vadd.f32 %v1129, %v1510
          %v1512 = vpop.f32.mrb[0].mxu0
          %1513 = vmatprep.mubr.f32.mxu0 0.0
          %1514 = vmatmul.mubr.f32.gmra.mrb[0].mxu0 %v1208
          %v1515 = vpop.f32.mrb[0].mxu0
          %v1516 = vadd.f32 %v1129, %v1515
          %v1517 = vpop.f32.mrb[0].mxu0
          %1518 = vmatprep.mubr.f32.mxu0 0.0
          %1519 = vmatmul.mubr.f32.gmra.mrb[0].mxu0 %v1211
          %v1520 = vpop.f32.mrb[0].mxu0
          %v1521 = vadd.f32 %v1129, %v1520
          %v1522 = vpop.f32.mrb[0].mxu0
          %1523 = vmatprep.mubr.f32.mxu0 0.0
          %1524 = vmatmul.mubr.f32.gmra.mrb[0].mxu0 %v1214
          %v1525 = vpop.f32.mrb[0].mxu0
          %v1526 = vadd.f32 %v1129, %v1525
          %v1527 = vpop.f32.mrb[0].mxu0
          %1528 = vmatprep.mubr.f32.mxu0 0.0
          %1529 = vmatmul.mubr.f32.gmra.mrb[0].mxu0 %v1217
          %v1530 = vpop.f32.mrb[0].mxu0
          %v1531 = vadd.f32 %v1129, %v1530
          %v1532 = vpop.f32.mrb[0].mxu0
          %1533 = vmatprep.mubr.f32.mxu0 0.0
          %1534 = vmatmul.mubr.f32.gmra.mrb[0].mxu0 %v1220
          %v1535 = vpop.f32.mrb[0].mxu0
          %v1536 = vadd.f32 %v1129, %v1535
          %v1537 = vpop.f32.mrb[0].mxu0
          %1538 = vmatprep.mubr.f32.mxu0 0.0
          %1539 = vmatmul.mubr.f32.gmra.mrb[0].mxu0 %v1223
          %v1540 = vpop.f32.mrb[0].mxu0
          %v1541 = vadd.f32 %v1129, %v1540
          %v1542 = vpop.f32.mrb[0].mxu0
          %1543 = vmatprep.mubr.f32.mxu0 0.0
          %1544 = vmatmul.mubr.f32.gmra.mrb[0].mxu0 %v1226
          %v1545 = vpop.f32.mrb[0].mxu0
          %v1546 = vadd.f32 %v1129, %v1545
          %v1547 = vpop.f32.mrb[0].mxu0
          %1548 = vmatprep.mubr.f32.mxu0 0.0
          %1549 = vmatmul.mubr.f32.gmra.mrb[0].mxu0 %v1229
          %v1550 = vpop.f32.mrb[0].mxu0
          %v1551 = vadd.f32 %v1129, %v1550
          %v1552 = vpop.f32.mrb[0].mxu0
          %1553 = vmatprep.mubr.f32.mxu0 0.0
          %1554 = vmatmul.mubr.f32.gmra.mrb[0].mxu0 %v1232
          %v1555 = vpop.f32.mrb[0].mxu0
          %v1556 = vadd.f32 %v1129, %v1555
          %v1557 = vpop.f32.mrb[0].mxu0
          %1558 = vmatprep.mubr.f32.mxu0 0.0
          %1559 = vmatmul.mubr.f32.gmra.mrb[0].mxu0 %v1235
          %v1560 = vpop.f32.mrb[0].mxu0
          %v1561 = vadd.f32 %v1129, %v1560
          %v1562 = vpop.f32.mrb[0].mxu0
          %1563 = vmatprep.mubr.f32.mxu0 0.0
          %1564 = vmatmul.mubr.f32.gmra.mrb[0].mxu0 %v1238
          %v1565 = vpop.f32.mrb[0].mxu0
          %v1566 = vadd.f32 %v1129, %v1565
          %v1567 = vpop.f32.mrb[0].mxu0
          %1568 = vmatprep.mubr.f32.mxu0 0.0
          %1569 = vmatmul.mubr.f32.gmra.mrb[0].mxu0 %v1241
          %v1570 = vpop.f32.mrb[0].mxu0
          %v1571 = vadd.f32 %v1129, %v1570
          %v1572 = vpop.f32.mrb[0].mxu0
          %1573 = vmatprep.mubr.f32.mxu0 0.0
          %1574 = vmatmul.mubr.f32.gmra.mrb[0].mxu0 %v1244
          %v1575 = vpop.f32.mrb[0].mxu0
          %v1576 = vadd.f32 %v1129, %v1575
          %v1577 = vpop.f32.mrb[0].mxu0
          %1578 = vmatprep.mubr.f32.mxu0 0.0
          %1579 = vmatmul.mubr.f32.gmra.mrb[0].mxu0 %v1247
          %v1580 = vpop.f32.mrb[0].mxu0
          %v1581 = vadd.f32 %v1129, %v1580
          %v1582 = vpop.f32.mrb[0].mxu0
          %1583 = vmatprep.mubr.f32.mxu0 0.0
          %1584 = vmatmul.mubr.f32.gmra.mrb[0].mxu0 %v1250
          %v1585 = vpop.f32.mrb[0].mxu0
          %v1586 = vadd.f32 %v1129, %v1585
          %v1587 = vpop.f32.mrb[0].mxu0
          %1588 = vmatprep.mubr.f32.mxu0 0.0
          %1589 = vmatmul.mubr.f32.gmra.mrb[0].mxu0 %v1253
          %v1590 = vpop.f32.mrb[0].mxu0
          %v1591 = vadd.f32 %v1129, %v1590
          %v1592 = vpop.f32.mrb[0].mxu0
          %1593 = vmatprep.mubr.f32.mxu0 0.0
          %1594 = vmatmul.mubr.f32.gmra.mrb[0].mxu0 %v1256
          %v1595 = vpop.f32.mrb[0].mxu0
          %v1596 = vadd.f32 %v1129, %v1595
          %v1597 = vpop.f32.mrb[0].mxu0
          %1598 = vmatprep.mubr.f32.mxu0 0.0
          %1599 = vmatmul.mubr.f32.gmra.mrb[0].mxu0 %v1259
          %v1600 = vpop.f32.mrb[0].mxu0
          %v1601 = vadd.f32 %v1129, %v1600
          %v1602 = vpop.f32.mrb[0].mxu0
          %1603 = vmatprep.mubr.f32.mxu0 0.0
          %1604 = vmatmul.mubr.f32.gmra.mrb[0].mxu0 %v1262
          %v1605 = vpop.f32.mrb[0].mxu0
          %v1606 = vadd.f32 %v1129, %v1605
          %v1607 = vpop.f32.mrb[0].mxu0
          %1608 = vmatprep.mubr.f32.mxu0 0.0
          %1609 = vmatmul.mubr.f32.gmra.mrb[0].mxu0 %v1265
          %v1610 = vpop.f32.mrb[0].mxu0
          %v1611 = vadd.f32 %v1129, %v1610
          %v1612 = vpop.f32.mrb[0].mxu0
          %1613 = vmatprep.mubr.f32.mxu0 0.0
          %1614 = vmatmul.mubr.f32.gmra.mrb[0].mxu0 %v1268
          %v1615 = vpop.f32.mrb[0].mxu0
          %v1616 = vadd.f32 %v1129, %v1615
          %v1617 = vpop.f32.mrb[0].mxu0
          %1618 = vmatprep.mubr.f32.mxu0 0.0
          %1619 = vmatmul.mubr.f32.gmra.mrb[0].mxu0 %v1271
          %v1620 = vpop.f32.mrb[0].mxu0
          %v1621 = vadd.f32 %v1129, %v1620
          %v1622 = vpop.f32.mrb[0].mxu0
          %1623 = vmatprep.mubr.f32.mxu0 0.0
          %1624 = vmatmul.mubr.f32.gmra.mrb[0].mxu0 %v1274
          %v1625 = vpop.f32.mrb[0].mxu0
          %v1626 = vadd.f32 %v1129, %v1625
          %v1627 = vpop.f32.mrb[0].mxu0
          %1628 = vmatprep.mubr.f32.mxu0 0.0
          %1629 = vmatmul.mubr.f32.gmra.mrb[0].mxu0 %v1277
          %v1630 = vpop.f32.mrb[0].mxu0
          %v1631 = vadd.f32 %v1129, %v1630
          %v1632 = vpop.f32.mrb[0].mxu0
          %1633 = vmatprep.mubr.f32.mxu0 0.0
          %1634 = vmatmul.mubr.f32.gmra.mrb[0].mxu0 %v1280
          %v1635 = vpop.f32.mrb[0].mxu0
          %v1636 = vadd.f32 %v1129, %v1635
          %v1637 = vpop.f32.mrb[0].mxu0
          %1638 = vmatprep.mubr.f32.mxu0 0.0
          %1639 = vmatmul.mubr.f32.gmra.mrb[0].mxu0 %v1283
          %v1640 = vpop.f32.mrb[0].mxu0
          %v1641 = vadd.f32 %v1129, %v1640
          %v1642 = vpop.f32.mrb[0].mxu0
          %1643 = vmatprep.mubr.f32.mxu0 0.0
          %1644 = vmatmul.mubr.f32.gmra.mrb[0].mxu0 %v1286
          %v1645 = vpop.f32.mrb[0].mxu0
          %v1646 = vadd.f32 %v1129, %v1645
          %v1647 = vpop.f32.mrb[0].mxu0
          %1648 = vmatprep.mubr.f32.mxu0 0.0
          %1649 = vmatmul.mubr.f32.gmra.mrb[0].mxu0 %v1289
          %v1650 = vpop.f32.mrb[0].mxu0
          %v1651 = vadd.f32 %v1129, %v1650
          %v1652 = vpop.f32.mrb[0].mxu0
          %1653 = vmatprep.mubr.f32.mxu0 0.0
          %1654 = vmatmul.mubr.f32.gmra.mrb[0].mxu0 %v1292
          %v1655 = vpop.f32.mrb[0].mxu0
          %v1656 = vadd.f32 %v1129, %v1655
          %v1657 = vpop.f32.mrb[0].mxu0
          %1658 = vmatprep.mubr.f32.mxu0 0.0
          %1659 = vmatmul.mubr.f32.gmra.mrb[0].mxu0 %v1295
          %v1660 = vpop.f32.mrb[0].mxu0
          %v1661 = vadd.f32 %v1129, %v1660
          %v1662 = vpop.f32.mrb[0].mxu0
          %1663 = vmatprep.mubr.f32.mxu0 0.0
          %1664 = vmatmul.mubr.f32.gmra.mrb[0].mxu0 %v1298
          %v1665 = vpop.f32.mrb[0].mxu0
          %v1666 = vadd.f32 %v1129, %v1665
          %v1667 = vpop.f32.mrb[0].mxu0
          %1668 = vmatprep.mubr.f32.mxu0 0.0
          %1669 = vmatmul.mubr.f32.gmra.mrb[0].mxu0 %v1301
          %v1670 = vpop.f32.mrb[0].mxu0
          %v1671 = vadd.f32 %v1129, %v1670
          %v1672 = vpop.f32.mrb[0].mxu0
          %1673 = vmatprep.mubr.f32.mxu0 0.0
          %1674 = vmatmul.mubr.f32.gmra.mrb[0].mxu0 %v1304
          %v1675 = vpop.f32.mrb[0].mxu0
          %v1676 = vadd.f32 %v1129, %v1675
          %v1677 = vpop.f32.mrb[0].mxu0
          %1678 = vmatprep.mubr.f32.mxu0 0.0
          %1679 = vmatmul.mubr.f32.gmra.mrb[0].mxu0 %v1307
          %v1680 = vpop.f32.mrb[0].mxu0
          %v1681 = vadd.f32 %v1129, %v1680
          %v1682 = vpop.f32.mrb[0].mxu0
          %1683 = vmatprep.mubr.f32.mxu0 0.0
          %1684 = vmatmul.mubr.f32.gmra.mrb[0].mxu0 %v1310
          %v1685 = vpop.f32.mrb[0].mxu0
          %v1686 = vadd.f32 %v1129, %v1685
          %v1687 = vpop.f32.mrb[0].mxu0
          %1688 = vmatprep.mubr.f32.mxu0 0.0
          %1689 = vmatmul.mubr.f32.gmra.mrb[0].mxu0 %v1313
          %v1690 = vpop.f32.mrb[0].mxu0
          %v1691 = vadd.f32 %v1129, %v1690
          %v1692 = vpop.f32.mrb[0].mxu0
          %1693 = vmatprep.mubr.f32.mxu0 0.0
          %1694 = vmatmul.mubr.f32.gmra.mrb[0].mxu0 %v1316
          %v1695 = vpop.f32.mrb[0].mxu0
          %v1696 = vadd.f32 %v1129, %v1695
          %v1697 = vpop.f32.mrb[0].mxu0
          %1698 = vmatprep.mubr.f32.mxu0 0.0
          %1699 = vmatmul.mubr.f32.gmra.mrb[0].mxu0 %v1319
          %v1700 = vpop.f32.mrb[0].mxu0
          %v1701 = vadd.f32 %v1129, %v1700
          %v1702 = vpop.f32.mrb[0].mxu0
          %1703 = vmatprep.mubr.f32.mxu0 0.0
          %1704 = vmatmul.mubr.f32.gmra.mrb[0].mxu0 %v1322
          %v1705 = vpop.f32.mrb[0].mxu0
          %v1706 = vadd.f32 %v1129, %v1705
          %v1707 = vpop.f32.mrb[0].mxu0
          %1708 = vdwg.mxu0
          %v1709 = vpack.c.bf16 %v1396, %v1391
          %v1710 = vpack.c.bf16 %v1406, %v1401
          %v1711 = vpack.c.bf16 %v1416, %v1411
          %v1712 = vpack.c.bf16 %v1426, %v1421
          %v1713 = vpack.c.bf16 %v1436, %v1431
          %v1714 = vpack.c.bf16 %v1446, %v1441
          %v1715 = vpack.c.bf16 %v1456, %v1451
          %v1716 = vpack.c.bf16 %v1466, %v1461
          %v1717 = vpack.c.bf16 %v1476, %v1471
          %v1718 = vpack.c.bf16 %v1486, %v1481
          %v1719 = vpack.c.bf16 %v1496, %v1491
          %v1720 = vpack.c.bf16 %v1506, %v1501
          %v1721 = vpack.c.bf16 %v1516, %v1511
          %v1722 = vpack.c.bf16 %v1526, %v1521
          %v1723 = vpack.c.bf16 %v1536, %v1531
          %v1724 = vpack.c.bf16 %v1546, %v1541
          %v1725 = vpack.c.bf16 %v1556, %v1551
          %v1726 = vpack.c.bf16 %v1566, %v1561
          %v1727 = vpack.c.bf16 %v1576, %v1571
          %v1728 = vpack.c.bf16 %v1586, %v1581
          %v1729 = vpack.c.bf16 %v1596, %v1591
          %v1730 = vpack.c.bf16 %v1606, %v1601
          %v1731 = vpack.c.bf16 %v1616, %v1611
          %v1732 = vpack.c.bf16 %v1626, %v1621
          %v1733 = vpack.c.bf16 %v1636, %v1631
          %v1734 = vpack.c.bf16 %v1646, %v1641
          %v1735 = vpack.c.bf16 %v1656, %v1651
          %v1736 = vpack.c.bf16 %v1666, %v1661
          %v1737 = vpack.c.bf16 %v1676, %v1671
          %v1738 = vpack.c.bf16 %v1686, %v1681
          %v1739 = vpack.c.bf16 %v1696, %v1691
          %v1740 = vpack.c.bf16 %v1706, %v1701
          %s1741 = sshra.s32 %s391, 4
          %s1742 = sand.u32 %s391, 15
          %s1743 = smul.addr %s1741, 8
          %s1744 = scalar_lea.vmem [#allocation2], %s1743
          %1745 = vst [vmem:[%s1744] sm:$0xff] %v1709
          %1746 = vst [vmem:[%s1744 + $0x8] sm:$0xff] %v1710
          %1747 = vst [vmem:[%s1744 + $0x10] sm:$0xff] %v1711
          %1748 = vst [vmem:[%s1744 + $0x18] sm:$0xff] %v1712
          %1749 = vst [vmem:[%s1744 + $0x20] sm:$0xff] %v1713
          %1750 = vst [vmem:[%s1744 + $0x28] sm:$0xff] %v1714
          %1751 = vst [vmem:[%s1744 + $0x30] sm:$0xff] %v1715
          %1752 = vst [vmem:[%s1744 + $0x38] sm:$0xff] %v1716
          %1753 = vst [vmem:[%s1744 + $0x40] sm:$0xff] %v1717
          %1754 = vst [vmem:[%s1744 + $0x48] sm:$0xff] %v1718
          %1755 = vst [vmem:[%s1744 + $0x50] sm:$0xff] %v1719
          %1756 = vst [vmem:[%s1744 + $0x58] sm:$0xff] %v1720
          %1757 = vst [vmem:[%s1744 + $0x60] sm:$0xff] %v1721
          %1758 = vst [vmem:[%s1744 + $0x68] sm:$0xff] %v1722
          %1759 = vst [vmem:[%s1744 + $0x70] sm:$0xff] %v1723
          %1760 = vst [vmem:[%s1744 + $0x78] sm:$0xff] %v1724
          %1761 = vst [vmem:[%s1744 + $0x80] sm:$0xff] %v1725
          %1762 = vst [vmem:[%s1744 + $0x88] sm:$0xff] %v1726
          %1763 = vst [vmem:[%s1744 + $0x90] sm:$0xff] %v1727
          %1764 = vst [vmem:[%s1744 + $0x98] sm:$0xff] %v1728
          %1765 = vst [vmem:[%s1744 + $0xa0] sm:$0xff] %v1729
          %1766 = vst [vmem:[%s1744 + $0xa8] sm:$0xff] %v1730
          %1767 = vst [vmem:[%s1744 + $0xb0] sm:$0xff] %v1731
          %1768 = vst [vmem:[%s1744 + $0xb8] sm:$0xff] %v1732
          %1769 = vst [vmem:[%s1744 + $0xc0] sm:$0xff] %v1733
          %1770 = vst [vmem:[%s1744 + $0xc8] sm:$0xff] %v1734
          %1771 = vst [vmem:[%s1744 + $0xd0] sm:$0xff] %v1735
          %1772 = vst [vmem:[%s1744 + $0xd8] sm:$0xff] %v1736
          %1773 = vst [vmem:[%s1744 + $0xe0] sm:$0xff] %v1737
          %1774 = vst [vmem:[%s1744 + $0xe8] sm:$0xff] %v1738
          %1775 = vst [vmem:[%s1744 + $0xf0] sm:$0xff] %v1739
          %1776 = vst [vmem:[%s1744 + $0xf8] sm:$0xff] %v1740
          %v1778 = vlaneseq
          %v1779 = vshrl.u32 %v1778, 7
          %v1780 = vsub.s32 0, %v1779
          %v1781 = vrot.slane %v392, %v1780
          %v1783 = vmul.f32 %v1391, %v1781
          %v1784 = vmul.f32 %v1396, %v1781
          %v1785 = vmul.f32 %v1401, %v1781
          %v1786 = vmul.f32 %v1406, %v1781
          %v1787 = vmul.f32 %v1411, %v1781
          %v1788 = vmul.f32 %v1416, %v1781
          %v1789 = vmul.f32 %v1421, %v1781
          %v1790 = vmul.f32 %v1426, %v1781
          %v1791 = vmul.f32 %v1431, %v1781
          %v1792 = vmul.f32 %v1436, %v1781
          %v1793 = vmul.f32 %v1441, %v1781
          %v1794 = vmul.f32 %v1446, %v1781
          %v1795 = vmul.f32 %v1451, %v1781
          %v1796 = vmul.f32 %v1456, %v1781
          %v1797 = vmul.f32 %v1461, %v1781
          %v1798 = vmul.f32 %v1466, %v1781
          %v1799 = vmul.f32 %v1471, %v1781
          %v1800 = vmul.f32 %v1476, %v1781
          %v1801 = vmul.f32 %v1481, %v1781
          %v1802 = vmul.f32 %v1486, %v1781
          %v1803 = vmul.f32 %v1491, %v1781
          %v1804 = vmul.f32 %v1496, %v1781
          %v1805 = vmul.f32 %v1501, %v1781
          %v1806 = vmul.f32 %v1506, %v1781
          %v1807 = vmul.f32 %v1511, %v1781
          %v1808 = vmul.f32 %v1516, %v1781
          %v1809 = vmul.f32 %v1521, %v1781
          %v1810 = vmul.f32 %v1526, %v1781
          %v1811 = vmul.f32 %v1531, %v1781
          %v1812 = vmul.f32 %v1536, %v1781
          %v1813 = vmul.f32 %v1541, %v1781
          %v1814 = vmul.f32 %v1546, %v1781
          %v1815 = vmul.f32 %v1551, %v1781
          %v1816 = vmul.f32 %v1556, %v1781
          %v1817 = vmul.f32 %v1561, %v1781
          %v1818 = vmul.f32 %v1566, %v1781
          %v1819 = vmul.f32 %v1571, %v1781
          %v1820 = vmul.f32 %v1576, %v1781
          %v1821 = vmul.f32 %v1581, %v1781
          %v1822 = vmul.f32 %v1586, %v1781
          %v1823 = vmul.f32 %v1591, %v1781
          %v1824 = vmul.f32 %v1596, %v1781
          %v1825 = vmul.f32 %v1601, %v1781
          %v1826 = vmul.f32 %v1606, %v1781
          %v1827 = vmul.f32 %v1611, %v1781
          %v1828 = vmul.f32 %v1616, %v1781
          %v1829 = vmul.f32 %v1621, %v1781
          %v1830 = vmul.f32 %v1626, %v1781
          %v1831 = vmul.f32 %v1631, %v1781
          %v1832 = vmul.f32 %v1636, %v1781
          %v1833 = vmul.f32 %v1641, %v1781
          %v1834 = vmul.f32 %v1646, %v1781
          %v1835 = vmul.f32 %v1651, %v1781
          %v1836 = vmul.f32 %v1656, %v1781
          %v1837 = vmul.f32 %v1661, %v1781
          %v1838 = vmul.f32 %v1666, %v1781
          %v1839 = vmul.f32 %v1671, %v1781
          %v1840 = vmul.f32 %v1676, %v1781
          %v1841 = vmul.f32 %v1681, %v1781
          %v1842 = vmul.f32 %v1686, %v1781
          %v1843 = vmul.f32 %v1691, %v1781
          %v1844 = vmul.f32 %v1696, %v1781
          %v1845 = vmul.f32 %v1701, %v1781
          %v1846 = vmul.f32 %v1706, %v1781
          %1847 = vadd.xlane.f32.xlu0 %v1783
          %v1848 = vpop.xlane.xlu0 %1847
          %1849 = vadd.xlane.f32.xlu0 %v1784
          %v1850 = vpop.xlane.xlu0 %1849
          %1851 = vadd.xlane.f32.xlu0 %v1785
          %v1852 = vpop.xlane.xlu0 %1851
          %1853 = vadd.xlane.f32.xlu0 %v1786
          %v1854 = vpop.xlane.xlu0 %1853
          %1855 = vadd.xlane.f32.xlu0 %v1787
          %v1856 = vpop.xlane.xlu0 %1855
          %1857 = vadd.xlane.f32.xlu0 %v1788
          %v1858 = vpop.xlane.xlu0 %1857
          %1859 = vadd.xlane.f32.xlu0 %v1789
          %v1860 = vpop.xlane.xlu0 %1859
          %1861 = vadd.xlane.f32.xlu0 %v1790
          %v1862 = vpop.xlane.xlu0 %1861
          %1863 = vadd.xlane.f32.xlu0 %v1791
          %v1864 = vpop.xlane.xlu0 %1863
          %1865 = vadd.xlane.f32.xlu0 %v1792
          %v1866 = vpop.xlane.xlu0 %1865
          %1867 = vadd.xlane.f32.xlu0 %v1793
          %v1868 = vpop.xlane.xlu0 %1867
          %1869 = vadd.xlane.f32.xlu0 %v1794
          %v1870 = vpop.xlane.xlu0 %1869
          %1871 = vadd.xlane.f32.xlu0 %v1795
          %v1872 = vpop.xlane.xlu0 %1871
          %1873 = vadd.xlane.f32.xlu0 %v1796
          %v1874 = vpop.xlane.xlu0 %1873
          %1875 = vadd.xlane.f32.xlu0 %v1797
          %v1876 = vpop.xlane.xlu0 %1875
          %1877 = vadd.xlane.f32.xlu0 %v1798
          %v1878 = vpop.xlane.xlu0 %1877
          %1879 = vadd.xlane.f32.xlu0 %v1799
          %v1880 = vpop.xlane.xlu0 %1879
          %1881 = vadd.xlane.f32.xlu0 %v1800
          %v1882 = vpop.xlane.xlu0 %1881
          %1883 = vadd.xlane.f32.xlu0 %v1801
          %v1884 = vpop.xlane.xlu0 %1883
          %1885 = vadd.xlane.f32.xlu0 %v1802
          %v1886 = vpop.xlane.xlu0 %1885
          %1887 = vadd.xlane.f32.xlu0 %v1803
          %v1888 = vpop.xlane.xlu0 %1887
          %1889 = vadd.xlane.f32.xlu0 %v1804
          %v1890 = vpop.xlane.xlu0 %1889
          %1891 = vadd.xlane.f32.xlu0 %v1805
          %v1892 = vpop.xlane.xlu0 %1891
          %1893 = vadd.xlane.f32.xlu0 %v1806
          %v1894 = vpop.xlane.xlu0 %1893
          %1895 = vadd.xlane.f32.xlu0 %v1807
          %v1896 = vpop.xlane.xlu0 %1895
          %1897 = vadd.xlane.f32.xlu0 %v1808
          %v1898 = vpop.xlane.xlu0 %1897
          %1899 = vadd.xlane.f32.xlu0 %v1809
          %v1900 = vpop.xlane.xlu0 %1899
          %1901 = vadd.xlane.f32.xlu0 %v1810
          %v1902 = vpop.xlane.xlu0 %1901
          %1903 = vadd.xlane.f32.xlu0 %v1811
          %v1904 = vpop.xlane.xlu0 %1903
          %1905 = vadd.xlane.f32.xlu0 %v1812
          %v1906 = vpop.xlane.xlu0 %1905
          %1907 = vadd.xlane.f32.xlu0 %v1813
          %v1908 = vpop.xlane.xlu0 %1907
          %1909 = vadd.xlane.f32.xlu0 %v1814
          %v1910 = vpop.xlane.xlu0 %1909
          %1911 = vadd.xlane.f32.xlu0 %v1815
          %v1912 = vpop.xlane.xlu0 %1911
          %1913 = vadd.xlane.f32.xlu0 %v1816
          %v1914 = vpop.xlane.xlu0 %1913
          %1915 = vadd.xlane.f32.xlu0 %v1817
          %v1916 = vpop.xlane.xlu0 %1915
          %1917 = vadd.xlane.f32.xlu0 %v1818
          %v1918 = vpop.xlane.xlu0 %1917
          %1919 = vadd.xlane.f32.xlu0 %v1819
          %v1920 = vpop.xlane.xlu0 %1919
          %1921 = vadd.xlane.f32.xlu0 %v1820
          %v1922 = vpop.xlane.xlu0 %1921
          %1923 = vadd.xlane.f32.xlu0 %v1821
          %v1924 = vpop.xlane.xlu0 %1923
          %1925 = vadd.xlane.f32.xlu0 %v1822
          %v1926 = vpop.xlane.xlu0 %1925
          %1927 = vadd.xlane.f32.xlu0 %v1823
          %v1928 = vpop.xlane.xlu0 %1927
          %1929 = vadd.xlane.f32.xlu0 %v1824
          %v1930 = vpop.xlane.xlu0 %1929
          %1931 = vadd.xlane.f32.xlu0 %v1825
          %v1932 = vpop.xlane.xlu0 %1931
          %1933 = vadd.xlane.f32.xlu0 %v1826
          %v1934 = vpop.xlane.xlu0 %1933
          %1935 = vadd.xlane.f32.xlu0 %v1827
          %v1936 = vpop.xlane.xlu0 %1935
          %1937 = vadd.xlane.f32.xlu0 %v1828
          %v1938 = vpop.xlane.xlu0 %1937
          %1939 = vadd.xlane.f32.xlu0 %v1829
          %v1940 = vpop.xlane.xlu0 %1939
          %1941 = vadd.xlane.f32.xlu0 %v1830
          %v1942 = vpop.xlane.xlu0 %1941
          %1943 = vadd.xlane.f32.xlu0 %v1831
          %v1944 = vpop.xlane.xlu0 %1943
          %1945 = vadd.xlane.f32.xlu0 %v1832
          %v1946 = vpop.xlane.xlu0 %1945
          %1947 = vadd.xlane.f32.xlu0 %v1833
          %v1948 = vpop.xlane.xlu0 %1947
          %1949 = vadd.xlane.f32.xlu0 %v1834
          %v1950 = vpop.xlane.xlu0 %1949
          %1951 = vadd.xlane.f32.xlu0 %v1835
          %v1952 = vpop.xlane.xlu0 %1951
          %1953 = vadd.xlane.f32.xlu0 %v1836
          %v1954 = vpop.xlane.xlu0 %1953
          %1955 = vadd.xlane.f32.xlu0 %v1837
          %v1956 = vpop.xlane.xlu0 %1955
          %1957 = vadd.xlane.f32.xlu0 %v1838
          %v1958 = vpop.xlane.xlu0 %1957
          %1959 = vadd.xlane.f32.xlu0 %v1839
          %v1960 = vpop.xlane.xlu0 %1959
          %1961 = vadd.xlane.f32.xlu0 %v1840
          %v1962 = vpop.xlane.xlu0 %1961
          %1963 = vadd.xlane.f32.xlu0 %v1841
          %v1964 = vpop.xlane.xlu0 %1963
          %1965 = vadd.xlane.f32.xlu0 %v1842
          %v1966 = vpop.xlane.xlu0 %1965
          %1967 = vadd.xlane.f32.xlu0 %v1843
          %v1968 = vpop.xlane.xlu0 %1967
          %1969 = vadd.xlane.f32.xlu0 %v1844
          %v1970 = vpop.xlane.xlu0 %1969
          %1971 = vadd.xlane.f32.xlu0 %v1845
          %v1972 = vpop.xlane.xlu0 %1971
          %1973 = vadd.xlane.f32.xlu0 %v1846
          %v1974 = vpop.xlane.xlu0 %1973
          %v1975 = vstv %s394
          %v1976 = vadd.f32 %v1848, %v1975
          %v1977 = vadd.f32 %v1850, %v1975
          %v1978 = vadd.f32 %v1852, %v1975
          %v1979 = vadd.f32 %v1854, %v1975
          %v1980 = vadd.f32 %v1856, %v1975
          %v1981 = vadd.f32 %v1858, %v1975
          %v1982 = vadd.f32 %v1860, %v1975
          %v1983 = vadd.f32 %v1862, %v1975
          %v1984 = vadd.f32 %v1864, %v1975
          %v1985 = vadd.f32 %v1866, %v1975
          %v1986 = vadd.f32 %v1868, %v1975
          %v1987 = vadd.f32 %v1870, %v1975
          %v1988 = vadd.f32 %v1872, %v1975
          %v1989 = vadd.f32 %v1874, %v1975
          %v1990 = vadd.f32 %v1876, %v1975
          %v1991 = vadd.f32 %v1878, %v1975
          %v1992 = vadd.f32 %v1880, %v1975
          %v1993 = vadd.f32 %v1882, %v1975
          %v1994 = vadd.f32 %v1884, %v1975
          %v1995 = vadd.f32 %v1886, %v1975
          %v1996 = vadd.f32 %v1888, %v1975
          %v1997 = vadd.f32 %v1890, %v1975
          %v1998 = vadd.f32 %v1892, %v1975
          %v1999 = vadd.f32 %v1894, %v1975
          %v2000 = vadd.f32 %v1896, %v1975
          %v2001 = vadd.f32 %v1898, %v1975
          %v2002 = vadd.f32 %v1900, %v1975
          %v2003 = vadd.f32 %v1902, %v1975
          %v2004 = vadd.f32 %v1904, %v1975
          %v2005 = vadd.f32 %v1906, %v1975
          %v2006 = vadd.f32 %v1908, %v1975
          %v2007 = vadd.f32 %v1910, %v1975
          %v2008 = vadd.f32 %v1912, %v1975
          %v2009 = vadd.f32 %v1914, %v1975
          %v2010 = vadd.f32 %v1916, %v1975
          %v2011 = vadd.f32 %v1918, %v1975
          %v2012 = vadd.f32 %v1920, %v1975
          %v2013 = vadd.f32 %v1922, %v1975
          %v2014 = vadd.f32 %v1924, %v1975
          %v2015 = vadd.f32 %v1926, %v1975
          %v2016 = vadd.f32 %v1928, %v1975
          %v2017 = vadd.f32 %v1930, %v1975
          %v2018 = vadd.f32 %v1932, %v1975
          %v2019 = vadd.f32 %v1934, %v1975
          %v2020 = vadd.f32 %v1936, %v1975
          %v2021 = vadd.f32 %v1938, %v1975
          %v2022 = vadd.f32 %v1940, %v1975
          %v2023 = vadd.f32 %v1942, %v1975
          %v2024 = vadd.f32 %v1944, %v1975
          %v2025 = vadd.f32 %v1946, %v1975
          %v2026 = vadd.f32 %v1948, %v1975
          %v2027 = vadd.f32 %v1950, %v1975
          %v2028 = vadd.f32 %v1952, %v1975
          %v2029 = vadd.f32 %v1954, %v1975
          %v2030 = vadd.f32 %v1956, %v1975
          %v2031 = vadd.f32 %v1958, %v1975
          %v2032 = vadd.f32 %v1960, %v1975
          %v2033 = vadd.f32 %v1962, %v1975
          %v2034 = vadd.f32 %v1964, %v1975
          %v2035 = vadd.f32 %v1966, %v1975
          %v2036 = vadd.f32 %v1968, %v1975
          %v2037 = vadd.f32 %v1970, %v1975
          %v2038 = vadd.f32 %v1972, %v1975
          %v2039 = vadd.f32 %v1974, %v1975
          %v2040 = vxor.u32 %v1976, 2147483648
          %v2041 = vxor.u32 %v1977, 2147483648
          %v2042 = vxor.u32 %v1978, 2147483648
          %v2043 = vxor.u32 %v1979, 2147483648
          %v2044 = vxor.u32 %v1980, 2147483648
          %v2045 = vxor.u32 %v1981, 2147483648
          %v2046 = vxor.u32 %v1982, 2147483648
          %v2047 = vxor.u32 %v1983, 2147483648
          %v2048 = vxor.u32 %v1984, 2147483648
          %v2049 = vxor.u32 %v1985, 2147483648
          %v2050 = vxor.u32 %v1986, 2147483648
          %v2051 = vxor.u32 %v1987, 2147483648
          %v2052 = vxor.u32 %v1988, 2147483648
          %v2053 = vxor.u32 %v1989, 2147483648
          %v2054 = vxor.u32 %v1990, 2147483648
          %v2055 = vxor.u32 %v1991, 2147483648
          %v2056 = vxor.u32 %v1992, 2147483648
          %v2057 = vxor.u32 %v1993, 2147483648
          %v2058 = vxor.u32 %v1994, 2147483648
          %v2059 = vxor.u32 %v1995, 2147483648
          %v2060 = vxor.u32 %v1996, 2147483648
          %v2061 = vxor.u32 %v1997, 2147483648
          %v2062 = vxor.u32 %v1998, 2147483648
          %v2063 = vxor.u32 %v1999, 2147483648
          %v2064 = vxor.u32 %v2000, 2147483648
          %v2065 = vxor.u32 %v2001, 2147483648
          %v2066 = vxor.u32 %v2002, 2147483648
          %v2067 = vxor.u32 %v2003, 2147483648
          %v2068 = vxor.u32 %v2004, 2147483648
          %v2069 = vxor.u32 %v2005, 2147483648
          %v2070 = vxor.u32 %v2006, 2147483648
          %v2071 = vxor.u32 %v2007, 2147483648
          %v2072 = vxor.u32 %v2008, 2147483648
          %v2073 = vxor.u32 %v2009, 2147483648
          %v2074 = vxor.u32 %v2010, 2147483648
          %v2075 = vxor.u32 %v2011, 2147483648
          %v2076 = vxor.u32 %v2012, 2147483648
          %v2077 = vxor.u32 %v2013, 2147483648
          %v2078 = vxor.u32 %v2014, 2147483648
          %v2079 = vxor.u32 %v2015, 2147483648
          %v2080 = vxor.u32 %v2016, 2147483648
          %v2081 = vxor.u32 %v2017, 2147483648
          %v2082 = vxor.u32 %v2018, 2147483648
          %v2083 = vxor.u32 %v2019, 2147483648
          %v2084 = vxor.u32 %v2020, 2147483648
          %v2085 = vxor.u32 %v2021, 2147483648
          %v2086 = vxor.u32 %v2022, 2147483648
          %v2087 = vxor.u32 %v2023, 2147483648
          %v2088 = vxor.u32 %v2024, 2147483648
          %v2089 = vxor.u32 %v2025, 2147483648
          %v2090 = vxor.u32 %v2026, 2147483648
          %v2091 = vxor.u32 %v2027, 2147483648
          %v2092 = vxor.u32 %v2028, 2147483648
          %v2093 = vxor.u32 %v2029, 2147483648
          %v2094 = vxor.u32 %v2030, 2147483648
          %v2095 = vxor.u32 %v2031, 2147483648
          %v2096 = vxor.u32 %v2032, 2147483648
          %v2097 = vxor.u32 %v2033, 2147483648
          %v2098 = vxor.u32 %v2034, 2147483648
          %v2099 = vxor.u32 %v2035, 2147483648
          %v2100 = vxor.u32 %v2036, 2147483648
          %v2101 = vxor.u32 %v2037, 2147483648
          %v2102 = vxor.u32 %v2038, 2147483648
          %v2103 = vxor.u32 %v2039, 2147483648
          %v2104 = vmul.f32 %v2040, 1.442695
          %v2105 = vpow.pop %v2104
          %v2106 = vmul.f32 %v2041, 1.442695
          %v2107 = vpow.pop %v2106
          %v2108 = vmul.f32 %v2042, 1.442695
          %v2109 = vpow.pop %v2108
          %v2110 = vmul.f32 %v2043, 1.442695
          %v2111 = vpow.pop %v2110
          %v2112 = vmul.f32 %v2044, 1.442695
          %v2113 = vpow.pop %v2112
          %v2114 = vmul.f32 %v2045, 1.442695
          %v2115 = vpow.pop %v2114
          %v2116 = vmul.f32 %v2046, 1.442695
          %v2117 = vpow.pop %v2116
          %v2118 = vmul.f32 %v2047, 1.442695
          %v2119 = vpow.pop %v2118
          %v2120 = vmul.f32 %v2048, 1.442695
          %v2121 = vpow.pop %v2120
          %v2122 = vmul.f32 %v2049, 1.442695
          %v2123 = vpow.pop %v2122
          %v2124 = vmul.f32 %v2050, 1.442695
          %v2125 = vpow.pop %v2124
          %v2126 = vmul.f32 %v2051, 1.442695
          %v2127 = vpow.pop %v2126
          %v2128 = vmul.f32 %v2052, 1.442695
          %v2129 = vpow.pop %v2128
          %v2130 = vmul.f32 %v2053, 1.442695
          %v2131 = vpow.pop %v2130
          %v2132 = vmul.f32 %v2054, 1.442695
          %v2133 = vpow.pop %v2132
          %v2134 = vmul.f32 %v2055, 1.442695
          %v2135 = vpow.pop %v2134
          %v2136 = vmul.f32 %v2056, 1.442695
          %v2137 = vpow.pop %v2136
          %v2138 = vmul.f32 %v2057, 1.442695
          %v2139 = vpow.pop %v2138
          %v2140 = vmul.f32 %v2058, 1.442695
          %v2141 = vpow.pop %v2140
          %v2142 = vmul.f32 %v2059, 1.442695
          %v2143 = vpow.pop %v2142
          %v2144 = vmul.f32 %v2060, 1.442695
          %v2145 = vpow.pop %v2144
          %v2146 = vmul.f32 %v2061, 1.442695
          %v2147 = vpow.pop %v2146
          %v2148 = vmul.f32 %v2062, 1.442695
          %v2149 = vpow.pop %v2148
          %v2150 = vmul.f32 %v2063, 1.442695
          %v2151 = vpow.pop %v2150
          %v2152 = vmul.f32 %v2064, 1.442695
          %v2153 = vpow.pop %v2152
          %v2154 = vmul.f32 %v2065, 1.442695
          %v2155 = vpow.pop %v2154
          %v2156 = vmul.f32 %v2066, 1.442695
          %v2157 = vpow.pop %v2156
          %v2158 = vmul.f32 %v2067, 1.442695
          %v2159 = vpow.pop %v2158
          %v2160 = vmul.f32 %v2068, 1.442695
          %v2161 = vpow.pop %v2160
          %v2162 = vmul.f32 %v2069, 1.442695
          %v2163 = vpow.pop %v2162
          %v2164 = vmul.f32 %v2070, 1.442695
          %v2165 = vpow.pop %v2164
          %v2166 = vmul.f32 %v2071, 1.442695
          %v2167 = vpow.pop %v2166
          %v2168 = vmul.f32 %v2072, 1.442695
          %v2169 = vpow.pop %v2168
          %v2170 = vmul.f32 %v2073, 1.442695
          %v2171 = vpow.pop %v2170
          %v2172 = vmul.f32 %v2074, 1.442695
          %v2173 = vpow.pop %v2172
          %v2174 = vmul.f32 %v2075, 1.442695
          %v2175 = vpow.pop %v2174
          %v2176 = vmul.f32 %v2076, 1.442695
          %v2177 = vpow.pop %v2176
          %v2178 = vmul.f32 %v2077, 1.442695
          %v2179 = vpow.pop %v2178
          %v2180 = vmul.f32 %v2078, 1.442695
          %v2181 = vpow.pop %v2180
          %v2182 = vmul.f32 %v2079, 1.442695
          %v2183 = vpow.pop %v2182
          %v2184 = vmul.f32 %v2080, 1.442695
          %v2185 = vpow.pop %v2184
          %v2186 = vmul.f32 %v2081, 1.442695
          %v2187 = vpow.pop %v2186
          %v2188 = vmul.f32 %v2082, 1.442695
          %v2189 = vpow.pop %v2188
          %v2190 = vmul.f32 %v2083, 1.442695
          %v2191 = vpow.pop %v2190
          %v2192 = vmul.f32 %v2084, 1.442695
          %v2193 = vpow.pop %v2192
          %v2194 = vmul.f32 %v2085, 1.442695
          %v2195 = vpow.pop %v2194
          %v2196 = vmul.f32 %v2086, 1.442695
          %v2197 = vpow.pop %v2196
          %v2198 = vmul.f32 %v2087, 1.442695
          %v2199 = vpow.pop %v2198
          %v2200 = vmul.f32 %v2088, 1.442695
          %v2201 = vpow.pop %v2200
          %v2202 = vmul.f32 %v2089, 1.442695
          %v2203 = vpow.pop %v2202
          %v2204 = vmul.f32 %v2090, 1.442695
          %v2205 = vpow.pop %v2204
          %v2206 = vmul.f32 %v2091, 1.442695
          %v2207 = vpow.pop %v2206
          %v2208 = vmul.f32 %v2092, 1.442695
          %v2209 = vpow.pop %v2208
          %v2210 = vmul.f32 %v2093, 1.442695
          %v2211 = vpow.pop %v2210
          %v2212 = vmul.f32 %v2094, 1.442695
          %v2213 = vpow.pop %v2212
          %v2214 = vmul.f32 %v2095, 1.442695
          %v2215 = vpow.pop %v2214
          %v2216 = vmul.f32 %v2096, 1.442695
          %v2217 = vpow.pop %v2216
          %v2218 = vmul.f32 %v2097, 1.442695
          %v2219 = vpow.pop %v2218
          %v2220 = vmul.f32 %v2098, 1.442695
          %v2221 = vpow.pop %v2220
          %v2222 = vmul.f32 %v2099, 1.442695
          %v2223 = vpow.pop %v2222
          %v2224 = vmul.f32 %v2100, 1.442695
          %v2225 = vpow.pop %v2224
          %v2226 = vmul.f32 %v2101, 1.442695
          %v2227 = vpow.pop %v2226
          %v2228 = vmul.f32 %v2102, 1.442695
          %v2229 = vpow.pop %v2228
          %v2230 = vmul.f32 %v2103, 1.442695
          %v2231 = vpow.pop %v2230
          %v2232 = vadd.f32 %v2105, 1.0
          %v2233 = vadd.f32 %v2107, 1.0
          %v2234 = vadd.f32 %v2109, 1.0
          %v2235 = vadd.f32 %v2111, 1.0
          %v2236 = vadd.f32 %v2113, 1.0
          %v2237 = vadd.f32 %v2115, 1.0
          %v2238 = vadd.f32 %v2117, 1.0
          %v2239 = vadd.f32 %v2119, 1.0
          %v2240 = vadd.f32 %v2121, 1.0
          %v2241 = vadd.f32 %v2123, 1.0
          %v2242 = vadd.f32 %v2125, 1.0
          %v2243 = vadd.f32 %v2127, 1.0
          %v2244 = vadd.f32 %v2129, 1.0
          %v2245 = vadd.f32 %v2131, 1.0
          %v2246 = vadd.f32 %v2133, 1.0
          %v2247 = vadd.f32 %v2135, 1.0
          %v2248 = vadd.f32 %v2137, 1.0
          %v2249 = vadd.f32 %v2139, 1.0
          %v2250 = vadd.f32 %v2141, 1.0
          %v2251 = vadd.f32 %v2143, 1.0
          %v2252 = vadd.f32 %v2145, 1.0
          %v2253 = vadd.f32 %v2147, 1.0
          %v2254 = vadd.f32 %v2149, 1.0
          %v2255 = vadd.f32 %v2151, 1.0
          %v2256 = vadd.f32 %v2153, 1.0
          %v2257 = vadd.f32 %v2155, 1.0
          %v2258 = vadd.f32 %v2157, 1.0
          %v2259 = vadd.f32 %v2159, 1.0
          %v2260 = vadd.f32 %v2161, 1.0
          %v2261 = vadd.f32 %v2163, 1.0
          %v2262 = vadd.f32 %v2165, 1.0
          %v2263 = vadd.f32 %v2167, 1.0
          %v2264 = vadd.f32 %v2169, 1.0
          %v2265 = vadd.f32 %v2171, 1.0
          %v2266 = vadd.f32 %v2173, 1.0
          %v2267 = vadd.f32 %v2175, 1.0
          %v2268 = vadd.f32 %v2177, 1.0
          %v2269 = vadd.f32 %v2179, 1.0
          %v2270 = vadd.f32 %v2181, 1.0
          %v2271 = vadd.f32 %v2183, 1.0
          %v2272 = vadd.f32 %v2185, 1.0
          %v2273 = vadd.f32 %v2187, 1.0
          %v2274 = vadd.f32 %v2189, 1.0
          %v2275 = vadd.f32 %v2191, 1.0
          %v2276 = vadd.f32 %v2193, 1.0
          %v2277 = vadd.f32 %v2195, 1.0
          %v2278 = vadd.f32 %v2197, 1.0
          %v2279 = vadd.f32 %v2199, 1.0
          %v2280 = vadd.f32 %v2201, 1.0
          %v2281 = vadd.f32 %v2203, 1.0
          %v2282 = vadd.f32 %v2205, 1.0
          %v2283 = vadd.f32 %v2207, 1.0
          %v2284 = vadd.f32 %v2209, 1.0
          %v2285 = vadd.f32 %v2211, 1.0
          %v2286 = vadd.f32 %v2213, 1.0
          %v2287 = vadd.f32 %v2215, 1.0
          %v2288 = vadd.f32 %v2217, 1.0
          %v2289 = vadd.f32 %v2219, 1.0
          %v2290 = vadd.f32 %v2221, 1.0
          %v2291 = vadd.f32 %v2223, 1.0
          %v2292 = vadd.f32 %v2225, 1.0
          %v2293 = vadd.f32 %v2227, 1.0
          %v2294 = vadd.f32 %v2229, 1.0
          %v2295 = vadd.f32 %v2231, 1.0
          %v2296 = vrcp.pop %v2232
          %v2297 = vmul.f32 1.0, %v2296
          %v2298 = vrcp.pop %v2233
          %v2299 = vmul.f32 1.0, %v2298
          %v2300 = vrcp.pop %v2234
          %v2301 = vmul.f32 1.0, %v2300
          %v2302 = vrcp.pop %v2235
          %v2303 = vmul.f32 1.0, %v2302
          %v2304 = vrcp.pop %v2236
          %v2305 = vmul.f32 1.0, %v2304
          %v2306 = vrcp.pop %v2237
          %v2307 = vmul.f32 1.0, %v2306
          %v2308 = vrcp.pop %v2238
          %v2309 = vmul.f32 1.0, %v2308
          %v2310 = vrcp.pop %v2239
          %v2311 = vmul.f32 1.0, %v2310
          %v2312 = vrcp.pop %v2240
          %v2313 = vmul.f32 1.0, %v2312
          %v2314 = vrcp.pop %v2241
          %v2315 = vmul.f32 1.0, %v2314
          %v2316 = vrcp.pop %v2242
          %v2317 = vmul.f32 1.0, %v2316
          %v2318 = vrcp.pop %v2243
          %v2319 = vmul.f32 1.0, %v2318
          %v2320 = vrcp.pop %v2244
          %v2321 = vmul.f32 1.0, %v2320
          %v2322 = vrcp.pop %v2245
          %v2323 = vmul.f32 1.0, %v2322
          %v2324 = vrcp.pop %v2246
          %v2325 = vmul.f32 1.0, %v2324
          %v2326 = vrcp.pop %v2247
          %v2327 = vmul.f32 1.0, %v2326
          %v2328 = vrcp.pop %v2248
          %v2329 = vmul.f32 1.0, %v2328
          %v2330 = vrcp.pop %v2249
          %v2331 = vmul.f32 1.0, %v2330
          %v2332 = vrcp.pop %v2250
          %v2333 = vmul.f32 1.0, %v2332
          %v2334 = vrcp.pop %v2251
          %v2335 = vmul.f32 1.0, %v2334
          %v2336 = vrcp.pop %v2252
          %v2337 = vmul.f32 1.0, %v2336
          %v2338 = vrcp.pop %v2253
          %v2339 = vmul.f32 1.0, %v2338
          %v2340 = vrcp.pop %v2254
          %v2341 = vmul.f32 1.0, %v2340
          %v2342 = vrcp.pop %v2255
          %v2343 = vmul.f32 1.0, %v2342
          %v2344 = vrcp.pop %v2256
          %v2345 = vmul.f32 1.0, %v2344
          %v2346 = vrcp.pop %v2257
          %v2347 = vmul.f32 1.0, %v2346
          %v2348 = vrcp.pop %v2258
          %v2349 = vmul.f32 1.0, %v2348
          %v2350 = vrcp.pop %v2259
          %v2351 = vmul.f32 1.0, %v2350
          %v2352 = vrcp.pop %v2260
          %v2353 = vmul.f32 1.0, %v2352
          %v2354 = vrcp.pop %v2261
          %v2355 = vmul.f32 1.0, %v2354
          %v2356 = vrcp.pop %v2262
          %v2357 = vmul.f32 1.0, %v2356
          %v2358 = vrcp.pop %v2263
          %v2359 = vmul.f32 1.0, %v2358
          %v2360 = vrcp.pop %v2264
          %v2361 = vmul.f32 1.0, %v2360
          %v2362 = vrcp.pop %v2265
          %v2363 = vmul.f32 1.0, %v2362
          %v2364 = vrcp.pop %v2266
          %v2365 = vmul.f32 1.0, %v2364
          %v2366 = vrcp.pop %v2267
          %v2367 = vmul.f32 1.0, %v2366
          %v2368 = vrcp.pop %v2268
          %v2369 = vmul.f32 1.0, %v2368
          %v2370 = vrcp.pop %v2269
          %v2371 = vmul.f32 1.0, %v2370
          %v2372 = vrcp.pop %v2270
          %v2373 = vmul.f32 1.0, %v2372
          %v2374 = vrcp.pop %v2271
          %v2375 = vmul.f32 1.0, %v2374
          %v2376 = vrcp.pop %v2272
          %v2377 = vmul.f32 1.0, %v2376
          %v2378 = vrcp.pop %v2273
          %v2379 = vmul.f32 1.0, %v2378
          %v2380 = vrcp.pop %v2274
          %v2381 = vmul.f32 1.0, %v2380
          %v2382 = vrcp.pop %v2275
          %v2383 = vmul.f32 1.0, %v2382
          %v2384 = vrcp.pop %v2276
          %v2385 = vmul.f32 1.0, %v2384
          %v2386 = vrcp.pop %v2277
          %v2387 = vmul.f32 1.0, %v2386
          %v2388 = vrcp.pop %v2278
          %v2389 = vmul.f32 1.0, %v2388
          %v2390 = vrcp.pop %v2279
          %v2391 = vmul.f32 1.0, %v2390
          %v2392 = vrcp.pop %v2280
          %v2393 = vmul.f32 1.0, %v2392
          %v2394 = vrcp.pop %v2281
          %v2395 = vmul.f32 1.0, %v2394
          %v2396 = vrcp.pop %v2282
          %v2397 = vmul.f32 1.0, %v2396
          %v2398 = vrcp.pop %v2283
          %v2399 = vmul.f32 1.0, %v2398
          %v2400 = vrcp.pop %v2284
          %v2401 = vmul.f32 1.0, %v2400
          %v2402 = vrcp.pop %v2285
          %v2403 = vmul.f32 1.0, %v2402
          %v2404 = vrcp.pop %v2286
          %v2405 = vmul.f32 1.0, %v2404
          %v2406 = vrcp.pop %v2287
          %v2407 = vmul.f32 1.0, %v2406
          %v2408 = vrcp.pop %v2288
          %v2409 = vmul.f32 1.0, %v2408
          %v2410 = vrcp.pop %v2289
          %v2411 = vmul.f32 1.0, %v2410
          %v2412 = vrcp.pop %v2290
          %v2413 = vmul.f32 1.0, %v2412
          %v2414 = vrcp.pop %v2291
          %v2415 = vmul.f32 1.0, %v2414
          %v2416 = vrcp.pop %v2292
          %v2417 = vmul.f32 1.0, %v2416
          %v2418 = vrcp.pop %v2293
          %v2419 = vmul.f32 1.0, %v2418
          %v2420 = vrcp.pop %v2294
          %v2421 = vmul.f32 1.0, %v2420
          %v2422 = vrcp.pop %v2295
          %v2423 = vmul.f32 1.0, %v2422
          %v2424 = vmul.f32 %v2297, %v1391
          %v2425 = vmul.f32 %v2299, %v1396
          %v2426 = vmul.f32 %v2301, %v1401
          %v2427 = vmul.f32 %v2303, %v1406
          %v2428 = vmul.f32 %v2305, %v1411
          %v2429 = vmul.f32 %v2307, %v1416
          %v2430 = vmul.f32 %v2309, %v1421
          %v2431 = vmul.f32 %v2311, %v1426
          %v2432 = vmul.f32 %v2313, %v1431
          %v2433 = vmul.f32 %v2315, %v1436
          %v2434 = vmul.f32 %v2317, %v1441
          %v2435 = vmul.f32 %v2319, %v1446
          %v2436 = vmul.f32 %v2321, %v1451
          %v2437 = vmul.f32 %v2323, %v1456
          %v2438 = vmul.f32 %v2325, %v1461
          %v2439 = vmul.f32 %v2327, %v1466
          %v2440 = vmul.f32 %v2329, %v1471
          %v2441 = vmul.f32 %v2331, %v1476
          %v2442 = vmul.f32 %v2333, %v1481
          %v2443 = vmul.f32 %v2335, %v1486
          %v2444 = vmul.f32 %v2337, %v1491
          %v2445 = vmul.f32 %v2339, %v1496
          %v2446 = vmul.f32 %v2341, %v1501
          %v2447 = vmul.f32 %v2343, %v1506
          %v2448 = vmul.f32 %v2345, %v1511
          %v2449 = vmul.f32 %v2347, %v1516
          %v2450 = vmul.f32 %v2349, %v1521
          %v2451 = vmul.f32 %v2351, %v1526
          %v2452 = vmul.f32 %v2353, %v1531
          %v2453 = vmul.f32 %v2355, %v1536
          %v2454 = vmul.f32 %v2357, %v1541
          %v2455 = vmul.f32 %v2359, %v1546
          %v2456 = vmul.f32 %v2361, %v1551
          %v2457 = vmul.f32 %v2363, %v1556
          %v2458 = vmul.f32 %v2365, %v1561
          %v2459 = vmul.f32 %v2367, %v1566
          %v2460 = vmul.f32 %v2369, %v1571
          %v2461 = vmul.f32 %v2371, %v1576
          %v2462 = vmul.f32 %v2373, %v1581
          %v2463 = vmul.f32 %v2375, %v1586
          %v2464 = vmul.f32 %v2377, %v1591
          %v2465 = vmul.f32 %v2379, %v1596
          %v2466 = vmul.f32 %v2381, %v1601
          %v2467 = vmul.f32 %v2383, %v1606
          %v2468 = vmul.f32 %v2385, %v1611
          %v2469 = vmul.f32 %v2387, %v1616
          %v2470 = vmul.f32 %v2389, %v1621
          %v2471 = vmul.f32 %v2391, %v1626
          %v2472 = vmul.f32 %v2393, %v1631
          %v2473 = vmul.f32 %v2395, %v1636
          %v2474 = vmul.f32 %v2397, %v1641
          %v2475 = vmul.f32 %v2399, %v1646
          %v2476 = vmul.f32 %v2401, %v1651
          %v2477 = vmul.f32 %v2403, %v1656
          %v2478 = vmul.f32 %v2405, %v1661
          %v2479 = vmul.f32 %v2407, %v1666
          %v2480 = vmul.f32 %v2409, %v1671
          %v2481 = vmul.f32 %v2411, %v1676
          %v2482 = vmul.f32 %v2413, %v1681
          %v2483 = vmul.f32 %v2415, %v1686
          %v2484 = vmul.f32 %v2417, %v1691
          %v2485 = vmul.f32 %v2419, %v1696
          %v2486 = vmul.f32 %v2421, %v1701
          %v2487 = vmul.f32 %v2423, %v1706
          %s2488 = scalar_lea.vmem [#allocation7], %s391
          %2489 = vst [vmem:[%s2488] sm:$0xff] %v2424
          %2490 = vst [vmem:[%s2488 + $0x8] sm:$0xff] %v2425
          %2491 = vst [vmem:[%s2488 + $0x10] sm:$0xff] %v2426
          %2492 = vst [vmem:[%s2488 + $0x18] sm:$0xff] %v2427
          %2493 = vst [vmem:[%s2488 + $0x20] sm:$0xff] %v2428
          %2494 = vst [vmem:[%s2488 + $0x28] sm:$0xff] %v2429
          %2495 = vst [vmem:[%s2488 + $0x30] sm:$0xff] %v2430
          %2496 = vst [vmem:[%s2488 + $0x38] sm:$0xff] %v2431
          %2497 = vst [vmem:[%s2488 + $0x40] sm:$0xff] %v2432
          %2498 = vst [vmem:[%s2488 + $0x48] sm:$0xff] %v2433
          %2499 = vst [vmem:[%s2488 + $0x50] sm:$0xff] %v2434
          %2500 = vst [vmem:[%s2488 + $0x58] sm:$0xff] %v2435
          %2501 = vst [vmem:[%s2488 + $0x60] sm:$0xff] %v2436
          %2502 = vst [vmem:[%s2488 + $0x68] sm:$0xff] %v2437
          %2503 = vst [vmem:[%s2488 + $0x70] sm:$0xff] %v2438
          %2504 = vst [vmem:[%s2488 + $0x78] sm:$0xff] %v2439
          %2505 = vst [vmem:[%s2488 + $0x80] sm:$0xff] %v2440
          %2506 = vst [vmem:[%s2488 + $0x88] sm:$0xff] %v2441
          %2507 = vst [vmem:[%s2488 + $0x90] sm:$0xff] %v2442
          %2508 = vst [vmem:[%s2488 + $0x98] sm:$0xff] %v2443
          %2509 = vst [vmem:[%s2488 + $0xa0] sm:$0xff] %v2444
          %2510 = vst [vmem:[%s2488 + $0xa8] sm:$0xff] %v2445
          %2511 = vst [vmem:[%s2488 + $0xb0] sm:$0xff] %v2446
          %2512 = vst [vmem:[%s2488 + $0xb8] sm:$0xff] %v2447
          %2513 = vst [vmem:[%s2488 + $0xc0] sm:$0xff] %v2448
          %2514 = vst [vmem:[%s2488 + $0xc8] sm:$0xff] %v2449
          %2515 = vst [vmem:[%s2488 + $0xd0] sm:$0xff] %v2450
          %2516 = vst [vmem:[%s2488 + $0xd8] sm:$0xff] %v2451
          %2517 = vst [vmem:[%s2488 + $0xe0] sm:$0xff] %v2452
          %2518 = vst [vmem:[%s2488 + $0xe8] sm:$0xff] %v2453
          %2519 = vst [vmem:[%s2488 + $0xf0] sm:$0xff] %v2454
          %2520 = vst [vmem:[%s2488 + $0xf8] sm:$0xff] %v2455
          %2521 = vst [vmem:[%s2488 + $0x100] sm:$0xff] %v2456
          %2522 = vst [vmem:[%s2488 + $0x108] sm:$0xff] %v2457
          %2523 = vst [vmem:[%s2488 + $0x110] sm:$0xff] %v2458
          %2524 = vst [vmem:[%s2488 + $0x118] sm:$0xff] %v2459
          %2525 = vst [vmem:[%s2488 + $0x120] sm:$0xff] %v2460
          %2526 = vst [vmem:[%s2488 + $0x128] sm:$0xff] %v2461
          %2527 = vst [vmem:[%s2488 + $0x130] sm:$0xff] %v2462
          %2528 = vst [vmem:[%s2488 + $0x138] sm:$0xff] %v2463
          %2529 = vst [vmem:[%s2488 + $0x140] sm:$0xff] %v2464
          %2530 = vst [vmem:[%s2488 + $0x148] sm:$0xff] %v2465
          %2531 = vst [vmem:[%s2488 + $0x150] sm:$0xff] %v2466
          %2532 = vst [vmem:[%s2488 + $0x158] sm:$0xff] %v2467
          %2533 = vst [vmem:[%s2488 + $0x160] sm:$0xff] %v2468
          %2534 = vst [vmem:[%s2488 + $0x168] sm:$0xff] %v2469
          %2535 = vst [vmem:[%s2488 + $0x170] sm:$0xff] %v2470
          %2536 = vst [vmem:[%s2488 + $0x178] sm:$0xff] %v2471
          %2537 = vst [vmem:[%s2488 + $0x180] sm:$0xff] %v2472
          %2538 = vst [vmem:[%s2488 + $0x188] sm:$0xff] %v2473
          %2539 = vst [vmem:[%s2488 + $0x190] sm:$0xff] %v2474
          %2540 = vst [vmem:[%s2488 + $0x198] sm:$0xff] %v2475
          %2541 = vst [vmem:[%s2488 + $0x1a0] sm:$0xff] %v2476
          %2542 = vst [vmem:[%s2488 + $0x1a8] sm:$0xff] %v2477
          %2543 = vst [vmem:[%s2488 + $0x1b0] sm:$0xff] %v2478
          %2544 = vst [vmem:[%s2488 + $0x1b8] sm:$0xff] %v2479
          %2545 = vst [vmem:[%s2488 + $0x1c0] sm:$0xff] %v2480
          %2546 = vst [vmem:[%s2488 + $0x1c8] sm:$0xff] %v2481
          %2547 = vst [vmem:[%s2488 + $0x1d0] sm:$0xff] %v2482
          %2548 = vst [vmem:[%s2488 + $0x1d8] sm:$0xff] %v2483
          %2549 = vst [vmem:[%s2488 + $0x1e0] sm:$0xff] %v2484
          %2550 = vst [vmem:[%s2488 + $0x1e8] sm:$0xff] %v2485
          %2551 = vst [vmem:[%s2488 + $0x1f0] sm:$0xff] %v2486
          %2552 = vst [vmem:[%s2488 + $0x1f8] sm:$0xff] %v2487
        $region60: #{tpu_custom_call.1} parent=51 // pred_fallthru
          _
        %p2553 = scmp.gt.s32.totalorder %s29, 0
        // Predicated region
        $region61: #{tpu_custom_call.1} parent=51 // pred_check
          %p2554 = pneg %p2553
        $region62: #{tpu_custom_call.1} parent=51 // pred_check_branch
          %2556 = sbr.rel (%p2554) target = $region64
        $region63: #{tpu_custom_call.1} parent=51 // pred_region
          %s2557 = ssub.s32 %s29, 1
          %p2558 = scmp.lt.s32.totalorder %s2557, 0
          %s2559 = ssub.s32 0, %s2557
          %s2560 = scalar_select %p2558, %s2559, %s2557
          %s2561 = sand.u32 %s2560, 1
          %s2562 = ssub.s32 0, %s2561
          %s2563 = scalar_select %p2558, %s2562, %s2561
          %p2564 = scmp.ne.s32.totalorder %s2563, 0
          %p2565 = scmp.lt.s32.totalorder %s2563, 0
          %p2566 = pnand %p2565, %p2564
          %p2567 = pneg %p2566
          %s2568 = sadd.s32 %s2563, 2
          %s2569 = scalar_select %p2567, %s2568, %s2563
          %s2570 = smul.u32 %s2569, 32
          %s2571 = smul.addr %s2570, 8
          %s2572 = scalar_lea.vmem [#allocation2], %s2571
          %v2573 = vld [vmem:[%s2572] sm:$0xff]
          %v2574 = vld [vmem:[%s2572 + $0x8] sm:$0xff]
          %v2575 = vld [vmem:[%s2572 + $0x10] sm:$0xff]
          %v2576 = vld [vmem:[%s2572 + $0x18] sm:$0xff]
          %v2577 = vld [vmem:[%s2572 + $0x20] sm:$0xff]
          %v2578 = vld [vmem:[%s2572 + $0x28] sm:$0xff]
          %v2579 = vld [vmem:[%s2572 + $0x30] sm:$0xff]
          %v2580 = vld [vmem:[%s2572 + $0x38] sm:$0xff]
          %v2581 = vld [vmem:[%s2572 + $0x40] sm:$0xff]
          %v2582 = vld [vmem:[%s2572 + $0x48] sm:$0xff]
          %v2583 = vld [vmem:[%s2572 + $0x50] sm:$0xff]
          %v2584 = vld [vmem:[%s2572 + $0x58] sm:$0xff]
          %v2585 = vld [vmem:[%s2572 + $0x60] sm:$0xff]
          %v2586 = vld [vmem:[%s2572 + $0x68] sm:$0xff]
          %v2587 = vld [vmem:[%s2572 + $0x70] sm:$0xff]
          %v2588 = vld [vmem:[%s2572 + $0x78] sm:$0xff]
          %v2589 = vld [vmem:[%s2572 + $0x80] sm:$0xff]
          %v2590 = vld [vmem:[%s2572 + $0x88] sm:$0xff]
          %v2591 = vld [vmem:[%s2572 + $0x90] sm:$0xff]
          %v2592 = vld [vmem:[%s2572 + $0x98] sm:$0xff]
          %v2593 = vld [vmem:[%s2572 + $0xa0] sm:$0xff]
          %v2594 = vld [vmem:[%s2572 + $0xa8] sm:$0xff]
          %v2595 = vld [vmem:[%s2572 + $0xb0] sm:$0xff]
          %v2596 = vld [vmem:[%s2572 + $0xb8] sm:$0xff]
          %v2597 = vld [vmem:[%s2572 + $0xc0] sm:$0xff]
          %v2598 = vld [vmem:[%s2572 + $0xc8] sm:$0xff]
          %v2599 = vld [vmem:[%s2572 + $0xd0] sm:$0xff]
          %v2600 = vld [vmem:[%s2572 + $0xd8] sm:$0xff]
          %v2601 = vld [vmem:[%s2572 + $0xe0] sm:$0xff]
          %v2602 = vld [vmem:[%s2572 + $0xe8] sm:$0xff]
          %v2603 = vld [vmem:[%s2572 + $0xf0] sm:$0xff]
          %v2604 = vld [vmem:[%s2572 + $0xf8] sm:$0xff]
          %v2605 = vld [vmem:[%s335] sm:$0xff]
          %v2606 = vld [vmem:[%s335 + $0x8] sm:$0xff]
          %v2607 = vld [vmem:[%s335 + $0x10] sm:$0xff]
          %v2608 = vld [vmem:[%s335 + $0x18] sm:$0xff]
          %v2609 = vld [vmem:[%s335 + $0x20] sm:$0xff]
          %v2610 = vld [vmem:[%s335 + $0x28] sm:$0xff]
          %v2611 = vld [vmem:[%s335 + $0x30] sm:$0xff]
          %v2612 = vld [vmem:[%s335 + $0x38] sm:$0xff]
          %v2613 = vld [vmem:[%s335 + $0x40] sm:$0xff]
          %v2614 = vld [vmem:[%s335 + $0x48] sm:$0xff]
          %v2615 = vld [vmem:[%s335 + $0x50] sm:$0xff]
          %v2616 = vld [vmem:[%s335 + $0x58] sm:$0xff]
          %v2617 = vld [vmem:[%s335 + $0x60] sm:$0xff]
          %v2618 = vld [vmem:[%s335 + $0x68] sm:$0xff]
          %v2619 = vld [vmem:[%s335 + $0x70] sm:$0xff]
          %v2620 = vld [vmem:[%s335 + $0x78] sm:$0xff]
          %v2621 = vld [vmem:[%s335 + $0x80] sm:$0xff]
          %v2622 = vld [vmem:[%s335 + $0x88] sm:$0xff]
          %v2623 = vld [vmem:[%s335 + $0x90] sm:$0xff]
          %v2624 = vld [vmem:[%s335 + $0x98] sm:$0xff]
          %v2625 = vld [vmem:[%s335 + $0xa0] sm:$0xff]
          %v2626 = vld [vmem:[%s335 + $0xa8] sm:$0xff]
          %v2627 = vld [vmem:[%s335 + $0xb0] sm:$0xff]
          %v2628 = vld [vmem:[%s335 + $0xb8] sm:$0xff]
          %v2629 = vld [vmem:[%s335 + $0xc0] sm:$0xff]
          %v2630 = vld [vmem:[%s335 + $0xc8] sm:$0xff]
          %v2631 = vld [vmem:[%s335 + $0xd0] sm:$0xff]
          %v2632 = vld [vmem:[%s335 + $0xd8] sm:$0xff]
          %v2633 = vld [vmem:[%s335 + $0xe0] sm:$0xff]
          %v2634 = vld [vmem:[%s335 + $0xe8] sm:$0xff]
          %v2635 = vld [vmem:[%s335 + $0xf0] sm:$0xff]
          %v2636 = vld [vmem:[%s335 + $0xf8] sm:$0xff]
          %v2637 = vld [vmem:[%s335 + $0x100] sm:$0xff]
          %v2638 = vld [vmem:[%s335 + $0x108] sm:$0xff]
          %v2639 = vld [vmem:[%s335 + $0x110] sm:$0xff]
          %v2640 = vld [vmem:[%s335 + $0x118] sm:$0xff]
          %v2641 = vld [vmem:[%s335 + $0x120] sm:$0xff]
          %v2642 = vld [vmem:[%s335 + $0x128] sm:$0xff]
          %v2643 = vld [vmem:[%s335 + $0x130] sm:$0xff]
          %v2644 = vld [vmem:[%s335 + $0x138] sm:$0xff]
          %v2645 = vld [vmem:[%s335 + $0x140] sm:$0xff]
          %v2646 = vld [vmem:[%s335 + $0x148] sm:$0xff]
          %v2647 = vld [vmem:[%s335 + $0x150] sm:$0xff]
          %v2648 = vld [vmem:[%s335 + $0x158] sm:$0xff]
          %v2649 = vld [vmem:[%s335 + $0x160] sm:$0xff]
          %v2650 = vld [vmem:[%s335 + $0x168] sm:$0xff]
          %v2651 = vld [vmem:[%s335 + $0x170] sm:$0xff]
          %v2652 = vld [vmem:[%s335 + $0x178] sm:$0xff]
          %v2653 = vld [vmem:[%s335 + $0x180] sm:$0xff]
          %v2654 = vld [vmem:[%s335 + $0x188] sm:$0xff]
          %v2655 = vld [vmem:[%s335 + $0x190] sm:$0xff]
          %v2656 = vld [vmem:[%s335 + $0x198] sm:$0xff]
          %v2657 = vld [vmem:[%s335 + $0x1a0] sm:$0xff]
          %v2658 = vld [vmem:[%s335 + $0x1a8] sm:$0xff]
          %v2659 = vld [vmem:[%s335 + $0x1b0] sm:$0xff]
          %v2660 = vld [vmem:[%s335 + $0x1b8] sm:$0xff]
          %v2661 = vld [vmem:[%s335 + $0x1c0] sm:$0xff]
          %v2662 = vld [vmem:[%s335 + $0x1c8] sm:$0xff]
          %v2663 = vld [vmem:[%s335 + $0x1d0] sm:$0xff]
          %v2664 = vld [vmem:[%s335 + $0x1d8] sm:$0xff]
          %v2665 = vld [vmem:[%s335 + $0x1e0] sm:$0xff]
          %v2666 = vld [vmem:[%s335 + $0x1e8] sm:$0xff]
          %v2667 = vld [vmem:[%s335 + $0x1f0] sm:$0xff]
          %v2668 = vld [vmem:[%s335 + $0x1f8] sm:$0xff]
          %v2669 = vld [vmem:[%s335 + $0x200] sm:$0xff]
          %v2670 = vld [vmem:[%s335 + $0x208] sm:$0xff]
          %v2671 = vld [vmem:[%s335 + $0x210] sm:$0xff]
          %v2672 = vld [vmem:[%s335 + $0x218] sm:$0xff]
          %v2673 = vld [vmem:[%s335 + $0x220] sm:$0xff]
          %v2674 = vld [vmem:[%s335 + $0x228] sm:$0xff]
          %v2675 = vld [vmem:[%s335 + $0x230] sm:$0xff]
          %v2676 = vld [vmem:[%s335 + $0x238] sm:$0xff]
          %v2677 = vld [vmem:[%s335 + $0x240] sm:$0xff]
          %v2678 = vld [vmem:[%s335 + $0x248] sm:$0xff]
          %v2679 = vld [vmem:[%s335 + $0x250] sm:$0xff]
          %v2680 = vld [vmem:[%s335 + $0x258] sm:$0xff]
          %v2681 = vld [vmem:[%s335 + $0x260] sm:$0xff]
          %v2682 = vld [vmem:[%s335 + $0x268] sm:$0xff]
          %v2683 = vld [vmem:[%s335 + $0x270] sm:$0xff]
          %v2684 = vld [vmem:[%s335 + $0x278] sm:$0xff]
          %v2685 = vld [vmem:[%s335 + $0x280] sm:$0xff]
          %v2686 = vld [vmem:[%s335 + $0x288] sm:$0xff]
          %v2687 = vld [vmem:[%s335 + $0x290] sm:$0xff]
          %v2688 = vld [vmem:[%s335 + $0x298] sm:$0xff]
          %v2689 = vld [vmem:[%s335 + $0x2a0] sm:$0xff]
          %v2690 = vld [vmem:[%s335 + $0x2a8] sm:$0xff]
          %v2691 = vld [vmem:[%s335 + $0x2b0] sm:$0xff]
          %v2692 = vld [vmem:[%s335 + $0x2b8] sm:$0xff]
          %v2693 = vld [vmem:[%s335 + $0x2c0] sm:$0xff]
          %v2694 = vld [vmem:[%s335 + $0x2c8] sm:$0xff]
          %v2695 = vld [vmem:[%s335 + $0x2d0] sm:$0xff]
          %v2696 = vld [vmem:[%s335 + $0x2d8] sm:$0xff]
          %v2697 = vld [vmem:[%s335 + $0x2e0] sm:$0xff]
          %v2698 = vld [vmem:[%s335 + $0x2e8] sm:$0xff]
          %v2699 = vld [vmem:[%s335 + $0x2f0] sm:$0xff]
          %v2700 = vld [vmem:[%s335 + $0x2f8] sm:$0xff]
          %v2701 = vld [vmem:[%s335 + $0x300] sm:$0xff]
          %v2702 = vld [vmem:[%s335 + $0x308] sm:$0xff]
          %v2703 = vld [vmem:[%s335 + $0x310] sm:$0xff]
          %v2704 = vld [vmem:[%s335 + $0x318] sm:$0xff]
          %v2705 = vld [vmem:[%s335 + $0x320] sm:$0xff]
          %v2706 = vld [vmem:[%s335 + $0x328] sm:$0xff]
          %v2707 = vld [vmem:[%s335 + $0x330] sm:$0xff]
          %v2708 = vld [vmem:[%s335 + $0x338] sm:$0xff]
          %v2709 = vld [vmem:[%s335 + $0x340] sm:$0xff]
          %v2710 = vld [vmem:[%s335 + $0x348] sm:$0xff]
          %v2711 = vld [vmem:[%s335 + $0x350] sm:$0xff]
          %v2712 = vld [vmem:[%s335 + $0x358] sm:$0xff]
          %v2713 = vld [vmem:[%s335 + $0x360] sm:$0xff]
          %v2714 = vld [vmem:[%s335 + $0x368] sm:$0xff]
          %v2715 = vld [vmem:[%s335 + $0x370] sm:$0xff]
          %v2716 = vld [vmem:[%s335 + $0x378] sm:$0xff]
          %v2717 = vld [vmem:[%s335 + $0x380] sm:$0xff]
          %v2718 = vld [vmem:[%s335 + $0x388] sm:$0xff]
          %v2719 = vld [vmem:[%s335 + $0x390] sm:$0xff]
          %v2720 = vld [vmem:[%s335 + $0x398] sm:$0xff]
          %v2721 = vld [vmem:[%s335 + $0x3a0] sm:$0xff]
          %v2722 = vld [vmem:[%s335 + $0x3a8] sm:$0xff]
          %v2723 = vld [vmem:[%s335 + $0x3b0] sm:$0xff]
          %v2724 = vld [vmem:[%s335 + $0x3b8] sm:$0xff]
          %v2725 = vld [vmem:[%s335 + $0x3c0] sm:$0xff]
          %v2726 = vld [vmem:[%s335 + $0x3c8] sm:$0xff]
          %v2727 = vld [vmem:[%s335 + $0x3d0] sm:$0xff]
          %v2728 = vld [vmem:[%s335 + $0x3d8] sm:$0xff]
          %v2729 = vld [vmem:[%s335 + $0x3e0] sm:$0xff]
          %v2730 = vld [vmem:[%s335 + $0x3e8] sm:$0xff]
          %v2731 = vld [vmem:[%s335 + $0x3f0] sm:$0xff]
          %v2732 = vld [vmem:[%s335 + $0x3f8] sm:$0xff]
          %v2861 = vunpack.c.l.b16 %v2605
          %v2862 = vunpack.c.h.b16 %v2605
          %v2863 = vunpack.c.l.b16 %v2606
          %v2864 = vunpack.c.h.b16 %v2606
          %v2865 = vunpack.c.l.b16 %v2607
          %v2866 = vunpack.c.h.b16 %v2607
          %v2867 = vunpack.c.l.b16 %v2608
          %v2868 = vunpack.c.h.b16 %v2608
          %v2869 = vunpack.c.l.b16 %v2609
          %v2870 = vunpack.c.h.b16 %v2609
          %v2871 = vunpack.c.l.b16 %v2610
          %v2872 = vunpack.c.h.b16 %v2610
          %v2873 = vunpack.c.l.b16 %v2611
          %v2874 = vunpack.c.h.b16 %v2611
          %v2875 = vunpack.c.l.b16 %v2612
          %v2876 = vunpack.c.h.b16 %v2612
          %v2877 = vunpack.c.l.b16 %v2613
          %v2878 = vunpack.c.h.b16 %v2613
          %v2879 = vunpack.c.l.b16 %v2614
          %v2880 = vunpack.c.h.b16 %v2614
          %v2881 = vunpack.c.l.b16 %v2615
          %v2882 = vunpack.c.h.b16 %v2615
          %v2883 = vunpack.c.l.b16 %v2616
          %v2884 = vunpack.c.h.b16 %v2616
          %v2885 = vunpack.c.l.b16 %v2617
          %v2886 = vunpack.c.h.b16 %v2617
          %v2887 = vunpack.c.l.b16 %v2618
          %v2888 = vunpack.c.h.b16 %v2618
          %v2889 = vunpack.c.l.b16 %v2619
          %v2890 = vunpack.c.h.b16 %v2619
          %v2891 = vunpack.c.l.b16 %v2620
          %v2892 = vunpack.c.h.b16 %v2620
          %v2893 = vunpack.c.l.b16 %v2621
          %v2894 = vunpack.c.h.b16 %v2621
          %v2895 = vunpack.c.l.b16 %v2622
          %v2896 = vunpack.c.h.b16 %v2622
          %v2897 = vunpack.c.l.b16 %v2623
          %v2898 = vunpack.c.h.b16 %v2623
          %v2899 = vunpack.c.l.b16 %v2624
          %v2900 = vunpack.c.h.b16 %v2624
          %v2901 = vunpack.c.l.b16 %v2625
          %v2902 = vunpack.c.h.b16 %v2625
          %v2903 = vunpack.c.l.b16 %v2626
          %v2904 = vunpack.c.h.b16 %v2626
          %v2905 = vunpack.c.l.b16 %v2627
          %v2906 = vunpack.c.h.b16 %v2627
          %v2907 = vunpack.c.l.b16 %v2628
          %v2908 = vunpack.c.h.b16 %v2628
          %v2909 = vunpack.c.l.b16 %v2629
          %v2910 = vunpack.c.h.b16 %v2629
          %v2911 = vunpack.c.l.b16 %v2630
          %v2912 = vunpack.c.h.b16 %v2630
          %v2913 = vunpack.c.l.b16 %v2631
          %v2914 = vunpack.c.h.b16 %v2631
          %v2915 = vunpack.c.l.b16 %v2632
          %v2916 = vunpack.c.h.b16 %v2632
          %v2917 = vunpack.c.l.b16 %v2633
          %v2918 = vunpack.c.h.b16 %v2633
          %v2919 = vunpack.c.l.b16 %v2634
          %v2920 = vunpack.c.h.b16 %v2634
          %v2921 = vunpack.c.l.b16 %v2635
          %v2922 = vunpack.c.h.b16 %v2635
          %v2923 = vunpack.c.l.b16 %v2636
          %v2924 = vunpack.c.h.b16 %v2636
          %v2925 = vunpack.c.l.b16 %v2637
          %v2926 = vunpack.c.h.b16 %v2637
          %v2927 = vunpack.c.l.b16 %v2638
          %v2928 = vunpack.c.h.b16 %v2638
          %v2929 = vunpack.c.l.b16 %v2639
          %v2930 = vunpack.c.h.b16 %v2639
          %v2931 = vunpack.c.l.b16 %v2640
          %v2932 = vunpack.c.h.b16 %v2640
          %v2933 = vunpack.c.l.b16 %v2641
          %v2934 = vunpack.c.h.b16 %v2641
          %v2935 = vunpack.c.l.b16 %v2642
          %v2936 = vunpack.c.h.b16 %v2642
          %v2937 = vunpack.c.l.b16 %v2643
          %v2938 = vunpack.c.h.b16 %v2643
          %v2939 = vunpack.c.l.b16 %v2644
          %v2940 = vunpack.c.h.b16 %v2644
          %v2941 = vunpack.c.l.b16 %v2645
          %v2942 = vunpack.c.h.b16 %v2645
          %v2943 = vunpack.c.l.b16 %v2646
          %v2944 = vunpack.c.h.b16 %v2646
          %v2945 = vunpack.c.l.b16 %v2647
          %v2946 = vunpack.c.h.b16 %v2647
          %v2947 = vunpack.c.l.b16 %v2648
          %v2948 = vunpack.c.h.b16 %v2648
          %v2949 = vunpack.c.l.b16 %v2649
          %v2950 = vunpack.c.h.b16 %v2649
          %v2951 = vunpack.c.l.b16 %v2650
          %v2952 = vunpack.c.h.b16 %v2650
          %v2953 = vunpack.c.l.b16 %v2651
          %v2954 = vunpack.c.h.b16 %v2651
          %v2955 = vunpack.c.l.b16 %v2652
          %v2956 = vunpack.c.h.b16 %v2652
          %v2957 = vunpack.c.l.b16 %v2653
          %v2958 = vunpack.c.h.b16 %v2653
          %v2959 = vunpack.c.l.b16 %v2654
          %v2960 = vunpack.c.h.b16 %v2654
          %v2961 = vunpack.c.l.b16 %v2655
          %v2962 = vunpack.c.h.b16 %v2655
          %v2963 = vunpack.c.l.b16 %v2656
          %v2964 = vunpack.c.h.b16 %v2656
          %v2965 = vunpack.c.l.b16 %v2657
          %v2966 = vunpack.c.h.b16 %v2657
          %v2967 = vunpack.c.l.b16 %v2658
          %v2968 = vunpack.c.h.b16 %v2658
          %v2969 = vunpack.c.l.b16 %v2659
          %v2970 = vunpack.c.h.b16 %v2659
          %v2971 = vunpack.c.l.b16 %v2660
          %v2972 = vunpack.c.h.b16 %v2660
          %v2973 = vunpack.c.l.b16 %v2661
          %v2974 = vunpack.c.h.b16 %v2661
          %v2975 = vunpack.c.l.b16 %v2662
          %v2976 = vunpack.c.h.b16 %v2662
          %v2977 = vunpack.c.l.b16 %v2663
          %v2978 = vunpack.c.h.b16 %v2663
          %v2979 = vunpack.c.l.b16 %v2664
          %v2980 = vunpack.c.h.b16 %v2664
          %v2981 = vunpack.c.l.b16 %v2665
          %v2982 = vunpack.c.h.b16 %v2665
          %v2983 = vunpack.c.l.b16 %v2666
          %v2984 = vunpack.c.h.b16 %v2666
          %v2985 = vunpack.c.l.b16 %v2667
          %v2986 = vunpack.c.h.b16 %v2667
          %v2987 = vunpack.c.l.b16 %v2668
          %v2988 = vunpack.c.h.b16 %v2668
          %v2989 = vunpack.c.l.b16 %v2669
          %v2990 = vunpack.c.h.b16 %v2669
          %v2991 = vunpack.c.l.b16 %v2670
          %v2992 = vunpack.c.h.b16 %v2670
          %v2993 = vunpack.c.l.b16 %v2671
          %v2994 = vunpack.c.h.b16 %v2671
          %v2995 = vunpack.c.l.b16 %v2672
          %v2996 = vunpack.c.h.b16 %v2672
          %v2997 = vunpack.c.l.b16 %v2673
          %v2998 = vunpack.c.h.b16 %v2673
          %v2999 = vunpack.c.l.b16 %v2674
          %v3000 = vunpack.c.h.b16 %v2674
          %v3001 = vunpack.c.l.b16 %v2675
          %v3002 = vunpack.c.h.b16 %v2675
          %v3003 = vunpack.c.l.b16 %v2676
          %v3004 = vunpack.c.h.b16 %v2676
          %v3005 = vunpack.c.l.b16 %v2677
          %v3006 = vunpack.c.h.b16 %v2677
          %v3007 = vunpack.c.l.b16 %v2678
          %v3008 = vunpack.c.h.b16 %v2678
          %v3009 = vunpack.c.l.b16 %v2679
          %v3010 = vunpack.c.h.b16 %v2679
          %v3011 = vunpack.c.l.b16 %v2680
          %v3012 = vunpack.c.h.b16 %v2680
          %v3013 = vunpack.c.l.b16 %v2681
          %v3014 = vunpack.c.h.b16 %v2681
          %v3015 = vunpack.c.l.b16 %v2682
          %v3016 = vunpack.c.h.b16 %v2682
          %v3017 = vunpack.c.l.b16 %v2683
          %v3018 = vunpack.c.h.b16 %v2683
          %v3019 = vunpack.c.l.b16 %v2684
          %v3020 = vunpack.c.h.b16 %v2684
          %v3021 = vunpack.c.l.b16 %v2685
          %v3022 = vunpack.c.h.b16 %v2685
          %v3023 = vunpack.c.l.b16 %v2686
          %v3024 = vunpack.c.h.b16 %v2686
          %v3025 = vunpack.c.l.b16 %v2687
          %v3026 = vunpack.c.h.b16 %v2687
          %v3027 = vunpack.c.l.b16 %v2688
          %v3028 = vunpack.c.h.b16 %v2688
          %v3029 = vunpack.c.l.b16 %v2689
          %v3030 = vunpack.c.h.b16 %v2689
          %v3031 = vunpack.c.l.b16 %v2690
          %v3032 = vunpack.c.h.b16 %v2690
          %v3033 = vunpack.c.l.b16 %v2691
          %v3034 = vunpack.c.h.b16 %v2691
          %v3035 = vunpack.c.l.b16 %v2692
          %v3036 = vunpack.c.h.b16 %v2692
          %v3037 = vunpack.c.l.b16 %v2693
          %v3038 = vunpack.c.h.b16 %v2693
          %v3039 = vunpack.c.l.b16 %v2694
          %v3040 = vunpack.c.h.b16 %v2694
          %v3041 = vunpack.c.l.b16 %v2695
          %v3042 = vunpack.c.h.b16 %v2695
          %v3043 = vunpack.c.l.b16 %v2696
          %v3044 = vunpack.c.h.b16 %v2696
          %v3045 = vunpack.c.l.b16 %v2697
          %v3046 = vunpack.c.h.b16 %v2697
          %v3047 = vunpack.c.l.b16 %v2698
          %v3048 = vunpack.c.h.b16 %v2698
          %v3049 = vunpack.c.l.b16 %v2699
          %v3050 = vunpack.c.h.b16 %v2699
          %v3051 = vunpack.c.l.b16 %v2700
          %v3052 = vunpack.c.h.b16 %v2700
          %v3053 = vunpack.c.l.b16 %v2701
          %v3054 = vunpack.c.h.b16 %v2701
          %v3055 = vunpack.c.l.b16 %v2702
          %v3056 = vunpack.c.h.b16 %v2702
          %v3057 = vunpack.c.l.b16 %v2703
          %v3058 = vunpack.c.h.b16 %v2703
          %v3059 = vunpack.c.l.b16 %v2704
          %v3060 = vunpack.c.h.b16 %v2704
          %v3061 = vunpack.c.l.b16 %v2705
          %v3062 = vunpack.c.h.b16 %v2705
          %v3063 = vunpack.c.l.b16 %v2706
          %v3064 = vunpack.c.h.b16 %v2706
          %v3065 = vunpack.c.l.b16 %v2707
          %v3066 = vunpack.c.h.b16 %v2707
          %v3067 = vunpack.c.l.b16 %v2708
          %v3068 = vunpack.c.h.b16 %v2708
          %v3069 = vunpack.c.l.b16 %v2709
          %v3070 = vunpack.c.h.b16 %v2709
          %v3071 = vunpack.c.l.b16 %v2710
          %v3072 = vunpack.c.h.b16 %v2710
          %v3073 = vunpack.c.l.b16 %v2711
          %v3074 = vunpack.c.h.b16 %v2711
          %v3075 = vunpack.c.l.b16 %v2712
          %v3076 = vunpack.c.h.b16 %v2712
          %v3077 = vunpack.c.l.b16 %v2713
          %v3078 = vunpack.c.h.b16 %v2713
          %v3079 = vunpack.c.l.b16 %v2714
          %v3080 = vunpack.c.h.b16 %v2714
          %v3081 = vunpack.c.l.b16 %v2715
          %v3082 = vunpack.c.h.b16 %v2715
          %v3083 = vunpack.c.l.b16 %v2716
          %v3084 = vunpack.c.h.b16 %v2716
          %v3085 = vunpack.c.l.b16 %v2717
          %v3086 = vunpack.c.h.b16 %v2717
          %v3087 = vunpack.c.l.b16 %v2718
          %v3088 = vunpack.c.h.b16 %v2718
          %v3089 = vunpack.c.l.b16 %v2719
          %v3090 = vunpack.c.h.b16 %v2719
          %v3091 = vunpack.c.l.b16 %v2720
          %v3092 = vunpack.c.h.b16 %v2720
          %v3093 = vunpack.c.l.b16 %v2721
          %v3094 = vunpack.c.h.b16 %v2721
          %v3095 = vunpack.c.l.b16 %v2722
          %v3096 = vunpack.c.h.b16 %v2722
          %v3097 = vunpack.c.l.b16 %v2723
          %v3098 = vunpack.c.h.b16 %v2723
          %v3099 = vunpack.c.l.b16 %v2724
          %v3100 = vunpack.c.h.b16 %v2724
          %v3101 = vunpack.c.l.b16 %v2725
          %v3102 = vunpack.c.h.b16 %v2725
          %v3103 = vunpack.c.l.b16 %v2726
          %v3104 = vunpack.c.h.b16 %v2726
          %v3105 = vunpack.c.l.b16 %v2727
          %v3106 = vunpack.c.h.b16 %v2727
          %v3107 = vunpack.c.l.b16 %v2728
          %v3108 = vunpack.c.h.b16 %v2728
          %v3109 = vunpack.c.l.b16 %v2729
          %v3110 = vunpack.c.h.b16 %v2729
          %v3111 = vunpack.c.l.b16 %v2730
          %v3112 = vunpack.c.h.b16 %v2730
          %v3113 = vunpack.c.l.b16 %v2731
          %v3114 = vunpack.c.h.b16 %v2731
          %v3115 = vunpack.c.l.b16 %v2732
          %v3116 = vunpack.c.h.b16 %v2732
          %v3117 = vpack.c.b16 %v2865, %v2861
          %v3118 = vpack.c.b16 %v2866, %v2862
          %v3119 = vpack.c.b16 %v2867, %v2863
          %v3120 = vpack.c.b16 %v2868, %v2864
          %v3121 = vpack.c.b16 %v2873, %v2869
          %v3122 = vpack.c.b16 %v2874, %v2870
          %v3123 = vpack.c.b16 %v2875, %v2871
          %v3124 = vpack.c.b16 %v2876, %v2872
          %v3125 = vpack.c.b16 %v2881, %v2877
          %v3126 = vpack.c.b16 %v2882, %v2878
          %v3127 = vpack.c.b16 %v2883, %v2879
          %v3128 = vpack.c.b16 %v2884, %v2880
          %v3129 = vpack.c.b16 %v2889, %v2885
          %v3130 = vpack.c.b16 %v2890, %v2886
          %v3131 = vpack.c.b16 %v2891, %v2887
          %v3132 = vpack.c.b16 %v2892, %v2888
          %v3133 = vpack.c.b16 %v2897, %v2893
          %v3134 = vpack.c.b16 %v2898, %v2894
          %v3135 = vpack.c.b16 %v2899, %v2895
          %v3136 = vpack.c.b16 %v2900, %v2896
          %v3137 = vpack.c.b16 %v2905, %v2901
          %v3138 = vpack.c.b16 %v2906, %v2902
          %v3139 = vpack.c.b16 %v2907, %v2903
          %v3140 = vpack.c.b16 %v2908, %v2904
          %v3141 = vpack.c.b16 %v2913, %v2909
          %v3142 = vpack.c.b16 %v2914, %v2910
          %v3143 = vpack.c.b16 %v2915, %v2911
          %v3144 = vpack.c.b16 %v2916, %v2912
          %v3145 = vpack.c.b16 %v2921, %v2917
          %v3146 = vpack.c.b16 %v2922, %v2918
          %v3147 = vpack.c.b16 %v2923, %v2919
          %v3148 = vpack.c.b16 %v2924, %v2920
          %v3149 = vpack.c.b16 %v2929, %v2925
          %v3150 = vpack.c.b16 %v2930, %v2926
          %v3151 = vpack.c.b16 %v2931, %v2927
          %v3152 = vpack.c.b16 %v2932, %v2928
          %v3153 = vpack.c.b16 %v2937, %v2933
          %v3154 = vpack.c.b16 %v2938, %v2934
          %v3155 = vpack.c.b16 %v2939, %v2935
          %v3156 = vpack.c.b16 %v2940, %v2936
          %v3157 = vpack.c.b16 %v2945, %v2941
          %v3158 = vpack.c.b16 %v2946, %v2942
          %v3159 = vpack.c.b16 %v2947, %v2943
          %v3160 = vpack.c.b16 %v2948, %v2944
          %v3161 = vpack.c.b16 %v2953, %v2949
          %v3162 = vpack.c.b16 %v2954, %v2950
          %v3163 = vpack.c.b16 %v2955, %v2951
          %v3164 = vpack.c.b16 %v2956, %v2952
          %v3165 = vpack.c.b16 %v2961, %v2957
          %v3166 = vpack.c.b16 %v2962, %v2958
          %v3167 = vpack.c.b16 %v2963, %v2959
          %v3168 = vpack.c.b16 %v2964, %v2960
          %v3169 = vpack.c.b16 %v2969, %v2965
          %v3170 = vpack.c.b16 %v2970, %v2966
          %v3171 = vpack.c.b16 %v2971, %v2967
          %v3172 = vpack.c.b16 %v2972, %v2968
          %v3173 = vpack.c.b16 %v2977, %v2973
          %v3174 = vpack.c.b16 %v2978, %v2974
          %v3175 = vpack.c.b16 %v2979, %v2975
          %v3176 = vpack.c.b16 %v2980, %v2976
          %v3177 = vpack.c.b16 %v2985, %v2981
          %v3178 = vpack.c.b16 %v2986, %v2982
          %v3179 = vpack.c.b16 %v2987, %v2983
          %v3180 = vpack.c.b16 %v2988, %v2984
          %v3181 = vpack.c.b16 %v2993, %v2989
          %v3182 = vpack.c.b16 %v2994, %v2990
          %v3183 = vpack.c.b16 %v2995, %v2991
          %v3184 = vpack.c.b16 %v2996, %v2992
          %v3185 = vpack.c.b16 %v3001, %v2997
          %v3186 = vpack.c.b16 %v3002, %v2998
          %v3187 = vpack.c.b16 %v3003, %v2999
          %v3188 = vpack.c.b16 %v3004, %v3000
          %v3189 = vpack.c.b16 %v3009, %v3005
          %v3190 = vpack.c.b16 %v3010, %v3006
          %v3191 = vpack.c.b16 %v3011, %v3007
          %v3192 = vpack.c.b16 %v3012, %v3008
          %v3193 = vpack.c.b16 %v3017, %v3013
          %v3194 = vpack.c.b16 %v3018, %v3014
          %v3195 = vpack.c.b16 %v3019, %v3015
          %v3196 = vpack.c.b16 %v3020, %v3016
          %v3197 = vpack.c.b16 %v3025, %v3021
          %v3198 = vpack.c.b16 %v3026, %v3022
          %v3199 = vpack.c.b16 %v3027, %v3023
          %v3200 = vpack.c.b16 %v3028, %v3024
          %v3201 = vpack.c.b16 %v3033, %v3029
          %v3202 = vpack.c.b16 %v3034, %v3030
          %v3203 = vpack.c.b16 %v3035, %v3031
          %v3204 = vpack.c.b16 %v3036, %v3032
          %v3205 = vpack.c.b16 %v3041, %v3037
          %v3206 = vpack.c.b16 %v3042, %v3038
          %v3207 = vpack.c.b16 %v3043, %v3039
          %v3208 = vpack.c.b16 %v3044, %v3040
          %v3209 = vpack.c.b16 %v3049, %v3045
          %v3210 = vpack.c.b16 %v3050, %v3046
          %v3211 = vpack.c.b16 %v3051, %v3047
          %v3212 = vpack.c.b16 %v3052, %v3048
          %v3213 = vpack.c.b16 %v3057, %v3053
          %v3214 = vpack.c.b16 %v3058, %v3054
          %v3215 = vpack.c.b16 %v3059, %v3055
          %v3216 = vpack.c.b16 %v3060, %v3056
          %v3217 = vpack.c.b16 %v3065, %v3061
          %v3218 = vpack.c.b16 %v3066, %v3062
          %v3219 = vpack.c.b16 %v3067, %v3063
          %v3220 = vpack.c.b16 %v3068, %v3064
          %v3221 = vpack.c.b16 %v3073, %v3069
          %v3222 = vpack.c.b16 %v3074, %v3070
          %v3223 = vpack.c.b16 %v3075, %v3071
          %v3224 = vpack.c.b16 %v3076, %v3072
          %v3225 = vpack.c.b16 %v3081, %v3077
          %v3226 = vpack.c.b16 %v3082, %v3078
          %v3227 = vpack.c.b16 %v3083, %v3079
          %v3228 = vpack.c.b16 %v3084, %v3080
          %v3229 = vpack.c.b16 %v3089, %v3085
          %v3230 = vpack.c.b16 %v3090, %v3086
          %v3231 = vpack.c.b16 %v3091, %v3087
          %v3232 = vpack.c.b16 %v3092, %v3088
          %v3233 = vpack.c.b16 %v3097, %v3093
          %v3234 = vpack.c.b16 %v3098, %v3094
          %v3235 = vpack.c.b16 %v3099, %v3095
          %v3236 = vpack.c.b16 %v3100, %v3096
          %v3237 = vpack.c.b16 %v3105, %v3101
          %v3238 = vpack.c.b16 %v3106, %v3102
          %v3239 = vpack.c.b16 %v3107, %v3103
          %v3240 = vpack.c.b16 %v3108, %v3104
          %v3241 = vpack.c.b16 %v3113, %v3109
          %v3242 = vpack.c.b16 %v3114, %v3110
          %v3243 = vpack.c.b16 %v3115, %v3111
          %v3244 = vpack.c.b16 %v3116, %v3112
          %3373 = vmatprep.subr.bf16.mxu0 0
          %3374 = vmatpush1.bf16.msra.mxu0 %v2573
          %3375 = vmatprep.subr.bf16.mxu0 0
          %3376 = vmatpush1.bf16.msra.mxu0 %v2574
          %3377 = vmatprep.subr.bf16.mxu0 0
          %3378 = vmatpush1.bf16.msra.mxu0 %v2575
          %3379 = vmatprep.subr.bf16.mxu0 0
          %3380 = vmatpush1.bf16.msra.mxu0 %v2576
          %3381 = vmatprep.subr.bf16.mxu0 0
          %3382 = vmatpush1.bf16.msra.mxu0 %v2577
          %3383 = vmatprep.subr.bf16.mxu0 0
          %3384 = vmatpush1.bf16.msra.mxu0 %v2578
          %3385 = vmatprep.subr.bf16.mxu0 0
          %3386 = vmatpush1.bf16.msra.mxu0 %v2579
          %3387 = vmatprep.subr.bf16.mxu0 0
          %3388 = vmatpush1.bf16.msra.mxu0 %v2580
          %3389 = vmatprep.subr.bf16.mxu0 0
          %3390 = vmatpush1.bf16.msra.mxu0 %v2581
          %3391 = vmatprep.subr.bf16.mxu0 0
          %3392 = vmatpush1.bf16.msra.mxu0 %v2582
          %3393 = vmatprep.subr.bf16.mxu0 0
          %3394 = vmatpush1.bf16.msra.mxu0 %v2583
          %3395 = vmatprep.subr.bf16.mxu0 0
          %3396 = vmatpush1.bf16.msra.mxu0 %v2584
          %3397 = vmatprep.subr.bf16.mxu0 0
          %3398 = vmatpush1.bf16.msra.mxu0 %v2585
          %3399 = vmatprep.subr.bf16.mxu0 0
          %3400 = vmatpush1.bf16.msra.mxu0 %v2586
          %3401 = vmatprep.subr.bf16.mxu0 0
          %3402 = vmatpush1.bf16.msra.mxu0 %v2587
          %3403 = vmatprep.subr.bf16.mxu0 0
          %3404 = vmatpush1.bf16.msra.mxu0 %v2588
          %3405 = vmatprep.mubr.bf16.mxu0 %v3118
          %3406 = vmatmul.mubr.bf16.gmra.mrb[0].mxu0 %v3117
          %v3407 = vpop.f32.mrb[0].mxu0
          %v3408 = vadd.f32 0.0, %v3407
          %v3409 = vpop.f32.mrb[0].mxu0
          %v3410 = vpop.f32.mrb[0].mxu0
          %v3411 = vadd.f32 0.0, %v3410
          %v3412 = vpop.f32.mrb[0].mxu0
          %3413 = vmatprep.mubr.bf16.mxu0 %v3122
          %3414 = vmatmul.mubr.bf16.gmra.mrb[0].mxu0 %v3121
          %v3415 = vpop.f32.mrb[0].mxu0
          %v3416 = vadd.f32 0.0, %v3415
          %v3417 = vpop.f32.mrb[0].mxu0
          %v3418 = vpop.f32.mrb[0].mxu0
          %v3419 = vadd.f32 0.0, %v3418
          %v3420 = vpop.f32.mrb[0].mxu0
          %3421 = vmatprep.mubr.bf16.mxu0 %v3126
          %3422 = vmatmul.mubr.bf16.gmra.mrb[0].mxu0 %v3125
          %v3423 = vpop.f32.mrb[0].mxu0
          %v3424 = vadd.f32 0.0, %v3423
          %v3425 = vpop.f32.mrb[0].mxu0
          %v3426 = vpop.f32.mrb[0].mxu0
          %v3427 = vadd.f32 0.0, %v3426
          %v3428 = vpop.f32.mrb[0].mxu0
          %3429 = vmatprep.mubr.bf16.mxu0 %v3130
          %3430 = vmatmul.mubr.bf16.gmra.mrb[0].mxu0 %v3129
          %v3431 = vpop.f32.mrb[0].mxu0
          %v3432 = vadd.f32 0.0, %v3431
          %v3433 = vpop.f32.mrb[0].mxu0
          %v3434 = vpop.f32.mrb[0].mxu0
          %v3435 = vadd.f32 0.0, %v3434
          %v3436 = vpop.f32.mrb[0].mxu0
          %3437 = vmatprep.mubr.bf16.mxu0 %v3134
          %3438 = vmatmul.mubr.bf16.gmra.mrb[0].mxu0 %v3133
          %v3439 = vpop.f32.mrb[0].mxu0
          %v3440 = vadd.f32 0.0, %v3439
          %v3441 = vpop.f32.mrb[0].mxu0
          %v3442 = vpop.f32.mrb[0].mxu0
          %v3443 = vadd.f32 0.0, %v3442
          %v3444 = vpop.f32.mrb[0].mxu0
          %3445 = vmatprep.mubr.bf16.mxu0 %v3138
          %3446 = vmatmul.mubr.bf16.gmra.mrb[0].mxu0 %v3137
          %v3447 = vpop.f32.mrb[0].mxu0
          %v3448 = vadd.f32 0.0, %v3447
          %v3449 = vpop.f32.mrb[0].mxu0
          %v3450 = vpop.f32.mrb[0].mxu0
          %v3451 = vadd.f32 0.0, %v3450
          %v3452 = vpop.f32.mrb[0].mxu0
          %3453 = vmatprep.mubr.bf16.mxu0 %v3142
          %3454 = vmatmul.mubr.bf16.gmra.mrb[0].mxu0 %v3141
          %v3455 = vpop.f32.mrb[0].mxu0
          %v3456 = vadd.f32 0.0, %v3455
          %v3457 = vpop.f32.mrb[0].mxu0
          %v3458 = vpop.f32.mrb[0].mxu0
          %v3459 = vadd.f32 0.0, %v3458
          %v3460 = vpop.f32.mrb[0].mxu0
          %3461 = vmatprep.mubr.bf16.mxu0 %v3146
          %3462 = vmatmul.mubr.bf16.gmra.mrb[0].mxu0 %v3145
          %v3463 = vpop.f32.mrb[0].mxu0
          %v3464 = vadd.f32 0.0, %v3463
          %v3465 = vpop.f32.mrb[0].mxu0
          %v3466 = vpop.f32.mrb[0].mxu0
          %v3467 = vadd.f32 0.0, %v3466
          %v3468 = vpop.f32.mrb[0].mxu0
          %3469 = vmatprep.mubr.bf16.mxu0 %v3150
          %3470 = vmatmul.mubr.bf16.gmra.mrb[0].mxu0 %v3149
          %v3471 = vpop.f32.mrb[0].mxu0
          %v3472 = vadd.f32 0.0, %v3471
          %v3473 = vpop.f32.mrb[0].mxu0
          %v3474 = vpop.f32.mrb[0].mxu0
          %v3475 = vadd.f32 0.0, %v3474
          %v3476 = vpop.f32.mrb[0].mxu0
          %3477 = vmatprep.mubr.bf16.mxu0 %v3154
          %3478 = vmatmul.mubr.bf16.gmra.mrb[0].mxu0 %v3153
          %v3479 = vpop.f32.mrb[0].mxu0
          %v3480 = vadd.f32 0.0, %v3479
          %v3481 = vpop.f32.mrb[0].mxu0
          %v3482 = vpop.f32.mrb[0].mxu0
          %v3483 = vadd.f32 0.0, %v3482
          %v3484 = vpop.f32.mrb[0].mxu0
          %3485 = vmatprep.mubr.bf16.mxu0 %v3158
          %3486 = vmatmul.mubr.bf16.gmra.mrb[0].mxu0 %v3157
          %v3487 = vpop.f32.mrb[0].mxu0
          %v3488 = vadd.f32 0.0, %v3487
          %v3489 = vpop.f32.mrb[0].mxu0
          %v3490 = vpop.f32.mrb[0].mxu0
          %v3491 = vadd.f32 0.0, %v3490
          %v3492 = vpop.f32.mrb[0].mxu0
          %3493 = vmatprep.mubr.bf16.mxu0 %v3162
          %3494 = vmatmul.mubr.bf16.gmra.mrb[0].mxu0 %v3161
          %v3495 = vpop.f32.mrb[0].mxu0
          %v3496 = vadd.f32 0.0, %v3495
          %v3497 = vpop.f32.mrb[0].mxu0
          %v3498 = vpop.f32.mrb[0].mxu0
          %v3499 = vadd.f32 0.0, %v3498
          %v3500 = vpop.f32.mrb[0].mxu0
          %3501 = vmatprep.mubr.bf16.mxu0 %v3166
          %3502 = vmatmul.mubr.bf16.gmra.mrb[0].mxu0 %v3165
          %v3503 = vpop.f32.mrb[0].mxu0
          %v3504 = vadd.f32 0.0, %v3503
          %v3505 = vpop.f32.mrb[0].mxu0
          %v3506 = vpop.f32.mrb[0].mxu0
          %v3507 = vadd.f32 0.0, %v3506
          %v3508 = vpop.f32.mrb[0].mxu0
          %3509 = vmatprep.mubr.bf16.mxu0 %v3170
          %3510 = vmatmul.mubr.bf16.gmra.mrb[0].mxu0 %v3169
          %v3511 = vpop.f32.mrb[0].mxu0
          %v3512 = vadd.f32 0.0, %v3511
          %v3513 = vpop.f32.mrb[0].mxu0
          %v3514 = vpop.f32.mrb[0].mxu0
          %v3515 = vadd.f32 0.0, %v3514
          %v3516 = vpop.f32.mrb[0].mxu0
          %3517 = vmatprep.mubr.bf16.mxu0 %v3174
          %3518 = vmatmul.mubr.bf16.gmra.mrb[0].mxu0 %v3173
          %v3519 = vpop.f32.mrb[0].mxu0
          %v3520 = vadd.f32 0.0, %v3519
          %v3521 = vpop.f32.mrb[0].mxu0
          %v3522 = vpop.f32.mrb[0].mxu0
          %v3523 = vadd.f32 0.0, %v3522
          %v3524 = vpop.f32.mrb[0].mxu0
          %3525 = vmatprep.mubr.bf16.mxu0 %v3178
          %3526 = vmatmul.mubr.bf16.gmra.mrb[0].mxu0 %v3177
          %v3527 = vpop.f32.mrb[0].mxu0
          %v3528 = vadd.f32 0.0, %v3527
          %v3529 = vpop.f32.mrb[0].mxu0
          %v3530 = vpop.f32.mrb[0].mxu0
          %v3531 = vadd.f32 0.0, %v3530
          %v3532 = vpop.f32.mrb[0].mxu0
          %3533 = vmatprep.mubr.bf16.mxu0 %v3182
          %3534 = vmatmul.mubr.bf16.gmra.mrb[0].mxu0 %v3181
          %v3535 = vpop.f32.mrb[0].mxu0
          %v3536 = vadd.f32 0.0, %v3535
          %v3537 = vpop.f32.mrb[0].mxu0
          %v3538 = vpop.f32.mrb[0].mxu0
          %v3539 = vadd.f32 0.0, %v3538
          %v3540 = vpop.f32.mrb[0].mxu0
          %3541 = vmatprep.mubr.bf16.mxu0 %v3186
          %3542 = vmatmul.mubr.bf16.gmra.mrb[0].mxu0 %v3185
          %v3543 = vpop.f32.mrb[0].mxu0
          %v3544 = vadd.f32 0.0, %v3543
          %v3545 = vpop.f32.mrb[0].mxu0
          %v3546 = vpop.f32.mrb[0].mxu0
          %v3547 = vadd.f32 0.0, %v3546
          %v3548 = vpop.f32.mrb[0].mxu0
          %3549 = vmatprep.mubr.bf16.mxu0 %v3190
          %3550 = vmatmul.mubr.bf16.gmra.mrb[0].mxu0 %v3189
          %v3551 = vpop.f32.mrb[0].mxu0
          %v3552 = vadd.f32 0.0, %v3551
          %v3553 = vpop.f32.mrb[0].mxu0
          %v3554 = vpop.f32.mrb[0].mxu0
          %v3555 = vadd.f32 0.0, %v3554
          %v3556 = vpop.f32.mrb[0].mxu0
          %3557 = vmatprep.mubr.bf16.mxu0 %v3194
          %3558 = vmatmul.mubr.bf16.gmra.mrb[0].mxu0 %v3193
          %v3559 = vpop.f32.mrb[0].mxu0
          %v3560 = vadd.f32 0.0, %v3559
          %v3561 = vpop.f32.mrb[0].mxu0
          %v3562 = vpop.f32.mrb[0].mxu0
          %v3563 = vadd.f32 0.0, %v3562
          %v3564 = vpop.f32.mrb[0].mxu0
          %3565 = vmatprep.mubr.bf16.mxu0 %v3198
          %3566 = vmatmul.mubr.bf16.gmra.mrb[0].mxu0 %v3197
          %v3567 = vpop.f32.mrb[0].mxu0
          %v3568 = vadd.f32 0.0, %v3567
          %v3569 = vpop.f32.mrb[0].mxu0
          %v3570 = vpop.f32.mrb[0].mxu0
          %v3571 = vadd.f32 0.0, %v3570
          %v3572 = vpop.f32.mrb[0].mxu0
          %3573 = vmatprep.mubr.bf16.mxu0 %v3202
          %3574 = vmatmul.mubr.bf16.gmra.mrb[0].mxu0 %v3201
          %v3575 = vpop.f32.mrb[0].mxu0
          %v3576 = vadd.f32 0.0, %v3575
          %v3577 = vpop.f32.mrb[0].mxu0
          %v3578 = vpop.f32.mrb[0].mxu0
          %v3579 = vadd.f32 0.0, %v3578
          %v3580 = vpop.f32.mrb[0].mxu0
          %3581 = vmatprep.mubr.bf16.mxu0 %v3206
          %3582 = vmatmul.mubr.bf16.gmra.mrb[0].mxu0 %v3205
          %v3583 = vpop.f32.mrb[0].mxu0
          %v3584 = vadd.f32 0.0, %v3583
          %v3585 = vpop.f32.mrb[0].mxu0
          %v3586 = vpop.f32.mrb[0].mxu0
          %v3587 = vadd.f32 0.0, %v3586
          %v3588 = vpop.f32.mrb[0].mxu0
          %3589 = vmatprep.mubr.bf16.mxu0 %v3210
          %3590 = vmatmul.mubr.bf16.gmra.mrb[0].mxu0 %v3209
          %v3591 = vpop.f32.mrb[0].mxu0
          %v3592 = vadd.f32 0.0, %v3591
          %v3593 = vpop.f32.mrb[0].mxu0
          %v3594 = vpop.f32.mrb[0].mxu0
          %v3595 = vadd.f32 0.0, %v3594
          %v3596 = vpop.f32.mrb[0].mxu0
          %3597 = vmatprep.mubr.bf16.mxu0 %v3214
          %3598 = vmatmul.mubr.bf16.gmra.mrb[0].mxu0 %v3213
          %v3599 = vpop.f32.mrb[0].mxu0
          %v3600 = vadd.f32 0.0, %v3599
          %v3601 = vpop.f32.mrb[0].mxu0
          %v3602 = vpop.f32.mrb[0].mxu0
          %v3603 = vadd.f32 0.0, %v3602
          %v3604 = vpop.f32.mrb[0].mxu0
          %3605 = vmatprep.mubr.bf16.mxu0 %v3218
          %3606 = vmatmul.mubr.bf16.gmra.mrb[0].mxu0 %v3217
          %v3607 = vpop.f32.mrb[0].mxu0
          %v3608 = vadd.f32 0.0, %v3607
          %v3609 = vpop.f32.mrb[0].mxu0
          %v3610 = vpop.f32.mrb[0].mxu0
          %v3611 = vadd.f32 0.0, %v3610
          %v3612 = vpop.f32.mrb[0].mxu0
          %3613 = vmatprep.mubr.bf16.mxu0 %v3222
          %3614 = vmatmul.mubr.bf16.gmra.mrb[0].mxu0 %v3221
          %v3615 = vpop.f32.mrb[0].mxu0
          %v3616 = vadd.f32 0.0, %v3615
          %v3617 = vpop.f32.mrb[0].mxu0
          %v3618 = vpop.f32.mrb[0].mxu0
          %v3619 = vadd.f32 0.0, %v3618
          %v3620 = vpop.f32.mrb[0].mxu0
          %3621 = vmatprep.mubr.bf16.mxu0 %v3226
          %3622 = vmatmul.mubr.bf16.gmra.mrb[0].mxu0 %v3225
          %v3623 = vpop.f32.mrb[0].mxu0
          %v3624 = vadd.f32 0.0, %v3623
          %v3625 = vpop.f32.mrb[0].mxu0
          %v3626 = vpop.f32.mrb[0].mxu0
          %v3627 = vadd.f32 0.0, %v3626
          %v3628 = vpop.f32.mrb[0].mxu0
          %3629 = vmatprep.mubr.bf16.mxu0 %v3230
          %3630 = vmatmul.mubr.bf16.gmra.mrb[0].mxu0 %v3229
          %v3631 = vpop.f32.mrb[0].mxu0
          %v3632 = vadd.f32 0.0, %v3631
          %v3633 = vpop.f32.mrb[0].mxu0
          %v3634 = vpop.f32.mrb[0].mxu0
          %v3635 = vadd.f32 0.0, %v3634
          %v3636 = vpop.f32.mrb[0].mxu0
          %3637 = vmatprep.mubr.bf16.mxu0 %v3234
          %3638 = vmatmul.mubr.bf16.gmra.mrb[0].mxu0 %v3233
          %v3639 = vpop.f32.mrb[0].mxu0
          %v3640 = vadd.f32 0.0, %v3639
          %v3641 = vpop.f32.mrb[0].mxu0
          %v3642 = vpop.f32.mrb[0].mxu0
          %v3643 = vadd.f32 0.0, %v3642
          %v3644 = vpop.f32.mrb[0].mxu0
          %3645 = vmatprep.mubr.bf16.mxu0 %v3238
          %3646 = vmatmul.mubr.bf16.gmra.mrb[0].mxu0 %v3237
          %v3647 = vpop.f32.mrb[0].mxu0
          %v3648 = vadd.f32 0.0, %v3647
          %v3649 = vpop.f32.mrb[0].mxu0
          %v3650 = vpop.f32.mrb[0].mxu0
          %v3651 = vadd.f32 0.0, %v3650
          %v3652 = vpop.f32.mrb[0].mxu0
          %3653 = vmatprep.mubr.bf16.mxu0 %v3242
          %3654 = vmatmul.mubr.bf16.gmra.mrb[0].mxu0 %v3241
          %v3655 = vpop.f32.mrb[0].mxu0
          %v3656 = vadd.f32 0.0, %v3655
          %v3657 = vpop.f32.mrb[0].mxu0
          %v3658 = vpop.f32.mrb[0].mxu0
          %v3659 = vadd.f32 0.0, %v3658
          %v3660 = vpop.f32.mrb[0].mxu0
          %3661 = vdwg.mxu0
          %3662 = vmatprep.subr.bf16.mxu0 0
          %3663 = vmatpush1.bf16.msra.mxu0 %v2589
          %3664 = vmatprep.subr.bf16.mxu0 0
          %3665 = vmatpush1.bf16.msra.mxu0 %v2590
          %3666 = vmatprep.subr.bf16.mxu0 0
          %3667 = vmatpush1.bf16.msra.mxu0 %v2591
          %3668 = vmatprep.subr.bf16.mxu0 0
          %3669 = vmatpush1.bf16.msra.mxu0 %v2592
          %3670 = vmatprep.subr.bf16.mxu0 0
          %3671 = vmatpush1.bf16.msra.mxu0 %v2593
          %3672 = vmatprep.subr.bf16.mxu0 0
          %3673 = vmatpush1.bf16.msra.mxu0 %v2594
          %3674 = vmatprep.subr.bf16.mxu0 0
          %3675 = vmatpush1.bf16.msra.mxu0 %v2595
          %3676 = vmatprep.subr.bf16.mxu0 0
          %3677 = vmatpush1.bf16.msra.mxu0 %v2596
          %3678 = vmatprep.subr.bf16.mxu0 0
          %3679 = vmatpush1.bf16.msra.mxu0 %v2597
          %3680 = vmatprep.subr.bf16.mxu0 0
          %3681 = vmatpush1.bf16.msra.mxu0 %v2598
          %3682 = vmatprep.subr.bf16.mxu0 0
          %3683 = vmatpush1.bf16.msra.mxu0 %v2599
          %3684 = vmatprep.subr.bf16.mxu0 0
          %3685 = vmatpush1.bf16.msra.mxu0 %v2600
          %3686 = vmatprep.subr.bf16.mxu0 0
          %3687 = vmatpush1.bf16.msra.mxu0 %v2601
          %3688 = vmatprep.subr.bf16.mxu0 0
          %3689 = vmatpush1.bf16.msra.mxu0 %v2602
          %3690 = vmatprep.subr.bf16.mxu0 0
          %3691 = vmatpush1.bf16.msra.mxu0 %v2603
          %3692 = vmatprep.subr.bf16.mxu0 0
          %3693 = vmatpush1.bf16.msra.mxu0 %v2604
          %3694 = vmatprep.mubr.bf16.mxu0 %v3120
          %3695 = vmatmul.mubr.bf16.gmra.mrb[0].mxu0 %v3119
          %v3696 = vpop.f32.mrb[0].mxu0
          %v3697 = vadd.f32 %v3408, %v3696
          %v3698 = vpop.f32.mrb[0].mxu0
          %v3699 = vpop.f32.mrb[0].mxu0
          %v3700 = vadd.f32 %v3411, %v3699
          %v3701 = vpop.f32.mrb[0].mxu0
          %3702 = vmatprep.mubr.bf16.mxu0 %v3124
          %3703 = vmatmul.mubr.bf16.gmra.mrb[0].mxu0 %v3123
          %v3704 = vpop.f32.mrb[0].mxu0
          %v3705 = vadd.f32 %v3416, %v3704
          %v3706 = vpop.f32.mrb[0].mxu0
          %v3707 = vpop.f32.mrb[0].mxu0
          %v3708 = vadd.f32 %v3419, %v3707
          %v3709 = vpop.f32.mrb[0].mxu0
          %3710 = vmatprep.mubr.bf16.mxu0 %v3128
          %3711 = vmatmul.mubr.bf16.gmra.mrb[0].mxu0 %v3127
          %v3712 = vpop.f32.mrb[0].mxu0
          %v3713 = vadd.f32 %v3424, %v3712
          %v3714 = vpop.f32.mrb[0].mxu0
          %v3715 = vpop.f32.mrb[0].mxu0
          %v3716 = vadd.f32 %v3427, %v3715
          %v3717 = vpop.f32.mrb[0].mxu0
          %3718 = vmatprep.mubr.bf16.mxu0 %v3132
          %3719 = vmatmul.mubr.bf16.gmra.mrb[0].mxu0 %v3131
          %v3720 = vpop.f32.mrb[0].mxu0
          %v3721 = vadd.f32 %v3432, %v3720
          %v3722 = vpop.f32.mrb[0].mxu0
          %v3723 = vpop.f32.mrb[0].mxu0
          %v3724 = vadd.f32 %v3435, %v3723
          %v3725 = vpop.f32.mrb[0].mxu0
          %3726 = vmatprep.mubr.bf16.mxu0 %v3136
          %3727 = vmatmul.mubr.bf16.gmra.mrb[0].mxu0 %v3135
          %v3728 = vpop.f32.mrb[0].mxu0
          %v3729 = vadd.f32 %v3440, %v3728
          %v3730 = vpop.f32.mrb[0].mxu0
          %v3731 = vpop.f32.mrb[0].mxu0
          %v3732 = vadd.f32 %v3443, %v3731
          %v3733 = vpop.f32.mrb[0].mxu0
          %3734 = vmatprep.mubr.bf16.mxu0 %v3140
          %3735 = vmatmul.mubr.bf16.gmra.mrb[0].mxu0 %v3139
          %v3736 = vpop.f32.mrb[0].mxu0
          %v3737 = vadd.f32 %v3448, %v3736
          %v3738 = vpop.f32.mrb[0].mxu0
          %v3739 = vpop.f32.mrb[0].mxu0
          %v3740 = vadd.f32 %v3451, %v3739
          %v3741 = vpop.f32.mrb[0].mxu0
          %3742 = vmatprep.mubr.bf16.mxu0 %v3144
          %3743 = vmatmul.mubr.bf16.gmra.mrb[0].mxu0 %v3143
          %v3744 = vpop.f32.mrb[0].mxu0
          %v3745 = vadd.f32 %v3456, %v3744
          %v3746 = vpop.f32.mrb[0].mxu0
          %v3747 = vpop.f32.mrb[0].mxu0
          %v3748 = vadd.f32 %v3459, %v3747
          %v3749 = vpop.f32.mrb[0].mxu0
          %3750 = vmatprep.mubr.bf16.mxu0 %v3148
          %3751 = vmatmul.mubr.bf16.gmra.mrb[0].mxu0 %v3147
          %v3752 = vpop.f32.mrb[0].mxu0
          %v3753 = vadd.f32 %v3464, %v3752
          %v3754 = vpop.f32.mrb[0].mxu0
          %v3755 = vpop.f32.mrb[0].mxu0
          %v3756 = vadd.f32 %v3467, %v3755
          %v3757 = vpop.f32.mrb[0].mxu0
          %3758 = vmatprep.mubr.bf16.mxu0 %v3152
          %3759 = vmatmul.mubr.bf16.gmra.mrb[0].mxu0 %v3151
          %v3760 = vpop.f32.mrb[0].mxu0
          %v3761 = vadd.f32 %v3472, %v3760
          %v3762 = vpop.f32.mrb[0].mxu0
          %v3763 = vpop.f32.mrb[0].mxu0
          %v3764 = vadd.f32 %v3475, %v3763
          %v3765 = vpop.f32.mrb[0].mxu0
          %3766 = vmatprep.mubr.bf16.mxu0 %v3156
          %3767 = vmatmul.mubr.bf16.gmra.mrb[0].mxu0 %v3155
          %v3768 = vpop.f32.mrb[0].mxu0
          %v3769 = vadd.f32 %v3480, %v3768
          %v3770 = vpop.f32.mrb[0].mxu0
          %v3771 = vpop.f32.mrb[0].mxu0
          %v3772 = vadd.f32 %v3483, %v3771
          %v3773 = vpop.f32.mrb[0].mxu0
          %3774 = vmatprep.mubr.bf16.mxu0 %v3160
          %3775 = vmatmul.mubr.bf16.gmra.mrb[0].mxu0 %v3159
          %v3776 = vpop.f32.mrb[0].mxu0
          %v3777 = vadd.f32 %v3488, %v3776
          %v3778 = vpop.f32.mrb[0].mxu0
          %v3779 = vpop.f32.mrb[0].mxu0
          %v3780 = vadd.f32 %v3491, %v3779
          %v3781 = vpop.f32.mrb[0].mxu0
          %3782 = vmatprep.mubr.bf16.mxu0 %v3164
          %3783 = vmatmul.mubr.bf16.gmra.mrb[0].mxu0 %v3163
          %v3784 = vpop.f32.mrb[0].mxu0
          %v3785 = vadd.f32 %v3496, %v3784
          %v3786 = vpop.f32.mrb[0].mxu0
          %v3787 = vpop.f32.mrb[0].mxu0
          %v3788 = vadd.f32 %v3499, %v3787
          %v3789 = vpop.f32.mrb[0].mxu0
          %3790 = vmatprep.mubr.bf16.mxu0 %v3168
          %3791 = vmatmul.mubr.bf16.gmra.mrb[0].mxu0 %v3167
          %v3792 = vpop.f32.mrb[0].mxu0
          %v3793 = vadd.f32 %v3504, %v3792
          %v3794 = vpop.f32.mrb[0].mxu0
          %v3795 = vpop.f32.mrb[0].mxu0
          %v3796 = vadd.f32 %v3507, %v3795
          %v3797 = vpop.f32.mrb[0].mxu0
          %3798 = vmatprep.mubr.bf16.mxu0 %v3172
          %3799 = vmatmul.mubr.bf16.gmra.mrb[0].mxu0 %v3171
          %v3800 = vpop.f32.mrb[0].mxu0
          %v3801 = vadd.f32 %v3512, %v3800
          %v3802 = vpop.f32.mrb[0].mxu0
          %v3803 = vpop.f32.mrb[0].mxu0
          %v3804 = vadd.f32 %v3515, %v3803
          %v3805 = vpop.f32.mrb[0].mxu0
          %3806 = vmatprep.mubr.bf16.mxu0 %v3176
          %3807 = vmatmul.mubr.bf16.gmra.mrb[0].mxu0 %v3175
          %v3808 = vpop.f32.mrb[0].mxu0
          %v3809 = vadd.f32 %v3520, %v3808
          %v3810 = vpop.f32.mrb[0].mxu0
          %v3811 = vpop.f32.mrb[0].mxu0
          %v3812 = vadd.f32 %v3523, %v3811
          %v3813 = vpop.f32.mrb[0].mxu0
          %3814 = vmatprep.mubr.bf16.mxu0 %v3180
          %3815 = vmatmul.mubr.bf16.gmra.mrb[0].mxu0 %v3179
          %v3816 = vpop.f32.mrb[0].mxu0
          %v3817 = vadd.f32 %v3528, %v3816
          %v3818 = vpop.f32.mrb[0].mxu0
          %v3819 = vpop.f32.mrb[0].mxu0
          %v3820 = vadd.f32 %v3531, %v3819
          %v3821 = vpop.f32.mrb[0].mxu0
          %3822 = vmatprep.mubr.bf16.mxu0 %v3184
          %3823 = vmatmul.mubr.bf16.gmra.mrb[0].mxu0 %v3183
          %v3824 = vpop.f32.mrb[0].mxu0
          %v3825 = vadd.f32 %v3536, %v3824
          %v3826 = vpop.f32.mrb[0].mxu0
          %v3827 = vpop.f32.mrb[0].mxu0
          %v3828 = vadd.f32 %v3539, %v3827
          %v3829 = vpop.f32.mrb[0].mxu0
          %3830 = vmatprep.mubr.bf16.mxu0 %v3188
          %3831 = vmatmul.mubr.bf16.gmra.mrb[0].mxu0 %v3187
          %v3832 = vpop.f32.mrb[0].mxu0
          %v3833 = vadd.f32 %v3544, %v3832
          %v3834 = vpop.f32.mrb[0].mxu0
          %v3835 = vpop.f32.mrb[0].mxu0
          %v3836 = vadd.f32 %v3547, %v3835
          %v3837 = vpop.f32.mrb[0].mxu0
          %3838 = vmatprep.mubr.bf16.mxu0 %v3192
          %3839 = vmatmul.mubr.bf16.gmra.mrb[0].mxu0 %v3191
          %v3840 = vpop.f32.mrb[0].mxu0
          %v3841 = vadd.f32 %v3552, %v3840
          %v3842 = vpop.f32.mrb[0].mxu0
          %v3843 = vpop.f32.mrb[0].mxu0
          %v3844 = vadd.f32 %v3555, %v3843
          %v3845 = vpop.f32.mrb[0].mxu0
          %3846 = vmatprep.mubr.bf16.mxu0 %v3196
          %3847 = vmatmul.mubr.bf16.gmra.mrb[0].mxu0 %v3195
          %v3848 = vpop.f32.mrb[0].mxu0
          %v3849 = vadd.f32 %v3560, %v3848
          %v3850 = vpop.f32.mrb[0].mxu0
          %v3851 = vpop.f32.mrb[0].mxu0
          %v3852 = vadd.f32 %v3563, %v3851
          %v3853 = vpop.f32.mrb[0].mxu0
          %3854 = vmatprep.mubr.bf16.mxu0 %v3200
          %3855 = vmatmul.mubr.bf16.gmra.mrb[0].mxu0 %v3199
          %v3856 = vpop.f32.mrb[0].mxu0
          %v3857 = vadd.f32 %v3568, %v3856
          %v3858 = vpop.f32.mrb[0].mxu0
          %v3859 = vpop.f32.mrb[0].mxu0
          %v3860 = vadd.f32 %v3571, %v3859
          %v3861 = vpop.f32.mrb[0].mxu0
          %3862 = vmatprep.mubr.bf16.mxu0 %v3204
          %3863 = vmatmul.mubr.bf16.gmra.mrb[0].mxu0 %v3203
          %v3864 = vpop.f32.mrb[0].mxu0
          %v3865 = vadd.f32 %v3576, %v3864
          %v3866 = vpop.f32.mrb[0].mxu0
          %v3867 = vpop.f32.mrb[0].mxu0
          %v3868 = vadd.f32 %v3579, %v3867
          %v3869 = vpop.f32.mrb[0].mxu0
          %3870 = vmatprep.mubr.bf16.mxu0 %v3208
          %3871 = vmatmul.mubr.bf16.gmra.mrb[0].mxu0 %v3207
          %v3872 = vpop.f32.mrb[0].mxu0
          %v3873 = vadd.f32 %v3584, %v3872
          %v3874 = vpop.f32.mrb[0].mxu0
          %v3875 = vpop.f32.mrb[0].mxu0
          %v3876 = vadd.f32 %v3587, %v3875
          %v3877 = vpop.f32.mrb[0].mxu0
          %3878 = vmatprep.mubr.bf16.mxu0 %v3212
          %3879 = vmatmul.mubr.bf16.gmra.mrb[0].mxu0 %v3211
          %v3880 = vpop.f32.mrb[0].mxu0
          %v3881 = vadd.f32 %v3592, %v3880
          %v3882 = vpop.f32.mrb[0].mxu0
          %v3883 = vpop.f32.mrb[0].mxu0
          %v3884 = vadd.f32 %v3595, %v3883
          %v3885 = vpop.f32.mrb[0].mxu0
          %3886 = vmatprep.mubr.bf16.mxu0 %v3216
          %3887 = vmatmul.mubr.bf16.gmra.mrb[0].mxu0 %v3215
          %v3888 = vpop.f32.mrb[0].mxu0
          %v3889 = vadd.f32 %v3600, %v3888
          %v3890 = vpop.f32.mrb[0].mxu0
          %v3891 = vpop.f32.mrb[0].mxu0
          %v3892 = vadd.f32 %v3603, %v3891
          %v3893 = vpop.f32.mrb[0].mxu0
          %3894 = vmatprep.mubr.bf16.mxu0 %v3220
          %3895 = vmatmul.mubr.bf16.gmra.mrb[0].mxu0 %v3219
          %v3896 = vpop.f32.mrb[0].mxu0
          %v3897 = vadd.f32 %v3608, %v3896
          %v3898 = vpop.f32.mrb[0].mxu0
          %v3899 = vpop.f32.mrb[0].mxu0
          %v3900 = vadd.f32 %v3611, %v3899
          %v3901 = vpop.f32.mrb[0].mxu0
          %3902 = vmatprep.mubr.bf16.mxu0 %v3224
          %3903 = vmatmul.mubr.bf16.gmra.mrb[0].mxu0 %v3223
          %v3904 = vpop.f32.mrb[0].mxu0
          %v3905 = vadd.f32 %v3616, %v3904
          %v3906 = vpop.f32.mrb[0].mxu0
          %v3907 = vpop.f32.mrb[0].mxu0
          %v3908 = vadd.f32 %v3619, %v3907
          %v3909 = vpop.f32.mrb[0].mxu0
          %3910 = vmatprep.mubr.bf16.mxu0 %v3228
          %3911 = vmatmul.mubr.bf16.gmra.mrb[0].mxu0 %v3227
          %v3912 = vpop.f32.mrb[0].mxu0
          %v3913 = vadd.f32 %v3624, %v3912
          %v3914 = vpop.f32.mrb[0].mxu0
          %v3915 = vpop.f32.mrb[0].mxu0
          %v3916 = vadd.f32 %v3627, %v3915
          %v3917 = vpop.f32.mrb[0].mxu0
          %3918 = vmatprep.mubr.bf16.mxu0 %v3232
          %3919 = vmatmul.mubr.bf16.gmra.mrb[0].mxu0 %v3231
          %v3920 = vpop.f32.mrb[0].mxu0
          %v3921 = vadd.f32 %v3632, %v3920
          %v3922 = vpop.f32.mrb[0].mxu0
          %v3923 = vpop.f32.mrb[0].mxu0
          %v3924 = vadd.f32 %v3635, %v3923
          %v3925 = vpop.f32.mrb[0].mxu0
          %3926 = vmatprep.mubr.bf16.mxu0 %v3236
          %3927 = vmatmul.mubr.bf16.gmra.mrb[0].mxu0 %v3235
          %v3928 = vpop.f32.mrb[0].mxu0
          %v3929 = vadd.f32 %v3640, %v3928
          %v3930 = vpop.f32.mrb[0].mxu0
          %v3931 = vpop.f32.mrb[0].mxu0
          %v3932 = vadd.f32 %v3643, %v3931
          %v3933 = vpop.f32.mrb[0].mxu0
          %3934 = vmatprep.mubr.bf16.mxu0 %v3240
          %3935 = vmatmul.mubr.bf16.gmra.mrb[0].mxu0 %v3239
          %v3936 = vpop.f32.mrb[0].mxu0
          %v3937 = vadd.f32 %v3648, %v3936
          %v3938 = vpop.f32.mrb[0].mxu0
          %v3939 = vpop.f32.mrb[0].mxu0
          %v3940 = vadd.f32 %v3651, %v3939
          %v3941 = vpop.f32.mrb[0].mxu0
          %3942 = vmatprep.mubr.bf16.mxu0 %v3244
          %3943 = vmatmul.mubr.bf16.gmra.mrb[0].mxu0 %v3243
          %v3944 = vpop.f32.mrb[0].mxu0
          %v3945 = vadd.f32 %v3656, %v3944
          %v3946 = vpop.f32.mrb[0].mxu0
          %v3947 = vpop.f32.mrb[0].mxu0
          %v3948 = vadd.f32 %v3659, %v3947
          %v3949 = vpop.f32.mrb[0].mxu0
          %3950 = vdwg.mxu0
          %v3951 = vpack.c.bf16 %v3700, %v3697
          %v3952 = vpack.c.bf16 %v3708, %v3705
          %v3953 = vpack.c.bf16 %v3716, %v3713
          %v3954 = vpack.c.bf16 %v3724, %v3721
          %v3955 = vpack.c.bf16 %v3732, %v3729
          %v3956 = vpack.c.bf16 %v3740, %v3737
          %v3957 = vpack.c.bf16 %v3748, %v3745
          %v3958 = vpack.c.bf16 %v3756, %v3753
          %v3959 = vpack.c.bf16 %v3764, %v3761
          %v3960 = vpack.c.bf16 %v3772, %v3769
          %v3961 = vpack.c.bf16 %v3780, %v3777
          %v3962 = vpack.c.bf16 %v3788, %v3785
          %v3963 = vpack.c.bf16 %v3796, %v3793
          %v3964 = vpack.c.bf16 %v3804, %v3801
          %v3965 = vpack.c.bf16 %v3812, %v3809
          %v3966 = vpack.c.bf16 %v3820, %v3817
          %v3967 = vpack.c.bf16 %v3828, %v3825
          %v3968 = vpack.c.bf16 %v3836, %v3833
          %v3969 = vpack.c.bf16 %v3844, %v3841
          %v3970 = vpack.c.bf16 %v3852, %v3849
          %v3971 = vpack.c.bf16 %v3860, %v3857
          %v3972 = vpack.c.bf16 %v3868, %v3865
          %v3973 = vpack.c.bf16 %v3876, %v3873
          %v3974 = vpack.c.bf16 %v3884, %v3881
          %v3975 = vpack.c.bf16 %v3892, %v3889
          %v3976 = vpack.c.bf16 %v3900, %v3897
          %v3977 = vpack.c.bf16 %v3908, %v3905
          %v3978 = vpack.c.bf16 %v3916, %v3913
          %v3979 = vpack.c.bf16 %v3924, %v3921
          %v3980 = vpack.c.bf16 %v3932, %v3929
          %v3981 = vpack.c.bf16 %v3940, %v3937
          %v3982 = vpack.c.bf16 %v3948, %v3945
          %p3983 = scmp.lt.s32.totalorder %s29, 0
          %s3984 = ssub.s32 0, %s29
          %s3985 = scalar_select %p3983, %s3984, %s29
          %s3986 = sand.u32 %s3985, 1
          %s3987 = ssub.s32 0, %s3986
          %s3988 = scalar_select %p3983, %s3987, %s3986
          %p3989 = scmp.ne.s32.totalorder %s3988, 0
          %p3990 = scmp.lt.s32.totalorder %s3988, 0
          %p3991 = pnand %p3990, %p3989
          %p3992 = pneg %p3991
          %s3993 = sadd.s32 %s3988, 2
          %s3994 = scalar_select %p3992, %s3993, %s3988
          %s3995 = sshra.s32 %s391, 4
          %s3996 = sand.u32 %s391, 15
          %s3997 = smul.u32 %s3994, 32
          %s3998 = sadd.s32 %s3995, %s3997
          %s3999 = smul.addr %s3998, 8
          %s4000 = scalar_lea.vmem [#allocation2], %s3999
          %4001 = vst [vmem:[%s4000] sm:$0xff] %v3951
          %4002 = vst [vmem:[%s4000 + $0x8] sm:$0xff] %v3952
          %4003 = vst [vmem:[%s4000 + $0x10] sm:$0xff] %v3953
          %4004 = vst [vmem:[%s4000 + $0x18] sm:$0xff] %v3954
          %4005 = vst [vmem:[%s4000 + $0x20] sm:$0xff] %v3955
          %4006 = vst [vmem:[%s4000 + $0x28] sm:$0xff] %v3956
          %4007 = vst [vmem:[%s4000 + $0x30] sm:$0xff] %v3957
          %4008 = vst [vmem:[%s4000 + $0x38] sm:$0xff] %v3958
          %4009 = vst [vmem:[%s4000 + $0x40] sm:$0xff] %v3959
          %4010 = vst [vmem:[%s4000 + $0x48] sm:$0xff] %v3960
          %4011 = vst [vmem:[%s4000 + $0x50] sm:$0xff] %v3961
          %4012 = vst [vmem:[%s4000 + $0x58] sm:$0xff] %v3962
          %4013 = vst [vmem:[%s4000 + $0x60] sm:$0xff] %v3963
          %4014 = vst [vmem:[%s4000 + $0x68] sm:$0xff] %v3964
          %4015 = vst [vmem:[%s4000 + $0x70] sm:$0xff] %v3965
          %4016 = vst [vmem:[%s4000 + $0x78] sm:$0xff] %v3966
          %4017 = vst [vmem:[%s4000 + $0x80] sm:$0xff] %v3967
          %4018 = vst [vmem:[%s4000 + $0x88] sm:$0xff] %v3968
          %4019 = vst [vmem:[%s4000 + $0x90] sm:$0xff] %v3969
          %4020 = vst [vmem:[%s4000 + $0x98] sm:$0xff] %v3970
          %4021 = vst [vmem:[%s4000 + $0xa0] sm:$0xff] %v3971
          %4022 = vst [vmem:[%s4000 + $0xa8] sm:$0xff] %v3972
          %4023 = vst [vmem:[%s4000 + $0xb0] sm:$0xff] %v3973
          %4024 = vst [vmem:[%s4000 + $0xb8] sm:$0xff] %v3974
          %4025 = vst [vmem:[%s4000 + $0xc0] sm:$0xff] %v3975
          %4026 = vst [vmem:[%s4000 + $0xc8] sm:$0xff] %v3976
          %4027 = vst [vmem:[%s4000 + $0xd0] sm:$0xff] %v3977
          %4028 = vst [vmem:[%s4000 + $0xd8] sm:$0xff] %v3978
          %4029 = vst [vmem:[%s4000 + $0xe0] sm:$0xff] %v3979
          %4030 = vst [vmem:[%s4000 + $0xe8] sm:$0xff] %v3980
          %4031 = vst [vmem:[%s4000 + $0xf0] sm:$0xff] %v3981
          %4032 = vst [vmem:[%s4000 + $0xf8] sm:$0xff] %v3982
          %s4033 = scalar_lea.vmem [#allocation7], %s391
          %v4034 = vld [vmem:[%s4033] sm:$0xff]
          %v4035 = vld [vmem:[%s4033 + $0x8] sm:$0xff]
          %v4036 = vld [vmem:[%s4033 + $0x10] sm:$0xff]
          %v4037 = vld [vmem:[%s4033 + $0x18] sm:$0xff]
          %v4038 = vld [vmem:[%s4033 + $0x20] sm:$0xff]
          %v4039 = vld [vmem:[%s4033 + $0x28] sm:$0xff]
          %v4040 = vld [vmem:[%s4033 + $0x30] sm:$0xff]
          %v4041 = vld [vmem:[%s4033 + $0x38] sm:$0xff]
          %v4042 = vld [vmem:[%s4033 + $0x40] sm:$0xff]
          %v4043 = vld [vmem:[%s4033 + $0x48] sm:$0xff]
          %v4044 = vld [vmem:[%s4033 + $0x50] sm:$0xff]
          %v4045 = vld [vmem:[%s4033 + $0x58] sm:$0xff]
          %v4046 = vld [vmem:[%s4033 + $0x60] sm:$0xff]
          %v4047 = vld [vmem:[%s4033 + $0x68] sm:$0xff]
          %v4048 = vld [vmem:[%s4033 + $0x70] sm:$0xff]
          %v4049 = vld [vmem:[%s4033 + $0x78] sm:$0xff]
          %v4050 = vld [vmem:[%s4033 + $0x80] sm:$0xff]
          %v4051 = vld [vmem:[%s4033 + $0x88] sm:$0xff]
          %v4052 = vld [vmem:[%s4033 + $0x90] sm:$0xff]
          %v4053 = vld [vmem:[%s4033 + $0x98] sm:$0xff]
          %v4054 = vld [vmem:[%s4033 + $0xa0] sm:$0xff]
          %v4055 = vld [vmem:[%s4033 + $0xa8] sm:$0xff]
          %v4056 = vld [vmem:[%s4033 + $0xb0] sm:$0xff]
          %v4057 = vld [vmem:[%s4033 + $0xb8] sm:$0xff]
          %v4058 = vld [vmem:[%s4033 + $0xc0] sm:$0xff]
          %v4059 = vld [vmem:[%s4033 + $0xc8] sm:$0xff]
          %v4060 = vld [vmem:[%s4033 + $0xd0] sm:$0xff]
          %v4061 = vld [vmem:[%s4033 + $0xd8] sm:$0xff]
          %v4062 = vld [vmem:[%s4033 + $0xe0] sm:$0xff]
          %v4063 = vld [vmem:[%s4033 + $0xe8] sm:$0xff]
          %v4064 = vld [vmem:[%s4033 + $0xf0] sm:$0xff]
          %v4065 = vld [vmem:[%s4033 + $0xf8] sm:$0xff]
          %v4066 = vld [vmem:[%s4033 + $0x100] sm:$0xff]
          %v4067 = vld [vmem:[%s4033 + $0x108] sm:$0xff]
          %v4068 = vld [vmem:[%s4033 + $0x110] sm:$0xff]
          %v4069 = vld [vmem:[%s4033 + $0x118] sm:$0xff]
          %v4070 = vld [vmem:[%s4033 + $0x120] sm:$0xff]
          %v4071 = vld [vmem:[%s4033 + $0x128] sm:$0xff]
          %v4072 = vld [vmem:[%s4033 + $0x130] sm:$0xff]
          %v4073 = vld [vmem:[%s4033 + $0x138] sm:$0xff]
          %v4074 = vld [vmem:[%s4033 + $0x140] sm:$0xff]
          %v4075 = vld [vmem:[%s4033 + $0x148] sm:$0xff]
          %v4076 = vld [vmem:[%s4033 + $0x150] sm:$0xff]
          %v4077 = vld [vmem:[%s4033 + $0x158] sm:$0xff]
          %v4078 = vld [vmem:[%s4033 + $0x160] sm:$0xff]
          %v4079 = vld [vmem:[%s4033 + $0x168] sm:$0xff]
          %v4080 = vld [vmem:[%s4033 + $0x170] sm:$0xff]
          %v4081 = vld [vmem:[%s4033 + $0x178] sm:$0xff]
          %v4082 = vld [vmem:[%s4033 + $0x180] sm:$0xff]
          %v4083 = vld [vmem:[%s4033 + $0x188] sm:$0xff]
          %v4084 = vld [vmem:[%s4033 + $0x190] sm:$0xff]
          %v4085 = vld [vmem:[%s4033 + $0x198] sm:$0xff]
          %v4086 = vld [vmem:[%s4033 + $0x1a0] sm:$0xff]
          %v4087 = vld [vmem:[%s4033 + $0x1a8] sm:$0xff]
          %v4088 = vld [vmem:[%s4033 + $0x1b0] sm:$0xff]
          %v4089 = vld [vmem:[%s4033 + $0x1b8] sm:$0xff]
          %v4090 = vld [vmem:[%s4033 + $0x1c0] sm:$0xff]
          %v4091 = vld [vmem:[%s4033 + $0x1c8] sm:$0xff]
          %v4092 = vld [vmem:[%s4033 + $0x1d0] sm:$0xff]
          %v4093 = vld [vmem:[%s4033 + $0x1d8] sm:$0xff]
          %v4094 = vld [vmem:[%s4033 + $0x1e0] sm:$0xff]
          %v4095 = vld [vmem:[%s4033 + $0x1e8] sm:$0xff]
          %v4096 = vld [vmem:[%s4033 + $0x1f0] sm:$0xff]
          %v4097 = vld [vmem:[%s4033 + $0x1f8] sm:$0xff]
          %v4099 = vlaneseq
          %v4100 = vshrl.u32 %v4099, 7
          %v4101 = vsub.s32 0, %v4100
          %v4102 = vrot.slane %v392, %v4101
          %v4104 = vmul.f32 %v3697, %v4102
          %v4105 = vmul.f32 %v3700, %v4102
          %v4106 = vmul.f32 %v3705, %v4102
          %v4107 = vmul.f32 %v3708, %v4102
          %v4108 = vmul.f32 %v3713, %v4102
          %v4109 = vmul.f32 %v3716, %v4102
          %v4110 = vmul.f32 %v3721, %v4102
          %v4111 = vmul.f32 %v3724, %v4102
          %v4112 = vmul.f32 %v3729, %v4102
          %v4113 = vmul.f32 %v3732, %v4102
          %v4114 = vmul.f32 %v3737, %v4102
          %v4115 = vmul.f32 %v3740, %v4102
          %v4116 = vmul.f32 %v3745, %v4102
          %v4117 = vmul.f32 %v3748, %v4102
          %v4118 = vmul.f32 %v3753, %v4102
          %v4119 = vmul.f32 %v3756, %v4102
          %v4120 = vmul.f32 %v3761, %v4102
          %v4121 = vmul.f32 %v3764, %v4102
          %v4122 = vmul.f32 %v3769, %v4102
          %v4123 = vmul.f32 %v3772, %v4102
          %v4124 = vmul.f32 %v3777, %v4102
          %v4125 = vmul.f32 %v3780, %v4102
          %v4126 = vmul.f32 %v3785, %v4102
          %v4127 = vmul.f32 %v3788, %v4102
          %v4128 = vmul.f32 %v3793, %v4102
          %v4129 = vmul.f32 %v3796, %v4102
          %v4130 = vmul.f32 %v3801, %v4102
          %v4131 = vmul.f32 %v3804, %v4102
          %v4132 = vmul.f32 %v3809, %v4102
          %v4133 = vmul.f32 %v3812, %v4102
          %v4134 = vmul.f32 %v3817, %v4102
          %v4135 = vmul.f32 %v3820, %v4102
          %v4136 = vmul.f32 %v3825, %v4102
          %v4137 = vmul.f32 %v3828, %v4102
          %v4138 = vmul.f32 %v3833, %v4102
          %v4139 = vmul.f32 %v3836, %v4102
          %v4140 = vmul.f32 %v3841, %v4102
          %v4141 = vmul.f32 %v3844, %v4102
          %v4142 = vmul.f32 %v3849, %v4102
          %v4143 = vmul.f32 %v3852, %v4102
          %v4144 = vmul.f32 %v3857, %v4102
          %v4145 = vmul.f32 %v3860, %v4102
          %v4146 = vmul.f32 %v3865, %v4102
          %v4147 = vmul.f32 %v3868, %v4102
          %v4148 = vmul.f32 %v3873, %v4102
          %v4149 = vmul.f32 %v3876, %v4102
          %v4150 = vmul.f32 %v3881, %v4102
          %v4151 = vmul.f32 %v3884, %v4102
          %v4152 = vmul.f32 %v3889, %v4102
          %v4153 = vmul.f32 %v3892, %v4102
          %v4154 = vmul.f32 %v3897, %v4102
          %v4155 = vmul.f32 %v3900, %v4102
          %v4156 = vmul.f32 %v3905, %v4102
          %v4157 = vmul.f32 %v3908, %v4102
          %v4158 = vmul.f32 %v3913, %v4102
          %v4159 = vmul.f32 %v3916, %v4102
          %v4160 = vmul.f32 %v3921, %v4102
          %v4161 = vmul.f32 %v3924, %v4102
          %v4162 = vmul.f32 %v3929, %v4102
          %v4163 = vmul.f32 %v3932, %v4102
          %v4164 = vmul.f32 %v3937, %v4102
          %v4165 = vmul.f32 %v3940, %v4102
          %v4166 = vmul.f32 %v3945, %v4102
          %v4167 = vmul.f32 %v3948, %v4102
          %4168 = vadd.xlane.f32.xlu0 %v4104
          %v4169 = vpop.xlane.xlu0 %4168
          %4170 = vadd.xlane.f32.xlu0 %v4105
          %v4171 = vpop.xlane.xlu0 %4170
          %4172 = vadd.xlane.f32.xlu0 %v4106
          %v4173 = vpop.xlane.xlu0 %4172
          %4174 = vadd.xlane.f32.xlu0 %v4107
          %v4175 = vpop.xlane.xlu0 %4174
          %4176 = vadd.xlane.f32.xlu0 %v4108
          %v4177 = vpop.xlane.xlu0 %4176
          %4178 = vadd.xlane.f32.xlu0 %v4109
          %v4179 = vpop.xlane.xlu0 %4178
          %4180 = vadd.xlane.f32.xlu0 %v4110
          %v4181 = vpop.xlane.xlu0 %4180
          %4182 = vadd.xlane.f32.xlu0 %v4111
          %v4183 = vpop.xlane.xlu0 %4182
          %4184 = vadd.xlane.f32.xlu0 %v4112
          %v4185 = vpop.xlane.xlu0 %4184
          %4186 = vadd.xlane.f32.xlu0 %v4113
          %v4187 = vpop.xlane.xlu0 %4186
          %4188 = vadd.xlane.f32.xlu0 %v4114
          %v4189 = vpop.xlane.xlu0 %4188
          %4190 = vadd.xlane.f32.xlu0 %v4115
          %v4191 = vpop.xlane.xlu0 %4190
          %4192 = vadd.xlane.f32.xlu0 %v4116
          %v4193 = vpop.xlane.xlu0 %4192
          %4194 = vadd.xlane.f32.xlu0 %v4117
          %v4195 = vpop.xlane.xlu0 %4194
          %4196 = vadd.xlane.f32.xlu0 %v4118
          %v4197 = vpop.xlane.xlu0 %4196
          %4198 = vadd.xlane.f32.xlu0 %v4119
          %v4199 = vpop.xlane.xlu0 %4198
          %4200 = vadd.xlane.f32.xlu0 %v4120
          %v4201 = vpop.xlane.xlu0 %4200
          %4202 = vadd.xlane.f32.xlu0 %v4121
          %v4203 = vpop.xlane.xlu0 %4202
          %4204 = vadd.xlane.f32.xlu0 %v4122
          %v4205 = vpop.xlane.xlu0 %4204
          %4206 = vadd.xlane.f32.xlu0 %v4123
          %v4207 = vpop.xlane.xlu0 %4206
          %4208 = vadd.xlane.f32.xlu0 %v4124
          %v4209 = vpop.xlane.xlu0 %4208
          %4210 = vadd.xlane.f32.xlu0 %v4125
          %v4211 = vpop.xlane.xlu0 %4210
          %4212 = vadd.xlane.f32.xlu0 %v4126
          %v4213 = vpop.xlane.xlu0 %4212
          %4214 = vadd.xlane.f32.xlu0 %v4127
          %v4215 = vpop.xlane.xlu0 %4214
          %4216 = vadd.xlane.f32.xlu0 %v4128
          %v4217 = vpop.xlane.xlu0 %4216
          %4218 = vadd.xlane.f32.xlu0 %v4129
          %v4219 = vpop.xlane.xlu0 %4218
          %4220 = vadd.xlane.f32.xlu0 %v4130
          %v4221 = vpop.xlane.xlu0 %4220
          %4222 = vadd.xlane.f32.xlu0 %v4131
          %v4223 = vpop.xlane.xlu0 %4222
          %4224 = vadd.xlane.f32.xlu0 %v4132
          %v4225 = vpop.xlane.xlu0 %4224
          %4226 = vadd.xlane.f32.xlu0 %v4133
          %v4227 = vpop.xlane.xlu0 %4226
          %4228 = vadd.xlane.f32.xlu0 %v4134
          %v4229 = vpop.xlane.xlu0 %4228
          %4230 = vadd.xlane.f32.xlu0 %v4135
          %v4231 = vpop.xlane.xlu0 %4230
          %4232 = vadd.xlane.f32.xlu0 %v4136
          %v4233 = vpop.xlane.xlu0 %4232
          %4234 = vadd.xlane.f32.xlu0 %v4137
          %v4235 = vpop.xlane.xlu0 %4234
          %4236 = vadd.xlane.f32.xlu0 %v4138
          %v4237 = vpop.xlane.xlu0 %4236
          %4238 = vadd.xlane.f32.xlu0 %v4139
          %v4239 = vpop.xlane.xlu0 %4238
          %4240 = vadd.xlane.f32.xlu0 %v4140
          %v4241 = vpop.xlane.xlu0 %4240
          %4242 = vadd.xlane.f32.xlu0 %v4141
          %v4243 = vpop.xlane.xlu0 %4242
          %4244 = vadd.xlane.f32.xlu0 %v4142
          %v4245 = vpop.xlane.xlu0 %4244
          %4246 = vadd.xlane.f32.xlu0 %v4143
          %v4247 = vpop.xlane.xlu0 %4246
          %4248 = vadd.xlane.f32.xlu0 %v4144
          %v4249 = vpop.xlane.xlu0 %4248
          %4250 = vadd.xlane.f32.xlu0 %v4145
          %v4251 = vpop.xlane.xlu0 %4250
          %4252 = vadd.xlane.f32.xlu0 %v4146
          %v4253 = vpop.xlane.xlu0 %4252
          %4254 = vadd.xlane.f32.xlu0 %v4147
          %v4255 = vpop.xlane.xlu0 %4254
          %4256 = vadd.xlane.f32.xlu0 %v4148
          %v4257 = vpop.xlane.xlu0 %4256
          %4258 = vadd.xlane.f32.xlu0 %v4149
          %v4259 = vpop.xlane.xlu0 %4258
          %4260 = vadd.xlane.f32.xlu0 %v4150
          %v4261 = vpop.xlane.xlu0 %4260
          %4262 = vadd.xlane.f32.xlu0 %v4151
          %v4263 = vpop.xlane.xlu0 %4262
          %4264 = vadd.xlane.f32.xlu0 %v4152
          %v4265 = vpop.xlane.xlu0 %4264
          %4266 = vadd.xlane.f32.xlu0 %v4153
          %v4267 = vpop.xlane.xlu0 %4266
          %4268 = vadd.xlane.f32.xlu0 %v4154
          %v4269 = vpop.xlane.xlu0 %4268
          %4270 = vadd.xlane.f32.xlu0 %v4155
          %v4271 = vpop.xlane.xlu0 %4270
          %4272 = vadd.xlane.f32.xlu0 %v4156
          %v4273 = vpop.xlane.xlu0 %4272
          %4274 = vadd.xlane.f32.xlu0 %v4157
          %v4275 = vpop.xlane.xlu0 %4274
          %4276 = vadd.xlane.f32.xlu0 %v4158
          %v4277 = vpop.xlane.xlu0 %4276
          %4278 = vadd.xlane.f32.xlu0 %v4159
          %v4279 = vpop.xlane.xlu0 %4278
          %4280 = vadd.xlane.f32.xlu0 %v4160
          %v4281 = vpop.xlane.xlu0 %4280
          %4282 = vadd.xlane.f32.xlu0 %v4161
          %v4283 = vpop.xlane.xlu0 %4282
          %4284 = vadd.xlane.f32.xlu0 %v4162
          %v4285 = vpop.xlane.xlu0 %4284
          %4286 = vadd.xlane.f32.xlu0 %v4163
          %v4287 = vpop.xlane.xlu0 %4286
          %4288 = vadd.xlane.f32.xlu0 %v4164
          %v4289 = vpop.xlane.xlu0 %4288
          %4290 = vadd.xlane.f32.xlu0 %v4165
          %v4291 = vpop.xlane.xlu0 %4290
          %4292 = vadd.xlane.f32.xlu0 %v4166
          %v4293 = vpop.xlane.xlu0 %4292
          %4294 = vadd.xlane.f32.xlu0 %v4167
          %v4295 = vpop.xlane.xlu0 %4294
          %v4296 = vstv %s394
          %v4297 = vadd.f32 %v4169, %v4296
          %v4298 = vadd.f32 %v4171, %v4296
          %v4299 = vadd.f32 %v4173, %v4296
          %v4300 = vadd.f32 %v4175, %v4296
          %v4301 = vadd.f32 %v4177, %v4296
          %v4302 = vadd.f32 %v4179, %v4296
          %v4303 = vadd.f32 %v4181, %v4296
          %v4304 = vadd.f32 %v4183, %v4296
          %v4305 = vadd.f32 %v4185, %v4296
          %v4306 = vadd.f32 %v4187, %v4296
          %v4307 = vadd.f32 %v4189, %v4296
          %v4308 = vadd.f32 %v4191, %v4296
          %v4309 = vadd.f32 %v4193, %v4296
          %v4310 = vadd.f32 %v4195, %v4296
          %v4311 = vadd.f32 %v4197, %v4296
          %v4312 = vadd.f32 %v4199, %v4296
          %v4313 = vadd.f32 %v4201, %v4296
          %v4314 = vadd.f32 %v4203, %v4296
          %v4315 = vadd.f32 %v4205, %v4296
          %v4316 = vadd.f32 %v4207, %v4296
          %v4317 = vadd.f32 %v4209, %v4296
          %v4318 = vadd.f32 %v4211, %v4296
          %v4319 = vadd.f32 %v4213, %v4296
          %v4320 = vadd.f32 %v4215, %v4296
          %v4321 = vadd.f32 %v4217, %v4296
          %v4322 = vadd.f32 %v4219, %v4296
          %v4323 = vadd.f32 %v4221, %v4296
          %v4324 = vadd.f32 %v4223, %v4296
          %v4325 = vadd.f32 %v4225, %v4296
          %v4326 = vadd.f32 %v4227, %v4296
          %v4327 = vadd.f32 %v4229, %v4296
          %v4328 = vadd.f32 %v4231, %v4296
          %v4329 = vadd.f32 %v4233, %v4296
          %v4330 = vadd.f32 %v4235, %v4296
          %v4331 = vadd.f32 %v4237, %v4296
          %v4332 = vadd.f32 %v4239, %v4296
          %v4333 = vadd.f32 %v4241, %v4296
          %v4334 = vadd.f32 %v4243, %v4296
          %v4335 = vadd.f32 %v4245, %v4296
          %v4336 = vadd.f32 %v4247, %v4296
          %v4337 = vadd.f32 %v4249, %v4296
          %v4338 = vadd.f32 %v4251, %v4296
          %v4339 = vadd.f32 %v4253, %v4296
          %v4340 = vadd.f32 %v4255, %v4296
          %v4341 = vadd.f32 %v4257, %v4296
          %v4342 = vadd.f32 %v4259, %v4296
          %v4343 = vadd.f32 %v4261, %v4296
          %v4344 = vadd.f32 %v4263, %v4296
          %v4345 = vadd.f32 %v4265, %v4296
          %v4346 = vadd.f32 %v4267, %v4296
          %v4347 = vadd.f32 %v4269, %v4296
          %v4348 = vadd.f32 %v4271, %v4296
          %v4349 = vadd.f32 %v4273, %v4296
          %v4350 = vadd.f32 %v4275, %v4296
          %v4351 = vadd.f32 %v4277, %v4296
          %v4352 = vadd.f32 %v4279, %v4296
          %v4353 = vadd.f32 %v4281, %v4296
          %v4354 = vadd.f32 %v4283, %v4296
          %v4355 = vadd.f32 %v4285, %v4296
          %v4356 = vadd.f32 %v4287, %v4296
          %v4357 = vadd.f32 %v4289, %v4296
          %v4358 = vadd.f32 %v4291, %v4296
          %v4359 = vadd.f32 %v4293, %v4296
          %v4360 = vadd.f32 %v4295, %v4296
          %v4361 = vxor.u32 %v4297, 2147483648
          %v4362 = vxor.u32 %v4298, 2147483648
          %v4363 = vxor.u32 %v4299, 2147483648
          %v4364 = vxor.u32 %v4300, 2147483648
          %v4365 = vxor.u32 %v4301, 2147483648
          %v4366 = vxor.u32 %v4302, 2147483648
          %v4367 = vxor.u32 %v4303, 2147483648
          %v4368 = vxor.u32 %v4304, 2147483648
          %v4369 = vxor.u32 %v4305, 2147483648
          %v4370 = vxor.u32 %v4306, 2147483648
          %v4371 = vxor.u32 %v4307, 2147483648
          %v4372 = vxor.u32 %v4308, 2147483648
          %v4373 = vxor.u32 %v4309, 2147483648
          %v4374 = vxor.u32 %v4310, 2147483648
          %v4375 = vxor.u32 %v4311, 2147483648
          %v4376 = vxor.u32 %v4312, 2147483648
          %v4377 = vxor.u32 %v4313, 2147483648
          %v4378 = vxor.u32 %v4314, 2147483648
          %v4379 = vxor.u32 %v4315, 2147483648
          %v4380 = vxor.u32 %v4316, 2147483648
          %v4381 = vxor.u32 %v4317, 2147483648
          %v4382 = vxor.u32 %v4318, 2147483648
          %v4383 = vxor.u32 %v4319, 2147483648
          %v4384 = vxor.u32 %v4320, 2147483648
          %v4385 = vxor.u32 %v4321, 2147483648
          %v4386 = vxor.u32 %v4322, 2147483648
          %v4387 = vxor.u32 %v4323, 2147483648
          %v4388 = vxor.u32 %v4324, 2147483648
          %v4389 = vxor.u32 %v4325, 2147483648
          %v4390 = vxor.u32 %v4326, 2147483648
          %v4391 = vxor.u32 %v4327, 2147483648
          %v4392 = vxor.u32 %v4328, 2147483648
          %v4393 = vxor.u32 %v4329, 2147483648
          %v4394 = vxor.u32 %v4330, 2147483648
          %v4395 = vxor.u32 %v4331, 2147483648
          %v4396 = vxor.u32 %v4332, 2147483648
          %v4397 = vxor.u32 %v4333, 2147483648
          %v4398 = vxor.u32 %v4334, 2147483648
          %v4399 = vxor.u32 %v4335, 2147483648
          %v4400 = vxor.u32 %v4336, 2147483648
          %v4401 = vxor.u32 %v4337, 2147483648
          %v4402 = vxor.u32 %v4338, 2147483648
          %v4403 = vxor.u32 %v4339, 2147483648
          %v4404 = vxor.u32 %v4340, 2147483648
          %v4405 = vxor.u32 %v4341, 2147483648
          %v4406 = vxor.u32 %v4342, 2147483648
          %v4407 = vxor.u32 %v4343, 2147483648
          %v4408 = vxor.u32 %v4344, 2147483648
          %v4409 = vxor.u32 %v4345, 2147483648
          %v4410 = vxor.u32 %v4346, 2147483648
          %v4411 = vxor.u32 %v4347, 2147483648
          %v4412 = vxor.u32 %v4348, 2147483648
          %v4413 = vxor.u32 %v4349, 2147483648
          %v4414 = vxor.u32 %v4350, 2147483648
          %v4415 = vxor.u32 %v4351, 2147483648
          %v4416 = vxor.u32 %v4352, 2147483648
          %v4417 = vxor.u32 %v4353, 2147483648
          %v4418 = vxor.u32 %v4354, 2147483648
          %v4419 = vxor.u32 %v4355, 2147483648
          %v4420 = vxor.u32 %v4356, 2147483648
          %v4421 = vxor.u32 %v4357, 2147483648
          %v4422 = vxor.u32 %v4358, 2147483648
          %v4423 = vxor.u32 %v4359, 2147483648
          %v4424 = vxor.u32 %v4360, 2147483648
          %v4425 = vmul.f32 %v4361, 1.442695
          %v4426 = vpow.pop %v4425
          %v4427 = vmul.f32 %v4362, 1.442695
          %v4428 = vpow.pop %v4427
          %v4429 = vmul.f32 %v4363, 1.442695
          %v4430 = vpow.pop %v4429
          %v4431 = vmul.f32 %v4364, 1.442695
          %v4432 = vpow.pop %v4431
          %v4433 = vmul.f32 %v4365, 1.442695
          %v4434 = vpow.pop %v4433
          %v4435 = vmul.f32 %v4366, 1.442695
          %v4436 = vpow.pop %v4435
          %v4437 = vmul.f32 %v4367, 1.442695
          %v4438 = vpow.pop %v4437
          %v4439 = vmul.f32 %v4368, 1.442695
          %v4440 = vpow.pop %v4439
          %v4441 = vmul.f32 %v4369, 1.442695
          %v4442 = vpow.pop %v4441
          %v4443 = vmul.f32 %v4370, 1.442695
          %v4444 = vpow.pop %v4443
          %v4445 = vmul.f32 %v4371, 1.442695
          %v4446 = vpow.pop %v4445
          %v4447 = vmul.f32 %v4372, 1.442695
          %v4448 = vpow.pop %v4447
          %v4449 = vmul.f32 %v4373, 1.442695
          %v4450 = vpow.pop %v4449
          %v4451 = vmul.f32 %v4374, 1.442695
          %v4452 = vpow.pop %v4451
          %v4453 = vmul.f32 %v4375, 1.442695
          %v4454 = vpow.pop %v4453
          %v4455 = vmul.f32 %v4376, 1.442695
          %v4456 = vpow.pop %v4455
          %v4457 = vmul.f32 %v4377, 1.442695
          %v4458 = vpow.pop %v4457
          %v4459 = vmul.f32 %v4378, 1.442695
          %v4460 = vpow.pop %v4459
          %v4461 = vmul.f32 %v4379, 1.442695
          %v4462 = vpow.pop %v4461
          %v4463 = vmul.f32 %v4380, 1.442695
          %v4464 = vpow.pop %v4463
          %v4465 = vmul.f32 %v4381, 1.442695
          %v4466 = vpow.pop %v4465
          %v4467 = vmul.f32 %v4382, 1.442695
          %v4468 = vpow.pop %v4467
          %v4469 = vmul.f32 %v4383, 1.442695
          %v4470 = vpow.pop %v4469
          %v4471 = vmul.f32 %v4384, 1.442695
          %v4472 = vpow.pop %v4471
          %v4473 = vmul.f32 %v4385, 1.442695
          %v4474 = vpow.pop %v4473
          %v4475 = vmul.f32 %v4386, 1.442695
          %v4476 = vpow.pop %v4475
          %v4477 = vmul.f32 %v4387, 1.442695
          %v4478 = vpow.pop %v4477
          %v4479 = vmul.f32 %v4388, 1.442695
          %v4480 = vpow.pop %v4479
          %v4481 = vmul.f32 %v4389, 1.442695
          %v4482 = vpow.pop %v4481
          %v4483 = vmul.f32 %v4390, 1.442695
          %v4484 = vpow.pop %v4483
          %v4485 = vmul.f32 %v4391, 1.442695
          %v4486 = vpow.pop %v4485
          %v4487 = vmul.f32 %v4392, 1.442695
          %v4488 = vpow.pop %v4487
          %v4489 = vmul.f32 %v4393, 1.442695
          %v4490 = vpow.pop %v4489
          %v4491 = vmul.f32 %v4394, 1.442695
          %v4492 = vpow.pop %v4491
          %v4493 = vmul.f32 %v4395, 1.442695
          %v4494 = vpow.pop %v4493
          %v4495 = vmul.f32 %v4396, 1.442695
          %v4496 = vpow.pop %v4495
          %v4497 = vmul.f32 %v4397, 1.442695
          %v4498 = vpow.pop %v4497
          %v4499 = vmul.f32 %v4398, 1.442695
          %v4500 = vpow.pop %v4499
          %v4501 = vmul.f32 %v4399, 1.442695
          %v4502 = vpow.pop %v4501
          %v4503 = vmul.f32 %v4400, 1.442695
          %v4504 = vpow.pop %v4503
          %v4505 = vmul.f32 %v4401, 1.442695
          %v4506 = vpow.pop %v4505
          %v4507 = vmul.f32 %v4402, 1.442695
          %v4508 = vpow.pop %v4507
          %v4509 = vmul.f32 %v4403, 1.442695
          %v4510 = vpow.pop %v4509
          %v4511 = vmul.f32 %v4404, 1.442695
          %v4512 = vpow.pop %v4511
          %v4513 = vmul.f32 %v4405, 1.442695
          %v4514 = vpow.pop %v4513
          %v4515 = vmul.f32 %v4406, 1.442695
          %v4516 = vpow.pop %v4515
          %v4517 = vmul.f32 %v4407, 1.442695
          %v4518 = vpow.pop %v4517
          %v4519 = vmul.f32 %v4408, 1.442695
          %v4520 = vpow.pop %v4519
          %v4521 = vmul.f32 %v4409, 1.442695
          %v4522 = vpow.pop %v4521
          %v4523 = vmul.f32 %v4410, 1.442695
          %v4524 = vpow.pop %v4523
          %v4525 = vmul.f32 %v4411, 1.442695
          %v4526 = vpow.pop %v4525
          %v4527 = vmul.f32 %v4412, 1.442695
          %v4528 = vpow.pop %v4527
          %v4529 = vmul.f32 %v4413, 1.442695
          %v4530 = vpow.pop %v4529
          %v4531 = vmul.f32 %v4414, 1.442695
          %v4532 = vpow.pop %v4531
          %v4533 = vmul.f32 %v4415, 1.442695
          %v4534 = vpow.pop %v4533
          %v4535 = vmul.f32 %v4416, 1.442695
          %v4536 = vpow.pop %v4535
          %v4537 = vmul.f32 %v4417, 1.442695
          %v4538 = vpow.pop %v4537
          %v4539 = vmul.f32 %v4418, 1.442695
          %v4540 = vpow.pop %v4539
          %v4541 = vmul.f32 %v4419, 1.442695
          %v4542 = vpow.pop %v4541
          %v4543 = vmul.f32 %v4420, 1.442695
          %v4544 = vpow.pop %v4543
          %v4545 = vmul.f32 %v4421, 1.442695
          %v4546 = vpow.pop %v4545
          %v4547 = vmul.f32 %v4422, 1.442695
          %v4548 = vpow.pop %v4547
          %v4549 = vmul.f32 %v4423, 1.442695
          %v4550 = vpow.pop %v4549
          %v4551 = vmul.f32 %v4424, 1.442695
          %v4552 = vpow.pop %v4551
          %v4553 = vadd.f32 %v4426, 1.0
          %v4554 = vadd.f32 %v4428, 1.0
          %v4555 = vadd.f32 %v4430, 1.0
          %v4556 = vadd.f32 %v4432, 1.0
          %v4557 = vadd.f32 %v4434, 1.0
          %v4558 = vadd.f32 %v4436, 1.0
          %v4559 = vadd.f32 %v4438, 1.0
          %v4560 = vadd.f32 %v4440, 1.0
          %v4561 = vadd.f32 %v4442, 1.0
          %v4562 = vadd.f32 %v4444, 1.0
          %v4563 = vadd.f32 %v4446, 1.0
          %v4564 = vadd.f32 %v4448, 1.0
          %v4565 = vadd.f32 %v4450, 1.0
          %v4566 = vadd.f32 %v4452, 1.0
          %v4567 = vadd.f32 %v4454, 1.0
          %v4568 = vadd.f32 %v4456, 1.0
          %v4569 = vadd.f32 %v4458, 1.0
          %v4570 = vadd.f32 %v4460, 1.0
          %v4571 = vadd.f32 %v4462, 1.0
          %v4572 = vadd.f32 %v4464, 1.0
          %v4573 = vadd.f32 %v4466, 1.0
          %v4574 = vadd.f32 %v4468, 1.0
          %v4575 = vadd.f32 %v4470, 1.0
          %v4576 = vadd.f32 %v4472, 1.0
          %v4577 = vadd.f32 %v4474, 1.0
          %v4578 = vadd.f32 %v4476, 1.0
          %v4579 = vadd.f32 %v4478, 1.0
          %v4580 = vadd.f32 %v4480, 1.0
          %v4581 = vadd.f32 %v4482, 1.0
          %v4582 = vadd.f32 %v4484, 1.0
          %v4583 = vadd.f32 %v4486, 1.0
          %v4584 = vadd.f32 %v4488, 1.0
          %v4585 = vadd.f32 %v4490, 1.0
          %v4586 = vadd.f32 %v4492, 1.0
          %v4587 = vadd.f32 %v4494, 1.0
          %v4588 = vadd.f32 %v4496, 1.0
          %v4589 = vadd.f32 %v4498, 1.0
          %v4590 = vadd.f32 %v4500, 1.0
          %v4591 = vadd.f32 %v4502, 1.0
          %v4592 = vadd.f32 %v4504, 1.0
          %v4593 = vadd.f32 %v4506, 1.0
          %v4594 = vadd.f32 %v4508, 1.0
          %v4595 = vadd.f32 %v4510, 1.0
          %v4596 = vadd.f32 %v4512, 1.0
          %v4597 = vadd.f32 %v4514, 1.0
          %v4598 = vadd.f32 %v4516, 1.0
          %v4599 = vadd.f32 %v4518, 1.0
          %v4600 = vadd.f32 %v4520, 1.0
          %v4601 = vadd.f32 %v4522, 1.0
          %v4602 = vadd.f32 %v4524, 1.0
          %v4603 = vadd.f32 %v4526, 1.0
          %v4604 = vadd.f32 %v4528, 1.0
          %v4605 = vadd.f32 %v4530, 1.0
          %v4606 = vadd.f32 %v4532, 1.0
          %v4607 = vadd.f32 %v4534, 1.0
          %v4608 = vadd.f32 %v4536, 1.0
          %v4609 = vadd.f32 %v4538, 1.0
          %v4610 = vadd.f32 %v4540, 1.0
          %v4611 = vadd.f32 %v4542, 1.0
          %v4612 = vadd.f32 %v4544, 1.0
          %v4613 = vadd.f32 %v4546, 1.0
          %v4614 = vadd.f32 %v4548, 1.0
          %v4615 = vadd.f32 %v4550, 1.0
          %v4616 = vadd.f32 %v4552, 1.0
          %v4617 = vrcp.pop %v4553
          %v4618 = vmul.f32 1.0, %v4617
          %v4619 = vrcp.pop %v4554
          %v4620 = vmul.f32 1.0, %v4619
          %v4621 = vrcp.pop %v4555
          %v4622 = vmul.f32 1.0, %v4621
          %v4623 = vrcp.pop %v4556
          %v4624 = vmul.f32 1.0, %v4623
          %v4625 = vrcp.pop %v4557
          %v4626 = vmul.f32 1.0, %v4625
          %v4627 = vrcp.pop %v4558
          %v4628 = vmul.f32 1.0, %v4627
          %v4629 = vrcp.pop %v4559
          %v4630 = vmul.f32 1.0, %v4629
          %v4631 = vrcp.pop %v4560
          %v4632 = vmul.f32 1.0, %v4631
          %v4633 = vrcp.pop %v4561
          %v4634 = vmul.f32 1.0, %v4633
          %v4635 = vrcp.pop %v4562
          %v4636 = vmul.f32 1.0, %v4635
          %v4637 = vrcp.pop %v4563
          %v4638 = vmul.f32 1.0, %v4637
          %v4639 = vrcp.pop %v4564
          %v4640 = vmul.f32 1.0, %v4639
          %v4641 = vrcp.pop %v4565
          %v4642 = vmul.f32 1.0, %v4641
          %v4643 = vrcp.pop %v4566
          %v4644 = vmul.f32 1.0, %v4643
          %v4645 = vrcp.pop %v4567
          %v4646 = vmul.f32 1.0, %v4645
          %v4647 = vrcp.pop %v4568
          %v4648 = vmul.f32 1.0, %v4647
          %v4649 = vrcp.pop %v4569
          %v4650 = vmul.f32 1.0, %v4649
          %v4651 = vrcp.pop %v4570
          %v4652 = vmul.f32 1.0, %v4651
          %v4653 = vrcp.pop %v4571
          %v4654 = vmul.f32 1.0, %v4653
          %v4655 = vrcp.pop %v4572
          %v4656 = vmul.f32 1.0, %v4655
          %v4657 = vrcp.pop %v4573
          %v4658 = vmul.f32 1.0, %v4657
          %v4659 = vrcp.pop %v4574
          %v4660 = vmul.f32 1.0, %v4659
          %v4661 = vrcp.pop %v4575
          %v4662 = vmul.f32 1.0, %v4661
          %v4663 = vrcp.pop %v4576
          %v4664 = vmul.f32 1.0, %v4663
          %v4665 = vrcp.pop %v4577
          %v4666 = vmul.f32 1.0, %v4665
          %v4667 = vrcp.pop %v4578
          %v4668 = vmul.f32 1.0, %v4667
          %v4669 = vrcp.pop %v4579
          %v4670 = vmul.f32 1.0, %v4669
          %v4671 = vrcp.pop %v4580
          %v4672 = vmul.f32 1.0, %v4671
          %v4673 = vrcp.pop %v4581
          %v4674 = vmul.f32 1.0, %v4673
          %v4675 = vrcp.pop %v4582
          %v4676 = vmul.f32 1.0, %v4675
          %v4677 = vrcp.pop %v4583
          %v4678 = vmul.f32 1.0, %v4677
          %v4679 = vrcp.pop %v4584
          %v4680 = vmul.f32 1.0, %v4679
          %v4681 = vrcp.pop %v4585
          %v4682 = vmul.f32 1.0, %v4681
          %v4683 = vrcp.pop %v4586
          %v4684 = vmul.f32 1.0, %v4683
          %v4685 = vrcp.pop %v4587
          %v4686 = vmul.f32 1.0, %v4685
          %v4687 = vrcp.pop %v4588
          %v4688 = vmul.f32 1.0, %v4687
          %v4689 = vrcp.pop %v4589
          %v4690 = vmul.f32 1.0, %v4689
          %v4691 = vrcp.pop %v4590
          %v4692 = vmul.f32 1.0, %v4691
          %v4693 = vrcp.pop %v4591
          %v4694 = vmul.f32 1.0, %v4693
          %v4695 = vrcp.pop %v4592
          %v4696 = vmul.f32 1.0, %v4695
          %v4697 = vrcp.pop %v4593
          %v4698 = vmul.f32 1.0, %v4697
          %v4699 = vrcp.pop %v4594
          %v4700 = vmul.f32 1.0, %v4699
          %v4701 = vrcp.pop %v4595
          %v4702 = vmul.f32 1.0, %v4701
          %v4703 = vrcp.pop %v4596
          %v4704 = vmul.f32 1.0, %v4703
          %v4705 = vrcp.pop %v4597
          %v4706 = vmul.f32 1.0, %v4705
          %v4707 = vrcp.pop %v4598
          %v4708 = vmul.f32 1.0, %v4707
          %v4709 = vrcp.pop %v4599
          %v4710 = vmul.f32 1.0, %v4709
          %v4711 = vrcp.pop %v4600
          %v4712 = vmul.f32 1.0, %v4711
          %v4713 = vrcp.pop %v4601
          %v4714 = vmul.f32 1.0, %v4713
          %v4715 = vrcp.pop %v4602
          %v4716 = vmul.f32 1.0, %v4715
          %v4717 = vrcp.pop %v4603
          %v4718 = vmul.f32 1.0, %v4717
          %v4719 = vrcp.pop %v4604
          %v4720 = vmul.f32 1.0, %v4719
          %v4721 = vrcp.pop %v4605
          %v4722 = vmul.f32 1.0, %v4721
          %v4723 = vrcp.pop %v4606
          %v4724 = vmul.f32 1.0, %v4723
          %v4725 = vrcp.pop %v4607
          %v4726 = vmul.f32 1.0, %v4725
          %v4727 = vrcp.pop %v4608
          %v4728 = vmul.f32 1.0, %v4727
          %v4729 = vrcp.pop %v4609
          %v4730 = vmul.f32 1.0, %v4729
          %v4731 = vrcp.pop %v4610
          %v4732 = vmul.f32 1.0, %v4731
          %v4733 = vrcp.pop %v4611
          %v4734 = vmul.f32 1.0, %v4733
          %v4735 = vrcp.pop %v4612
          %v4736 = vmul.f32 1.0, %v4735
          %v4737 = vrcp.pop %v4613
          %v4738 = vmul.f32 1.0, %v4737
          %v4739 = vrcp.pop %v4614
          %v4740 = vmul.f32 1.0, %v4739
          %v4741 = vrcp.pop %v4615
          %v4742 = vmul.f32 1.0, %v4741
          %v4743 = vrcp.pop %v4616
          %v4744 = vmul.f32 1.0, %v4743
          %v4745 = vmul.f32 %v4618, %v3697
          %v4746 = vmul.f32 %v4620, %v3700
          %v4747 = vmul.f32 %v4622, %v3705
          %v4748 = vmul.f32 %v4624, %v3708
          %v4749 = vmul.f32 %v4626, %v3713
          %v4750 = vmul.f32 %v4628, %v3716
          %v4751 = vmul.f32 %v4630, %v3721
          %v4752 = vmul.f32 %v4632, %v3724
          %v4753 = vmul.f32 %v4634, %v3729
          %v4754 = vmul.f32 %v4636, %v3732
          %v4755 = vmul.f32 %v4638, %v3737
          %v4756 = vmul.f32 %v4640, %v3740
          %v4757 = vmul.f32 %v4642, %v3745
          %v4758 = vmul.f32 %v4644, %v3748
          %v4759 = vmul.f32 %v4646, %v3753
          %v4760 = vmul.f32 %v4648, %v3756
          %v4761 = vmul.f32 %v4650, %v3761
          %v4762 = vmul.f32 %v4652, %v3764
          %v4763 = vmul.f32 %v4654, %v3769
          %v4764 = vmul.f32 %v4656, %v3772
          %v4765 = vmul.f32 %v4658, %v3777
          %v4766 = vmul.f32 %v4660, %v3780
          %v4767 = vmul.f32 %v4662, %v3785
          %v4768 = vmul.f32 %v4664, %v3788
          %v4769 = vmul.f32 %v4666, %v3793
          %v4770 = vmul.f32 %v4668, %v3796
          %v4771 = vmul.f32 %v4670, %v3801
          %v4772 = vmul.f32 %v4672, %v3804
          %v4773 = vmul.f32 %v4674, %v3809
          %v4774 = vmul.f32 %v4676, %v3812
          %v4775 = vmul.f32 %v4678, %v3817
          %v4776 = vmul.f32 %v4680, %v3820
          %v4777 = vmul.f32 %v4682, %v3825
          %v4778 = vmul.f32 %v4684, %v3828
          %v4779 = vmul.f32 %v4686, %v3833
          %v4780 = vmul.f32 %v4688, %v3836
          %v4781 = vmul.f32 %v4690, %v3841
          %v4782 = vmul.f32 %v4692, %v3844
          %v4783 = vmul.f32 %v4694, %v3849
          %v4784 = vmul.f32 %v4696, %v3852
          %v4785 = vmul.f32 %v4698, %v3857
          %v4786 = vmul.f32 %v4700, %v3860
          %v4787 = vmul.f32 %v4702, %v3865
          %v4788 = vmul.f32 %v4704, %v3868
          %v4789 = vmul.f32 %v4706, %v3873
          %v4790 = vmul.f32 %v4708, %v3876
          %v4791 = vmul.f32 %v4710, %v3881
          %v4792 = vmul.f32 %v4712, %v3884
          %v4793 = vmul.f32 %v4714, %v3889
          %v4794 = vmul.f32 %v4716, %v3892
          %v4795 = vmul.f32 %v4718, %v3897
          %v4796 = vmul.f32 %v4720, %v3900
          %v4797 = vmul.f32 %v4722, %v3905
          %v4798 = vmul.f32 %v4724, %v3908
          %v4799 = vmul.f32 %v4726, %v3913
          %v4800 = vmul.f32 %v4728, %v3916
          %v4801 = vmul.f32 %v4730, %v3921
          %v4802 = vmul.f32 %v4732, %v3924
          %v4803 = vmul.f32 %v4734, %v3929
          %v4804 = vmul.f32 %v4736, %v3932
          %v4805 = vmul.f32 %v4738, %v3937
          %v4806 = vmul.f32 %v4740, %v3940
          %v4807 = vmul.f32 %v4742, %v3945
          %v4808 = vmul.f32 %v4744, %v3948
          %v4809 = vadd.f32 %v4034, %v4745
          %v4810 = vadd.f32 %v4035, %v4746
          %v4811 = vadd.f32 %v4036, %v4747
          %v4812 = vadd.f32 %v4037, %v4748
          %v4813 = vadd.f32 %v4038, %v4749
          %v4814 = vadd.f32 %v4039, %v4750
          %v4815 = vadd.f32 %v4040, %v4751
          %v4816 = vadd.f32 %v4041, %v4752
          %v4817 = vadd.f32 %v4042, %v4753
          %v4818 = vadd.f32 %v4043, %v4754
          %v4819 = vadd.f32 %v4044, %v4755
          %v4820 = vadd.f32 %v4045, %v4756
          %v4821 = vadd.f32 %v4046, %v4757
          %v4822 = vadd.f32 %v4047, %v4758
          %v4823 = vadd.f32 %v4048, %v4759
          %v4824 = vadd.f32 %v4049, %v4760
          %v4825 = vadd.f32 %v4050, %v4761
          %v4826 = vadd.f32 %v4051, %v4762
          %v4827 = vadd.f32 %v4052, %v4763
          %v4828 = vadd.f32 %v4053, %v4764
          %v4829 = vadd.f32 %v4054, %v4765
          %v4830 = vadd.f32 %v4055, %v4766
          %v4831 = vadd.f32 %v4056, %v4767
          %v4832 = vadd.f32 %v4057, %v4768
          %v4833 = vadd.f32 %v4058, %v4769
          %v4834 = vadd.f32 %v4059, %v4770
          %v4835 = vadd.f32 %v4060, %v4771
          %v4836 = vadd.f32 %v4061, %v4772
          %v4837 = vadd.f32 %v4062, %v4773
          %v4838 = vadd.f32 %v4063, %v4774
          %v4839 = vadd.f32 %v4064, %v4775
          %v4840 = vadd.f32 %v4065, %v4776
          %v4841 = vadd.f32 %v4066, %v4777
          %v4842 = vadd.f32 %v4067, %v4778
          %v4843 = vadd.f32 %v4068, %v4779
          %v4844 = vadd.f32 %v4069, %v4780
          %v4845 = vadd.f32 %v4070, %v4781
          %v4846 = vadd.f32 %v4071, %v4782
          %v4847 = vadd.f32 %v4072, %v4783
          %v4848 = vadd.f32 %v4073, %v4784
          %v4849 = vadd.f32 %v4074, %v4785
          %v4850 = vadd.f32 %v4075, %v4786
          %v4851 = vadd.f32 %v4076, %v4787
          %v4852 = vadd.f32 %v4077, %v4788
          %v4853 = vadd.f32 %v4078, %v4789
          %v4854 = vadd.f32 %v4079, %v4790
          %v4855 = vadd.f32 %v4080, %v4791
          %v4856 = vadd.f32 %v4081, %v4792
          %v4857 = vadd.f32 %v4082, %v4793
          %v4858 = vadd.f32 %v4083, %v4794
          %v4859 = vadd.f32 %v4084, %v4795
          %v4860 = vadd.f32 %v4085, %v4796
          %v4861 = vadd.f32 %v4086, %v4797
          %v4862 = vadd.f32 %v4087, %v4798
          %v4863 = vadd.f32 %v4088, %v4799
          %v4864 = vadd.f32 %v4089, %v4800
          %v4865 = vadd.f32 %v4090, %v4801
          %v4866 = vadd.f32 %v4091, %v4802
          %v4867 = vadd.f32 %v4092, %v4803
          %v4868 = vadd.f32 %v4093, %v4804
          %v4869 = vadd.f32 %v4094, %v4805
          %v4870 = vadd.f32 %v4095, %v4806
          %v4871 = vadd.f32 %v4096, %v4807
          %v4872 = vadd.f32 %v4097, %v4808
          %4873 = vst [vmem:[%s4033] sm:$0xff] %v4809
          %4874 = vst [vmem:[%s4033 + $0x8] sm:$0xff] %v4810
          %4875 = vst [vmem:[%s4033 + $0x10] sm:$0xff] %v4811
          %4876 = vst [vmem:[%s4033 + $0x18] sm:$0xff] %v4812
          %4877 = vst [vmem:[%s4033 + $0x20] sm:$0xff] %v4813
          %4878 = vst [vmem:[%s4033 + $0x28] sm:$0xff] %v4814
          %4879 = vst [vmem:[%s4033 + $0x30] sm:$0xff] %v4815
          %4880 = vst [vmem:[%s4033 + $0x38] sm:$0xff] %v4816
          %4881 = vst [vmem:[%s4033 + $0x40] sm:$0xff] %v4817
          %4882 = vst [vmem:[%s4033 + $0x48] sm:$0xff] %v4818
          %4883 = vst [vmem:[%s4033 + $0x50] sm:$0xff] %v4819
          %4884 = vst [vmem:[%s4033 + $0x58] sm:$0xff] %v4820
          %4885 = vst [vmem:[%s4033 + $0x60] sm:$0xff] %v4821
          %4886 = vst [vmem:[%s4033 + $0x68] sm:$0xff] %v4822
          %4887 = vst [vmem:[%s4033 + $0x70] sm:$0xff] %v4823
          %4888 = vst [vmem:[%s4033 + $0x78] sm:$0xff] %v4824
          %4889 = vst [vmem:[%s4033 + $0x80] sm:$0xff] %v4825
          %4890 = vst [vmem:[%s4033 + $0x88] sm:$0xff] %v4826
          %4891 = vst [vmem:[%s4033 + $0x90] sm:$0xff] %v4827
          %4892 = vst [vmem:[%s4033 + $0x98] sm:$0xff] %v4828
          %4893 = vst [vmem:[%s4033 + $0xa0] sm:$0xff] %v4829
          %4894 = vst [vmem:[%s4033 + $0xa8] sm:$0xff] %v4830
          %4895 = vst [vmem:[%s4033 + $0xb0] sm:$0xff] %v4831
          %4896 = vst [vmem:[%s4033 + $0xb8] sm:$0xff] %v4832
          %4897 = vst [vmem:[%s4033 + $0xc0] sm:$0xff] %v4833
          %4898 = vst [vmem:[%s4033 + $0xc8] sm:$0xff] %v4834
          %4899 = vst [vmem:[%s4033 + $0xd0] sm:$0xff] %v4835
          %4900 = vst [vmem:[%s4033 + $0xd8] sm:$0xff] %v4836
          %4901 = vst [vmem:[%s4033 + $0xe0] sm:$0xff] %v4837
          %4902 = vst [vmem:[%s4033 + $0xe8] sm:$0xff] %v4838
          %4903 = vst [vmem:[%s4033 + $0xf0] sm:$0xff] %v4839
          %4904 = vst [vmem:[%s4033 + $0xf8] sm:$0xff] %v4840
          %4905 = vst [vmem:[%s4033 + $0x100] sm:$0xff] %v4841
          %4906 = vst [vmem:[%s4033 + $0x108] sm:$0xff] %v4842
          %4907 = vst [vmem:[%s4033 + $0x110] sm:$0xff] %v4843
          %4908 = vst [vmem:[%s4033 + $0x118] sm:$0xff] %v4844
          %4909 = vst [vmem:[%s4033 + $0x120] sm:$0xff] %v4845
          %4910 = vst [vmem:[%s4033 + $0x128] sm:$0xff] %v4846
          %4911 = vst [vmem:[%s4033 + $0x130] sm:$0xff] %v4847
          %4912 = vst [vmem:[%s4033 + $0x138] sm:$0xff] %v4848
          %4913 = vst [vmem:[%s4033 + $0x140] sm:$0xff] %v4849
          %4914 = vst [vmem:[%s4033 + $0x148] sm:$0xff] %v4850
          %4915 = vst [vmem:[%s4033 + $0x150] sm:$0xff] %v4851
          %4916 = vst [vmem:[%s4033 + $0x158] sm:$0xff] %v4852
          %4917 = vst [vmem:[%s4033 + $0x160] sm:$0xff] %v4853
          %4918 = vst [vmem:[%s4033 + $0x168] sm:$0xff] %v4854
          %4919 = vst [vmem:[%s4033 + $0x170] sm:$0xff] %v4855
          %4920 = vst [vmem:[%s4033 + $0x178] sm:$0xff] %v4856
          %4921 = vst [vmem:[%s4033 + $0x180] sm:$0xff] %v4857
          %4922 = vst [vmem:[%s4033 + $0x188] sm:$0xff] %v4858
          %4923 = vst [vmem:[%s4033 + $0x190] sm:$0xff] %v4859
          %4924 = vst [vmem:[%s4033 + $0x198] sm:$0xff] %v4860
          %4925 = vst [vmem:[%s4033 + $0x1a0] sm:$0xff] %v4861
          %4926 = vst [vmem:[%s4033 + $0x1a8] sm:$0xff] %v4862
          %4927 = vst [vmem:[%s4033 + $0x1b0] sm:$0xff] %v4863
          %4928 = vst [vmem:[%s4033 + $0x1b8] sm:$0xff] %v4864
          %4929 = vst [vmem:[%s4033 + $0x1c0] sm:$0xff] %v4865
          %4930 = vst [vmem:[%s4033 + $0x1c8] sm:$0xff] %v4866
          %4931 = vst [vmem:[%s4033 + $0x1d0] sm:$0xff] %v4867
          %4932 = vst [vmem:[%s4033 + $0x1d8] sm:$0xff] %v4868
          %4933 = vst [vmem:[%s4033 + $0x1e0] sm:$0xff] %v4869
          %4934 = vst [vmem:[%s4033 + $0x1e8] sm:$0xff] %v4870
          %4935 = vst [vmem:[%s4033 + $0x1f0] sm:$0xff] %v4871
          %4936 = vst [vmem:[%s4033 + $0x1f8] sm:$0xff] %v4872
        $region64: #{tpu_custom_call.1} parent=51 // pred_fallthru
          _
        // Predicated region
        $region65: #{tpu_custom_call.1} parent=51 // pred_check
          %p4937 = pneg %p242
        $region66: #{tpu_custom_call.1} parent=51 // pred_check_branch
          %4939 = sbr.rel (%p4937) target = $region68
        $region67: #{tpu_custom_call.1} parent=51 // pred_region
          %s4941 = ssub.s32 8192, 8192
          %4942 = vsyncadd [#allocation6], %s4941
          %s4943 = sshll.u32 [#allocation7], 4
          %s4944 = int_to_ptr.vmem [resolvable:$true] %s4943
          %4949 = dma.vmem_to_hbm [thread:$0]  %s4944, 8192, %s8, [#allocation6], 128, 128, 8
        $region68: #{tpu_custom_call.1} parent=51 // pred_fallthru
          _
        // Predicated region
        $region69: #{tpu_custom_call.1} parent=51 // pred_check
          %p4950 = pneg %p242
        $region70: #{tpu_custom_call.1} parent=51 // pred_check_branch
          %4952 = sbr.rel (%p4950) target = $region72
        $region71: #{tpu_custom_call.1} parent=51 // pred_region
          %4953 = dma.done [#allocation6], 8192
        $region72: #{tpu_custom_call.1} parent=51 // pred_fallthru
          _
      $region52: #{tpu_custom_call.1} parent=5 // pred_fallthru
        _
      %p4954 = scmp.le.s32.totalorder 2, %s20
      // Predicated region
      $region73: #{tpu_custom_call.1} parent=5 // pred_check
        %p4955 = pneg %p4954
      $region74: #{tpu_custom_call.1} parent=5 // pred_check_branch
        %4957 = sbr.rel (%p4955) target = $region76
      $region75: #{tpu_custom_call.1} parent=5 // pred_region
        %s4958 = ssub.s32 %s20, 2
      $region76: #{tpu_custom_call.1} parent=5 // pred_fallthru
        _
    $region6: #{tpu_custom_call.1} parent=1 // loop_footer
      %s24 = sadd.s32 1, %s20
    $region7: #{tpu_custom_call.1} parent=1 // loop_footer_branch
      %19 = sbr.rel target = $region3
    $region8: #{tpu_custom_call.1} parent=1 // loop_exit
      _
    %4959 = vsyncpa [#allocation5], 1
    %s4960 = scalar_lea.sflag [#allocation5], 1
    %4961 = vsyncpa %s4960, 1
    %4962 = vsyncpa [#allocation6], 1
    %s4963 = scalar_lea.sflag [#allocation6], 1
    %4964 = vsyncpa %s4963, 1

</llo_original>
